<compile_context>
chip_gen: v7x
topology: tpu7x:2x2x1
jax: 0.10.0
libtpu: 0.0.40
codegen_flags: <defaults>
</compile_context>

<pallas_src>
import math
import functools

import jax
import jax.numpy as jnp
from jax.experimental import pallas as pl
from jax.experimental.pallas import tpu as pltpu


def _vmem_limit_bytes():
    """Generation-aware scoped-VMEM limit (~3/4 of physical, capped)."""
    cap = 64 * 1024 * 1024
    try:
        info = pltpu.get_tpu_info()
        cap = int(getattr(info, "vmem_capacity_bytes", cap) or cap)
    except Exception:
        pass
    # v5e/v6e (128 MiB) -> 96 MiB; v7x (64 MiB) -> 48 MiB; never below 32 MiB.
    return max(32 * 1024 * 1024, min((cap * 3) // 4, 112 * 1024 * 1024))


def _rmsnorm(x, eps=1e-6):
    # matches: x * rsqrt(mean(x^2, -1, keepdim) + eps), computed in f32
    xf = x.astype(jnp.float32)
    xf = xf * jax.lax.rsqrt(jnp.mean(xf * xf, axis=-1, keepdims=True) + eps)
    return xf.astype(x.dtype)


def _pick_tile(n, candidates):
    for c in candidates:
        if c <= n and n % c == 0:
            return c
    return n  # full extent is always a legal block shape


# ---------------------------------------------------------------------------
# Kernel 1: x1 = x + attn_scale * CausalSelfAttention(rmsnorm(x))
# ---------------------------------------------------------------------------
def attn_block_kernel(x_ref, w_attn_ref, w_aproj_ref, o_ref, *,
                      n_head, attn_scale, compute_dtype):
    x = x_ref[0]                                     # (T, C)
    T, C = x.shape
    D = C // n_head
    sm_scale = 1.0 / math.sqrt(D)

    xn = _rmsnorm(x).astype(compute_dtype)
    # One full-width QKV projection (MXU N = 3C), f32 accumulation.
    qkv = jnp.dot(xn, w_attn_ref[...], preferred_element_type=jnp.float32)
    # Fold the softmax scale into q once (in f32, before narrowing).
    q = (qkv[:, 0 * C:1 * C] * sm_scale).astype(compute_dtype)
    k = qkv[:, 1 * C:2 * C].astype(compute_dtype)
    v = qkv[:, 2 * C:3 * C].astype(compute_dtype)

    row = jax.lax.broadcasted_iota(jnp.int32, (T, T), 0)   # query index
    col = jax.lax.broadcasted_iota(jnp.int32, (T, T), 1)   # key index
    causal = row >= col
    # contract dim 1 of both operands == q @ k.T without an explicit transpose
    dn_qkt = (((1,), (1,)), ((), ()))

    ys = []
    for h in range(n_head):                          # static unroll, static slices
        qh = q[:, h * D:(h + 1) * D]
        kh = k[:, h * D:(h + 1) * D]
        vh = v[:, h * D:(h + 1) * D]
        s = jax.lax.dot_general(qh, kh, dn_qkt, preferred_element_type=jnp.float32)
        s = jnp.where(causal, s, -jnp.inf)
        s = s - jnp.max(s, axis=-1, keepdims=True)
        p = jnp.exp(s)
        # approx EUP reciprocal: ~1e-4 rel. error vs exact softmax (inference OK)
        p = p * pl.reciprocal(jnp.sum(p, axis=-1, keepdims=True), approx=True)
        yh = jnp.dot(p.astype(compute_dtype), vh, preferred_element_type=jnp.float32)
        ys.append(yh.astype(compute_dtype))

    # Concatenate per-head outputs into a lane-dense (T, C) tile (head pairs are
    # 128-lane aligned when D == 64) and issue ONE full-depth projection
    # (contraction = C) instead of per-head 64-deep projections.
    y = jnp.concatenate(ys, axis=-1)
    attn_out = jnp.dot(y, w_aproj_ref[...], preferred_element_type=jnp.float32)

    o_ref[0] = (x.astype(jnp.float32) + attn_scale * attn_out).astype(o_ref.dtype)
    # TODO(synk): for long T / large C (v7x 64 MiB VMEM), split into a QKV
    # projection kernel plus a flash (online-softmax) kernel gridded over
    # (batch, head, q-tile) marked "parallel", and switch this static head loop
    # to lax.fori_loop over 128-lane head groups for large n_head.


def attn_block(x, w_attn, w_aproj, *, n_head, attn_scale, compute_dtype, vmem_limit):
    B, T, C = x.shape
    kernel = functools.partial(attn_block_kernel, n_head=n_head,
                               attn_scale=attn_scale, compute_dtype=compute_dtype)
    return pl.pallas_call(
        kernel,
        out_shape=jax.ShapeDtypeStruct((B, T, C), x.dtype),
        grid_spec=pltpu.PrefetchScalarGridSpec(
            num_scalar_prefetch=0,
            grid=(B,),
            in_specs=[
                pl.BlockSpec((1, T, C), lambda b: (b, 0, 0)),
                # Constant-index resident weights: single-buffer so they cost
                # 1x (not 2x) their size in VMEM.
                pl.BlockSpec((C, 3 * C), lambda b: (0, 0),
                             pipeline_mode=pl.Buffered(1)),
                pl.BlockSpec((C, C), lambda b: (0, 0),
                             pipeline_mode=pl.Buffered(1)),
            ],
            out_specs=pl.BlockSpec((1, T, C), lambda b: (b, 0, 0)),
        ),
        compiler_params=pltpu.CompilerParams(
            dimension_semantics=("parallel",),
            vmem_limit_bytes=vmem_limit),
    )(x, w_attn, w_aproj)


# ---------------------------------------------------------------------------
# Kernel 2: out = x1 + MLP(rmsnorm(x1))
# ---------------------------------------------------------------------------
def mlp_simple_kernel(x_ref, w_fc_ref, w_proj_ref, o_ref, *, compute_dtype):
    x = x_ref[...]
    xn = _rmsnorm(x).astype(compute_dtype)
    h = jnp.dot(xn, w_fc_ref[...], preferred_element_type=jnp.float32)
    h = jax.nn.gelu(h, approximate=False)            # exact GELU == F.gelu default
    y = jnp.dot(h.astype(compute_dtype), w_proj_ref[...],
                preferred_element_type=jnp.float32)
    o_ref[...] = (x.astype(jnp.float32) + y).astype(o_ref.dtype)


def mlp_chunked_kernel(x_ref, w_fc_ref, w_proj_ref, o_ref, xn_ref, acc_ref, *,
                       compute_dtype):
    kk = pl.program_id(1)

    @pl.when(kk == 0)
    def _():
        xn_ref[...] = _rmsnorm(x_ref[...]).astype(xn_ref.dtype)
        acc_ref[...] = jnp.zeros_like(acc_ref)

    h = jnp.dot(xn_ref[...], w_fc_ref[...], preferred_element_type=jnp.float32)
    h = jax.nn.gelu(h, approximate=False)
    acc_ref[...] += jnp.dot(h.astype(compute_dtype), w_proj_ref[...],
                            preferred_element_type=jnp.float32)

    @pl.when(kk == pl.num_programs(1) - 1)
    def _():
        o_ref[...] = (x_ref[...].astype(jnp.float32) + acc_ref[...]).astype(o_ref.dtype)


def mlp_block(x2d, w_fc, w_proj, *, compute_dtype, vmem_limit):
    N, C = x2d.shape
    H4 = w_fc.shape[1]
    wbytes = jnp.dtype(w_fc.dtype).itemsize
    xbytes = jnp.dtype(x2d.dtype).itemsize
    weight_bytes = (C * H4 + H4 * C) * wbytes        # single-buffered (Buffered(1))

    if weight_bytes <= int(0.4 * vmem_limit):
        # ------ simple path: weights fully resident, grid over row tiles only
        def act_bytes(tm):
            # double-buffered x/out tiles + f32 rmsnorm/h/gelu temporaries
            return tm * (C * (4 * xbytes + 8) + 10 * H4)

        tm = None
        for cand in (512, 256, 128, 64, 32, 16, 8):
            if cand <= N and N % cand == 0 \
                    and weight_bytes + act_bytes(cand) <= int(0.75 * vmem_limit):
                tm = cand
                break
        if tm is None:
            tm = _pick_tile(N, (64, 32, 16, 8))
        kernel = functools.partial(mlp_simple_kernel, compute_dtype=compute_dtype)
        return pl.pallas_call(
            kernel,
            out_shape=jax.ShapeDtypeStruct((N, C), x2d.dtype),
            grid_spec=pltpu.PrefetchScalarGridSpec(
                num_scalar_prefetch=0,
                grid=(N // tm,),
                in_specs=[
                    pl.BlockSpec((tm, C), lambda r: (r, 0)),
                    pl.BlockSpec((C, H4), lambda r: (0, 0),
                                 pipeline_mode=pl.Buffered(1)),
                    pl.BlockSpec((H4, C), lambda r: (0, 0),
                                 pipeline_mode=pl.Buffered(1)),
                ],
                out_specs=pl.BlockSpec((tm, C), lambda r: (r, 0)),
            ),
            compiler_params=pltpu.CompilerParams(
                dimension_semantics=("parallel",),
                vmem_limit_bytes=vmem_limit),
        )(x2d, w_fc, w_proj)

    # ------ chunked path (large models): tile rows and the 4C hidden dim
    tm = _pick_tile(N, (256, 128, 64, 32, 16, 8))
    kc = H4
    for cand in (1024, 512, 256, 128):
        if cand <= H4 and H4 % cand == 0 \
                and 4 * C * cand * wbytes <= int(0.3 * vmem_limit):
            kc = cand
            break
    kernel = functools.partial(mlp_chunked_kernel, compute_dtype=compute_dtype)
    return pl.pallas_call(
        kernel,
        out_shape=jax.ShapeDtypeStruct((N, C), x2d.dtype),
        grid_spec=pltpu.PrefetchScalarGridSpec(
            num_scalar_prefetch=0,
            grid=(N // tm, H4 // kc),
            in_specs=[
                pl.BlockSpec((tm, C), lambda r, k: (r, 0)),
                pl.BlockSpec((C, kc), lambda r, k: (0, k)),
                pl.BlockSpec((kc, C), lambda r, k: (k, 0)),
            ],
            out_specs=pl.BlockSpec((tm, C), lambda r, k: (r, 0)),
            scratch_shapes=[
                pltpu.VMEM((tm, C), compute_dtype),   # cached rmsnorm(x1) tile
                pltpu.VMEM((tm, C), jnp.float32),     # f32 accumulator
            ],
        ),
        compiler_params=pltpu.CompilerParams(
            dimension_semantics=("parallel", "arbitrary"),
            vmem_limit_bytes=vmem_limit),
    )(x2d, w_fc, w_proj)


def block_forward(x, w_attn, w_aproj, w_fc, w_mproj, *, n_head, n_layer,
                  mxu_bf16=False):
    """Block forward. mxu_bf16=True (optional, v6e/v7x) runs all MXU matmuls
    with bf16 operands + f32 accumulation even for f32 inputs."""
    B, T, C = x.shape
    attn_scale = 1.0 / math.sqrt(2 * n_layer)
    compute_dtype = jnp.bfloat16 if mxu_bf16 else x.dtype
    if mxu_bf16:
        w_attn, w_aproj, w_fc, w_mproj = (
            w.astype(jnp.bfloat16) for w in (w_attn, w_aproj, w_fc, w_mproj))
    vmem_limit = _vmem_limit_bytes()
    x1 = attn_block(x, w_attn, w_aproj, n_head=n_head, attn_scale=attn_scale,
                    compute_dtype=compute_dtype, vmem_limit=vmem_limit)
    out = mlp_block(x1.reshape(B * T, C), w_fc, w_mproj,
                    compute_dtype=compute_dtype, vmem_limit=vmem_limit)
    return out.reshape(B, T, C)


# ---------------- pure-JAX reference (for correctness check) ----------------
def block_reference(x, w_attn, w_aproj, w_fc, w_mproj, *, n_head, n_layer):
    B, T, C = x.shape
    D = C // n_head
    attn_scale = 1.0 / math.sqrt(2 * n_layer)

    xn = _rmsnorm(x)
    qkv = xn @ w_attn
    q, k, v = jnp.split(qkv, 3, axis=-1)
    q = q.reshape(B, T, n_head, D).transpose(0, 2, 1, 3)
    k = k.reshape(B, T, n_head, D).transpose(0, 2, 1, 3)
    v = v.reshape(B, T, n_head, D).transpose(0, 2, 1, 3)
    s = jnp.einsum("bhqd,bhkd->bhqk", q, k) / math.sqrt(D)
    mask = jnp.tril(jnp.ones((T, T), bool))
    s = jnp.where(mask, s, -jnp.inf)
    p = jax.nn.softmax(s, axis=-1)
    y = jnp.einsum("bhqk,bhkd->bhqd", p, v).transpose(0, 2, 1, 3).reshape(B, T, C)
    y = y @ w_aproj
    x1 = x + attn_scale * y

    xn2 = _rmsnorm(x1)
    h = jax.nn.gelu(xn2 @ w_fc, approximate=False)
    return x1 + h @ w_mproj


if __name__ == "__main__":
    B, T, C = 2, 128, 256
    n_head, n_layer = 4, 6          # head_dim D = 64

    key = jax.random.PRNGKey(0)
    k_x, k1, k2, k3, k4 = jax.random.split(key, 5)
    x = jax.random.normal(k_x, (B, T, C), dtype=jnp.float32)
    # deterministic "weights", stored as (in, out)
    w_attn = 0.02 * jax.random.normal(k1, (C, 3 * C), dtype=jnp.float32)
    w_aproj = 0.02 * jax.random.normal(k2, (C, C), dtype=jnp.float32)
    w_fc = 0.02 * jax.random.normal(k3, (C, 4 * C), dtype=jnp.float32)
    w_mproj = 0.02 * jax.random.normal(k4, (4 * C, C), dtype=jnp.float32)

    out = block_forward(x, w_attn, w_aproj, w_fc, w_mproj,
                        n_head=n_head, n_layer=n_layer)
    out = jax.block_until_ready(out)

    ref = block_reference(x, w_attn, w_aproj, w_fc, w_mproj,
                          n_head=n_head, n_layer=n_layer)
    max_err = float(jnp.max(jnp.abs(out - ref)))
    assert jnp.allclose(out, ref, atol=5e-3, rtol=5e-3), max_err

    # bf16-input smoke test (coarse tolerance: bf16 rounding + approx reciprocal)
    xb = x.astype(jnp.bfloat16)
    wb = [w.astype(jnp.bfloat16) for w in (w_attn, w_aproj, w_fc, w_mproj)]
    out_bf = block_forward(xb, *wb, n_head=n_head, n_layer=n_layer)
    out_bf = jax.block_until_ready(out_bf).astype(jnp.float32)
    assert jnp.allclose(out_bf, ref, atol=1e-1, rtol=1e-1), \
        float(jnp.max(jnp.abs(out_bf - ref)))

    # optional bf16-MXU path on f32 inputs (v6e/v7x matmul speedup), coarse tol
    out_mxu = block_forward(x, w_attn, w_aproj, w_fc, w_mproj,
                            n_head=n_head, n_layer=n_layer, mxu_bf16=True)
    out_mxu = jax.block_until_ready(out_mxu)
    assert jnp.allclose(out_mxu, ref, atol=1e-1, rtol=1e-1), \
        float(jnp.max(jnp.abs(out_mxu - ref)))

    print("KERNEL_OK")
</pallas_src>

<mosaic_0001>
module attributes {stable_mosaic.version = 11 : i64} {
  func.func @attn_block_kernel(%arg0: i32, %arg1: memref<1x128x256xf32, #tpu.memory_space<vmem>>, %arg2: memref<256x768xf32, #tpu.memory_space<vmem>>, %arg3: memref<256x256xf32, #tpu.memory_space<vmem>>, %arg4: memref<1x128x256xf32, #tpu.memory_space<vmem>>) attributes {dimension_semantics = [#tpu.dimension_semantics<parallel>], iteration_bounds = array<i64: 2>, scalar_prefetch = 0 : i64, scratch_operands = 0 : i64, tpu.core_type = #tpu.core_type<tc>, window_params = [{transform_indices = @transform_0, window_bounds = array<i64: 1, 128, 256>}, {pipeline_mode = #tpu.pipeline_mode<synchronous>, transform_indices = @transform_1, window_bounds = array<i64: 256, 768>}, {pipeline_mode = #tpu.pipeline_mode<synchronous>, transform_indices = @transform_2, window_bounds = array<i64: 256, 256>}, {transform_indices = @transform_3, window_bounds = array<i64: 1, 128, 256>}]} {
    %c0 = arith.constant 0 : index
    %c0_0 = arith.constant 0 : index
    %c0_1 = arith.constant 0 : index
    %0 = vector.load %arg1[%c0, %c0_0, %c0_1] : memref<1x128x256xf32, #tpu.memory_space<vmem>>, vector<1x128x256xf32>
    %1 = vector.shape_cast %0 : vector<1x128x256xf32> to vector<128x256xf32>
    %2 = arith.mulf %1, %1 : vector<128x256xf32>
    %cst = arith.constant dense<0.000000e+00> : vector<128xf32>
    %3 = vector.multi_reduction <add>, %2, %cst [1] : vector<128x256xf32> to vector<128xf32>
    %4 = vector.shape_cast %3 : vector<128xf32> to vector<128x1xf32>
    %cst_2 = arith.constant 2.560000e+02 : f32
    %5 = vector.broadcast %cst_2 : f32 to vector<128x1xf32>
    %6 = arith.divf %4, %5 : vector<128x1xf32>
    %cst_3 = arith.constant 9.99999997E-7 : f32
    %7 = vector.broadcast %cst_3 : f32 to vector<128x1xf32>
    %8 = arith.addf %6, %7 : vector<128x1xf32>
    %9 = math.rsqrt %8 : vector<128x1xf32>
    %10 = vector.broadcast %9 : vector<128x1xf32> to vector<128x256xf32>
    %11 = arith.mulf %1, %10 : vector<128x256xf32>
    %c0_4 = arith.constant 0 : index
    %c0_5 = arith.constant 0 : index
    %12 = vector.load %arg2[%c0_4, %c0_5] : memref<256x768xf32, #tpu.memory_space<vmem>>, vector<256x768xf32>
    %cst_6 = arith.constant dense<0.000000e+00> : vector<128x768xf32>
    %13 = tpu.matmul %11, %12, %cst_6 {dimension_numbers = #tpu.dot_dimension_numbers<[1], [0], [0], [1], [0, 0, 1, 1], [], []>} : vector<128x256xf32>, vector<256x768xf32>, vector<128x768xf32> -> vector<128x768xf32>
    %14 = vector.extract_strided_slice %13 {offsets = [0, 0], sizes = [128, 256], strides = [1, 1]} : vector<128x768xf32> to vector<128x256xf32>
    %cst_7 = arith.constant 1.250000e-01 : f32
    %15 = vector.broadcast %cst_7 : f32 to vector<128x256xf32>
    %16 = arith.mulf %14, %15 : vector<128x256xf32>
    %17 = vector.extract_strided_slice %13 {offsets = [0, 256], sizes = [128, 256], strides = [1, 1]} : vector<128x768xf32> to vector<128x256xf32>
    %18 = vector.extract_strided_slice %13 {offsets = [0, 512], sizes = [128, 256], strides = [1, 1]} : vector<128x768xf32> to vector<128x256xf32>
    %19 = tpu.iota {dimensions = array<i32: 0>} : vector<128x128xi32>
    %20 = tpu.iota {dimensions = array<i32: 1>} : vector<128x128xi32>
    %21 = arith.cmpi sge, %19, %20 : vector<128x128xi32>
    %22 = vector.extract_strided_slice %16 {offsets = [0, 0], sizes = [128, 64], strides = [1, 1]} : vector<128x256xf32> to vector<128x64xf32>
    %23 = vector.extract_strided_slice %17 {offsets = [0, 0], sizes = [128, 64], strides = [1, 1]} : vector<128x256xf32> to vector<128x64xf32>
    %24 = vector.extract_strided_slice %18 {offsets = [0, 0], sizes = [128, 64], strides = [1, 1]} : vector<128x256xf32> to vector<128x64xf32>
    %cst_8 = arith.constant dense<0.000000e+00> : vector<128x128xf32>
    %25 = tpu.matmul %22, %23, %cst_8 {dimension_numbers = #tpu.dot_dimension_numbers<[1], [1], [0], [0], [0, 0, 1, 0], [], []>} : vector<128x64xf32>, vector<128x64xf32>, vector<128x128xf32> -> vector<128x128xf32>
    %cst_9 = arith.constant 0xFF800000 : f32
    %26 = vector.broadcast %cst_9 : f32 to vector<128x128xf32>
    %27 = arith.select %21, %25, %26 : vector<128x128xi1>, vector<128x128xf32>
    %cst_10 = arith.constant dense<0xFF800000> : vector<128xf32>
    %28 = vector.multi_reduction <maximumf>, %27, %cst_10 [1] : vector<128x128xf32> to vector<128xf32>
    %29 = vector.shape_cast %28 : vector<128xf32> to vector<128x1xf32>
    %30 = vector.broadcast %29 : vector<128x1xf32> to vector<128x128xf32>
    %31 = arith.subf %27, %30 : vector<128x128xf32>
    %32 = math.exp %31 : vector<128x128xf32>
    %cst_11 = arith.constant dense<0.000000e+00> : vector<128xf32>
    %33 = vector.multi_reduction <add>, %32, %cst_11 [1] : vector<128x128xf32> to vector<128xf32>
    %34 = vector.shape_cast %33 : vector<128xf32> to vector<128x1xf32>
    %35 = tpu.reciprocal %34 {approx = true} : vector<128x1xf32> -> vector<128x1xf32>
    %36 = vector.broadcast %35 : vector<128x1xf32> to vector<128x128xf32>
    %37 = arith.mulf %32, %36 : vector<128x128xf32>
    %cst_12 = arith.constant dense<0.000000e+00> : vector<128x64xf32>
    %38 = tpu.matmul %37, %24, %cst_12 {dimension_numbers = #tpu.dot_dimension_numbers<[1], [0], [0], [1], [0, 0, 1, 1], [], []>} : vector<128x128xf32>, vector<128x64xf32>, vector<128x64xf32> -> vector<128x64xf32>
    %39 = vector.extract_strided_slice %16 {offsets = [0, 64], sizes = [128, 64], strides = [1, 1]} : vector<128x256xf32> to vector<128x64xf32>
    %40 = vector.extract_strided_slice %17 {offsets = [0, 64], sizes = [128, 64], strides = [1, 1]} : vector<128x256xf32> to vector<128x64xf32>
    %41 = vector.extract_strided_slice %18 {offsets = [0, 64], sizes = [128, 64], strides = [1, 1]} : vector<128x256xf32> to vector<128x64xf32>
    %cst_13 = arith.constant dense<0.000000e+00> : vector<128x128xf32>
    %42 = tpu.matmul %39, %40, %cst_13 {dimension_numbers = #tpu.dot_dimension_numbers<[1], [1], [0], [0], [0, 0, 1, 0], [], []>} : vector<128x64xf32>, vector<128x64xf32>, vector<128x128xf32> -> vector<128x128xf32>
    %cst_14 = arith.constant 0xFF800000 : f32
    %43 = vector.broadcast %cst_14 : f32 to vector<128x128xf32>
    %44 = arith.select %21, %42, %43 : vector<128x128xi1>, vector<128x128xf32>
    %cst_15 = arith.constant dense<0xFF800000> : vector<128xf32>
    %45 = vector.multi_reduction <maximumf>, %44, %cst_15 [1] : vector<128x128xf32> to vector<128xf32>
    %46 = vector.shape_cast %45 : vector<128xf32> to vector<128x1xf32>
    %47 = vector.broadcast %46 : vector<128x1xf32> to vector<128x128xf32>
    %48 = arith.subf %44, %47 : vector<128x128xf32>
    %49 = math.exp %48 : vector<128x128xf32>
    %cst_16 = arith.constant dense<0.000000e+00> : vector<128xf32>
    %50 = vector.multi_reduction <add>, %49, %cst_16 [1] : vector<128x128xf32> to vector<128xf32>
    %51 = vector.shape_cast %50 : vector<128xf32> to vector<128x1xf32>
    %52 = tpu.reciprocal %51 {approx = true} : vector<128x1xf32> -> vector<128x1xf32>
    %53 = vector.broadcast %52 : vector<128x1xf32> to vector<128x128xf32>
    %54 = arith.mulf %49, %53 : vector<128x128xf32>
    %cst_17 = arith.constant dense<0.000000e+00> : vector<128x64xf32>
    %55 = tpu.matmul %54, %41, %cst_17 {dimension_numbers = #tpu.dot_dimension_numbers<[1], [0], [0], [1], [0, 0, 1, 1], [], []>} : vector<128x128xf32>, vector<128x64xf32>, vector<128x64xf32> -> vector<128x64xf32>
    %56 = vector.extract_strided_slice %16 {offsets = [0, 128], sizes = [128, 64], strides = [1, 1]} : vector<128x256xf32> to vector<128x64xf32>
    %57 = vector.extract_strided_slice %17 {offsets = [0, 128], sizes = [128, 64], strides = [1, 1]} : vector<128x256xf32> to vector<128x64xf32>
    %58 = vector.extract_strided_slice %18 {offsets = [0, 128], sizes = [128, 64], strides = [1, 1]} : vector<128x256xf32> to vector<128x64xf32>
    %cst_18 = arith.constant dense<0.000000e+00> : vector<128x128xf32>
    %59 = tpu.matmul %56, %57, %cst_18 {dimension_numbers = #tpu.dot_dimension_numbers<[1], [1], [0], [0], [0, 0, 1, 0], [], []>} : vector<128x64xf32>, vector<128x64xf32>, vector<128x128xf32> -> vector<128x128xf32>
    %cst_19 = arith.constant 0xFF800000 : f32
    %60 = vector.broadcast %cst_19 : f32 to vector<128x128xf32>
    %61 = arith.select %21, %59, %60 : vector<128x128xi1>, vector<128x128xf32>
    %cst_20 = arith.constant dense<0xFF800000> : vector<128xf32>
    %62 = vector.multi_reduction <maximumf>, %61, %cst_20 [1] : vector<128x128xf32> to vector<128xf32>
    %63 = vector.shape_cast %62 : vector<128xf32> to vector<128x1xf32>
    %64 = vector.broadcast %63 : vector<128x1xf32> to vector<128x128xf32>
    %65 = arith.subf %61, %64 : vector<128x128xf32>
    %66 = math.exp %65 : vector<128x128xf32>
    %cst_21 = arith.constant dense<0.000000e+00> : vector<128xf32>
    %67 = vector.multi_reduction <add>, %66, %cst_21 [1] : vector<128x128xf32> to vector<128xf32>
    %68 = vector.shape_cast %67 : vector<128xf32> to vector<128x1xf32>
    %69 = tpu.reciprocal %68 {approx = true} : vector<128x1xf32> -> vector<128x1xf32>
    %70 = vector.broadcast %69 : vector<128x1xf32> to vector<128x128xf32>
    %71 = arith.mulf %66, %70 : vector<128x128xf32>
    %cst_22 = arith.constant dense<0.000000e+00> : vector<128x64xf32>
    %72 = tpu.matmul %71, %58, %cst_22 {dimension_numbers = #tpu.dot_dimension_numbers<[1], [0], [0], [1], [0, 0, 1, 1], [], []>} : vector<128x128xf32>, vector<128x64xf32>, vector<128x64xf32> -> vector<128x64xf32>
    %73 = vector.extract_strided_slice %16 {offsets = [0, 192], sizes = [128, 64], strides = [1, 1]} : vector<128x256xf32> to vector<128x64xf32>
    %74 = vector.extract_strided_slice %17 {offsets = [0, 192], sizes = [128, 64], strides = [1, 1]} : vector<128x256xf32> to vector<128x64xf32>
    %75 = vector.extract_strided_slice %18 {offsets = [0, 192], sizes = [128, 64], strides = [1, 1]} : vector<128x256xf32> to vector<128x64xf32>
    %cst_23 = arith.constant dense<0.000000e+00> : vector<128x128xf32>
    %76 = tpu.matmul %73, %74, %cst_23 {dimension_numbers = #tpu.dot_dimension_numbers<[1], [1], [0], [0], [0, 0, 1, 0], [], []>} : vector<128x64xf32>, vector<128x64xf32>, vector<128x128xf32> -> vector<128x128xf32>
    %cst_24 = arith.constant 0xFF800000 : f32
    %77 = vector.broadcast %cst_24 : f32 to vector<128x128xf32>
    %78 = arith.select %21, %76, %77 : vector<128x128xi1>, vector<128x128xf32>
    %cst_25 = arith.constant dense<0xFF800000> : vector<128xf32>
    %79 = vector.multi_reduction <maximumf>, %78, %cst_25 [1] : vector<128x128xf32> to vector<128xf32>
    %80 = vector.shape_cast %79 : vector<128xf32> to vector<128x1xf32>
    %81 = vector.broadcast %80 : vector<128x1xf32> to vector<128x128xf32>
    %82 = arith.subf %78, %81 : vector<128x128xf32>
    %83 = math.exp %82 : vector<128x128xf32>
    %cst_26 = arith.constant dense<0.000000e+00> : vector<128xf32>
    %84 = vector.multi_reduction <add>, %83, %cst_26 [1] : vector<128x128xf32> to vector<128xf32>
    %85 = vector.shape_cast %84 : vector<128xf32> to vector<128x1xf32>
    %86 = tpu.reciprocal %85 {approx = true} : vector<128x1xf32> -> vector<128x1xf32>
    %87 = vector.broadcast %86 : vector<128x1xf32> to vector<128x128xf32>
    %88 = arith.mulf %83, %87 : vector<128x128xf32>
    %cst_27 = arith.constant dense<0.000000e+00> : vector<128x64xf32>
    %89 = tpu.matmul %88, %75, %cst_27 {dimension_numbers = #tpu.dot_dimension_numbers<[1], [0], [0], [1], [0, 0, 1, 1], [], []>} : vector<128x128xf32>, vector<128x64xf32>, vector<128x64xf32> -> vector<128x64xf32>
    %90 = tpu.concatenate %38, %55, %72, %89 in 1 : vector<128x64xf32>, vector<128x64xf32>, vector<128x64xf32>, vector<128x64xf32> -> vector<128x256xf32>
    %c0_28 = arith.constant 0 : index
    %c0_29 = arith.constant 0 : index
    %91 = vector.load %arg3[%c0_28, %c0_29] : memref<256x256xf32, #tpu.memory_space<vmem>>, vector<256x256xf32>
    %cst_30 = arith.constant dense<0.000000e+00> : vector<128x256xf32>
    %92 = tpu.matmul %90, %91, %cst_30 {dimension_numbers = #tpu.dot_dimension_numbers<[1], [0], [0], [1], [0, 0, 1, 1], [], []>} : vector<128x256xf32>, vector<256x256xf32>, vector<128x256xf32> -> vector<128x256xf32>
    %cst_31 = arith.constant 0.288675129 : f32
    %93 = vector.broadcast %cst_31 : f32 to vector<128x256xf32>
    %94 = arith.mulf %93, %92 : vector<128x256xf32>
    %95 = arith.addf %1, %94 : vector<128x256xf32>
    %c0_32 = arith.constant 0 : index
    %c0_33 = arith.constant 0 : index
    %c0_34 = arith.constant 0 : index
    %96 = vector.load %arg4[%c0_32, %c0_33, %c0_34] : memref<1x128x256xf32, #tpu.memory_space<vmem>>, vector<1x128x256xf32>
    %97 = vector.shape_cast %96 : vector<1x128x256xf32> to vector<128x256xf32>
    %98 = vector.shape_cast %95 : vector<128x256xf32> to vector<1x128x256xf32>
    tpu.vector_store %arg4[%c0_32, %c0_33, %c0_34], %98 {strides = array<i32>} : memref<1x128x256xf32, #tpu.memory_space<vmem>>, vector<1x128x256xf32>,
    return
  }
  func.func @transform_0(%arg0: i32) -> (i32, i32, i32) {
    %c0_i32 = arith.constant 0 : i32
    %c0_i32_0 = arith.constant 0 : i32
    %c0_i32_1 = arith.constant 0 : i32
    return %arg0, %c0_i32, %c0_i32_0 : i32, i32, i32
  }
  func.func @transform_1(%arg0: i32) -> (i32, i32) {
    %c0_i32 = arith.constant 0 : i32
    %c0_i32_0 = arith.constant 0 : i32
    %c0_i32_1 = arith.constant 0 : i32
    return %c0_i32, %c0_i32_0 : i32, i32
  }
  func.func @transform_2(%arg0: i32) -> (i32, i32) {
    %c0_i32 = arith.constant 0 : i32
    %c0_i32_0 = arith.constant 0 : i32
    %c0_i32_1 = arith.constant 0 : i32
    return %c0_i32, %c0_i32_0 : i32, i32
  }
  func.func @transform_3(%arg0: i32) -> (i32, i32, i32) {
    %c0_i32 = arith.constant 0 : i32
    %c0_i32_0 = arith.constant 0 : i32
    %c0_i32_1 = arith.constant 0 : i32
    return %arg0, %c0_i32, %c0_i32_0 : i32, i32, i32
  }
}

</mosaic_0001>

<llo_original>
// kernel: tpu_custom_call.1
$region0: #{tpu_custom_call.1}
  #allocation0 [shape = 'u32[]', space=smem, size = 0x4, offset = 0x4, fixed_abs, tag = 'smem constant byte address 0x4 - core index']
  #allocation1 [shape = 'u32[144,128]{1,0:T(1,128)}', space=vmem, size = 0x12000, scoped, tag = 'internal scratch']
  %s0 = inlined_call_operand.hbm [shape: f32[2,128,256], index: 0, kind: input, shape index: {}]
  %s1 = inlined_call_operand.hbm [shape: f32[256,768], index: 1, kind: input, shape index: {}]
  %s2 = inlined_call_operand.hbm [shape: f32[256,256], index: 2, kind: input, shape index: {}]
  %s3 = inlined_call_operand.hbm [shape: f32[2,128,256], index: 3, kind: output, shape index: {}]
  %s4 = sld [smem:[#allocation0]]
  $region57: #{tpu_custom_call.1} parent=0
    _
  %s6 = ssub.s32 1, %s4
  %s7 = scalar_select 0, %s6, %s4
  $region1: #{tpu_custom_call.1} parent=0
    #allocation2 [shape = 'u8[262144]{0}', space=vmem, size = 0x40000, scoped, tag = 'input window, operand 0']
    #allocation3 [shape = 's32[2]{0}', space=sflag, size = 0x8, scoped, tag = 'scoped memory for tpu_custom_call.1']
    #allocation4 [shape = 's32[2]{0}', space=sflag, size = 0x8, scoped, tag = 'scoped memory for tpu_custom_call.1']
    #allocation5 [shape = 'u8[786432]{0}', space=vmem, size = 0xc0000, scoped, tag = 'input window, operand 1, single buffered']
    #allocation6 [shape = 's32[1]{0}', space=sflag, size = 0x4, scoped, tag = 'scoped memory for tpu_custom_call.1']
    #allocation7 [shape = 'u8[262144]{0}', space=vmem, size = 0x40000, scoped, tag = 'input window, operand 2, single buffered']
    #allocation8 [shape = 'u8[262144]{0}', space=vmem, size = 0x40000, scoped, tag = 'output window, operand 0']
    %8 = vsyncpa [#allocation3], 0
    %s9 = scalar_lea.sflag [#allocation3], 1
    %10 = vsyncpa %s9, 0
    %11 = vsyncpa [#allocation6], 0
    %12 = vsyncpa [#allocation4], 0
    %s13 = scalar_lea.sflag [#allocation4], 1
    %14 = vsyncpa %s13, 0
    loop: start=0, step=1, limit=4
    $region2: #{tpu_custom_call.1} parent=1 // loop_pre_header
      _
    $region3: #{tpu_custom_call.1} parent=1 // loop_header
      %s16 = sphi 0, %s20
      %p17 = scmp.ge.s32.totalorder %s16, 4
      %s26 = sphi 0, %s28
      %s29 = sphi 0, %s26
      %s30 = sphi 0, %s29
      %s46 = sphi 0, %s30
      %s50 = sphi 0, %s50
      %s52 = sphi 0, %s50
      %s53 = sphi 0, %s52
      %s67 = sphi 0, %s53
      %s71 = sphi 0, %s71
      %s73 = sphi 0, %s71
      %s74 = sphi 0, %s73
      %s88 = sphi 0, %s74
      %s94 = sphi 0, %s96
      %s97 = sphi 0, %s94
      %s98 = sphi 0, %s97
      %s114 = sphi 0, %s98
    $region4: #{tpu_custom_call.1} parent=1 // loop_header_branch
      %19 = sbr.rel (%p17) target = $region8
    $region5: #{tpu_custom_call.1} parent=1 // loop_body
      %s21 = ssub.s32 %s16, 1
      %s22 = ssub.s32 %s16, 2
      %s23 = sadd.s32 %s16, 1
      %s24 = ssub.s32 %s16, %s23
      %p25 = scmp.eq.s32.totalorder %s24, 0
      %s27 = sadd.s32 %s26, 1
      %s28 = scalar_select %p25, %s26, %s27
      %p31 = pneg %p25
      %p32 = scmp.eq.s32.totalorder %s16, 1
      %p33 = por %p31, %p32
      %p34 = scmp.ne.s32.totalorder %s26, %s29
      %p35 = scmp.eq.s32.totalorder %s16, 0
      %p36 = por %p34, %p35
      %p37 = scmp.ne.s32.totalorder %s26, %s29
      %p38 = scmp.eq.s32.totalorder %s21, 1
      %p39 = por %p37, %p38
      %p40 = scmp.ne.s32.totalorder %s29, %s30
      %p41 = scmp.eq.s32.totalorder %s21, 0
      %p42 = por %p40, %p41
      %p43 = scmp.ne.s32.totalorder %s29, %s30
      %p44 = scmp.eq.s32.totalorder %s22, 1
      %p45 = por %p43, %p44
      %p47 = scmp.ne.s32.totalorder %s30, %s46
      %p48 = scmp.eq.s32.totalorder %s22, 0
      %p49 = por %p47, %p48
      %s51 = sadd.s32 %s50, 1
      %p54 = scmp.eq.s32.totalorder %s16, 1
      %p55 = scmp.ne.s32.totalorder %s50, %s52
      %p56 = scmp.eq.s32.totalorder %s16, 0
      %p57 = por %p55, %p56
      %p58 = scmp.ne.s32.totalorder %s50, %s52
      %p59 = scmp.eq.s32.totalorder %s21, 1
      %p60 = por %p58, %p59
      %p61 = scmp.ne.s32.totalorder %s52, %s53
      %p62 = scmp.eq.s32.totalorder %s21, 0
      %p63 = por %p61, %p62
      %p64 = scmp.ne.s32.totalorder %s52, %s53
      %p65 = scmp.eq.s32.totalorder %s22, 1
      %p66 = por %p64, %p65
      %p68 = scmp.ne.s32.totalorder %s53, %s67
      %p69 = scmp.eq.s32.totalorder %s22, 0
      %p70 = por %p68, %p69
      %s72 = sadd.s32 %s71, 1
      %p75 = scmp.eq.s32.totalorder %s16, 1
      %p76 = scmp.ne.s32.totalorder %s71, %s73
      %p77 = scmp.eq.s32.totalorder %s16, 0
      %p78 = por %p76, %p77
      %p79 = scmp.ne.s32.totalorder %s71, %s73
      %p80 = scmp.eq.s32.totalorder %s21, 1
      %p81 = por %p79, %p80
      %p82 = scmp.ne.s32.totalorder %s73, %s74
      %p83 = scmp.eq.s32.totalorder %s21, 0
      %p84 = por %p82, %p83
      %p85 = scmp.ne.s32.totalorder %s73, %s74
      %p86 = scmp.eq.s32.totalorder %s22, 1
      %p87 = por %p85, %p86
      %p89 = scmp.ne.s32.totalorder %s74, %s88
      %p90 = scmp.eq.s32.totalorder %s22, 0
      %p91 = por %p89, %p90
      %s92 = ssub.s32 %s16, %s23
      %p93 = scmp.eq.s32.totalorder %s92, 0
      %s95 = sadd.s32 %s94, 1
      %s96 = scalar_select %p93, %s94, %s95
      %p99 = pneg %p93
      %p100 = scmp.eq.s32.totalorder %s16, 1
      %p101 = por %p99, %p100
      %p102 = scmp.ne.s32.totalorder %s94, %s97
      %p103 = scmp.eq.s32.totalorder %s16, 0
      %p104 = por %p102, %p103
      %p105 = scmp.ne.s32.totalorder %s94, %s97
      %p106 = scmp.eq.s32.totalorder %s21, 1
      %p107 = por %p105, %p106
      %p108 = scmp.ne.s32.totalorder %s97, %s98
      %p109 = scmp.eq.s32.totalorder %s21, 0
      %p110 = por %p108, %p109
      %p111 = scmp.ne.s32.totalorder %s97, %s98
      %p112 = scmp.eq.s32.totalorder %s22, 1
      %p113 = por %p111, %p112
      %p115 = scmp.ne.s32.totalorder %s98, %s114
      %p116 = scmp.eq.s32.totalorder %s22, 0
      %p117 = por %p115, %p116
      %p118 = scmp.le.s32.totalorder 1, %s16
      %p119 = scmp.lt.s32.totalorder %s16, 3
      %p120 = pnand %p118, %p119
      %p121 = pneg %p120
      // Predicated region
      $region9: #{tpu_custom_call.1} parent=5 // pred_check
        _
      $region10: #{tpu_custom_call.1} parent=5 // pred_check_branch
        %123 = sbr.rel (%p120) target = $region12
      $region11: #{tpu_custom_call.1} parent=5 // pred_region
        %s124 = ssub.s32 %s16, 1
        // Predicated region
        $region13: #{tpu_custom_call.1} parent=11 // pred_check
          %p125 = pneg %p63
        $region14: #{tpu_custom_call.1} parent=11 // pred_check_branch
          %127 = sbr.rel (%p125) target = $region16
        $region15: #{tpu_custom_call.1} parent=11 // pred_region
          %s129 = ssub.s32 24576, 24576
          %130 = vsyncadd [#allocation6], %s129
          %s131 = sshll.u32 [#allocation5], 4
          %s132 = int_to_ptr.vmem [resolvable:$true] %s131
          %137 = dma.hbm_to_vmem [thread:$0]  %s1, 24576, %s132, [#allocation6], 768, 768, 48
        $region16: #{tpu_custom_call.1} parent=11 // pred_fallthru
          _
        // Predicated region
        $region17: #{tpu_custom_call.1} parent=11 // pred_check
          %p138 = pneg %p84
        $region18: #{tpu_custom_call.1} parent=11 // pred_check_branch
          %140 = sbr.rel (%p138) target = $region20
        $region19: #{tpu_custom_call.1} parent=11 // pred_region
          %s142 = ssub.s32 8192, 8192
          %143 = vsyncadd [#allocation6], %s142
          %s144 = sshll.u32 [#allocation7], 4
          %s145 = int_to_ptr.vmem [resolvable:$true] %s144
          %150 = dma.hbm_to_vmem [thread:$0]  %s2, 8192, %s145, [#allocation6], 256, 256, 16
        $region20: #{tpu_custom_call.1} parent=11 // pred_fallthru
          _
      $region12: #{tpu_custom_call.1} parent=5 // pred_fallthru
        _
      %p151 = scmp.lt.s32.totalorder %s16, 2
      // Predicated region
      $region21: #{tpu_custom_call.1} parent=5 // pred_check
        %p152 = pneg %p151
      $region22: #{tpu_custom_call.1} parent=5 // pred_check_branch
        %154 = sbr.rel (%p152) target = $region24
      $region23: #{tpu_custom_call.1} parent=5 // pred_region
        // Predicated region
        $region25: #{tpu_custom_call.1} parent=23 // pred_check
          %p155 = pneg %p36
        $region26: #{tpu_custom_call.1} parent=23 // pred_check_branch
          %157 = sbr.rel (%p155) target = $region28
        $region27: #{tpu_custom_call.1} parent=23 // pred_region
          %s158 = sand.u32 %s26, 1
          %s159 = scalar_lea.sflag [#allocation3], %s158
          %s160 = sand.u32 %s26, 1
          %s161 = smul.addr %s160, 256
          %s162 = scalar_lea.vmem [#allocation2], %s161
          %s164 = ssub.s32 4096, 4096
          %165 = vsyncadd %s159, %s164
          %s166 = smul.addr %s16, 32
          %s167 = smul.addr %s166, 128
          %s168 = scalar_lea.hbm %s0, %s167
          %s169 = sshll.u32 %s162, 4
          %s170 = int_to_ptr.vmem [resolvable:$true] %s169
          %175 = dma.hbm_to_vmem [thread:$0]  %s168, 4096, %s170, %s159, 256, 256, 16
        $region28: #{tpu_custom_call.1} parent=23 // pred_fallthru
          _
      $region24: #{tpu_custom_call.1} parent=5 // pred_fallthru
        _
      %p176 = scmp.le.s32.totalorder 1, %s16
      %p177 = scmp.lt.s32.totalorder %s16, 3
      %p178 = pnand %p176, %p177
      %p179 = pneg %p178
      // Predicated region
      $region29: #{tpu_custom_call.1} parent=5 // pred_check
        _
      $region30: #{tpu_custom_call.1} parent=5 // pred_check_branch
        %181 = sbr.rel (%p178) target = $region32
      $region31: #{tpu_custom_call.1} parent=5 // pred_region
        %s182 = ssub.s32 %s16, 1
        %s183 = sand.u32 %s29, 1
        %s184 = scalar_lea.sflag [#allocation3], %s183
        %s185 = sand.u32 %s29, 1
        %s186 = smul.addr %s185, 256
        %s187 = scalar_lea.vmem [#allocation2], %s186
        // Predicated region
        $region33: #{tpu_custom_call.1} parent=31 // pred_check
          %p188 = pneg %p42
        $region34: #{tpu_custom_call.1} parent=31 // pred_check_branch
          %190 = sbr.rel (%p188) target = $region36
        $region35: #{tpu_custom_call.1} parent=31 // pred_region
          %191 = dma.done %s184, 4096
        $region36: #{tpu_custom_call.1} parent=31 // pred_fallthru
          _
        // Predicated region
        $region37: #{tpu_custom_call.1} parent=31 // pred_check
          %p192 = pneg %p63
        $region38: #{tpu_custom_call.1} parent=31 // pred_check_branch
          %194 = sbr.rel (%p192) target = $region40
        $region39: #{tpu_custom_call.1} parent=31 // pred_region
          %195 = dma.done [#allocation6], 24576
        $region40: #{tpu_custom_call.1} parent=31 // pred_fallthru
          _
        // Predicated region
        $region41: #{tpu_custom_call.1} parent=31 // pred_check
          %p196 = pneg %p84
        $region42: #{tpu_custom_call.1} parent=31 // pred_check_branch
          %198 = sbr.rel (%p196) target = $region44
        $region43: #{tpu_custom_call.1} parent=31 // pred_region
          %199 = dma.done [#allocation6], 8192
        $region44: #{tpu_custom_call.1} parent=31 // pred_fallthru
          _
        %s200 = sand.u32 %s29, 1
        %s201 = scalar_lea.sflag [#allocation3], %s200
        %s202 = sand.u32 %s29, 1
        %s203 = smul.addr %s202, 256
        %s204 = scalar_lea.vmem [#allocation2], %s203
        %p205 = pneg %p42
        %p206 = pneg %p39
        %p207 = pneg %p63
        %p208 = pneg %p60
        %p209 = pneg %p84
        %p210 = pneg %p81
        %p211 = pneg %p110
        %p212 = pneg %p107
        %s213 = sand.u32 %s97, 1
        %s214 = scalar_lea.sflag [#allocation4], %s213
        %s215 = sand.u32 %s97, 1
        %s216 = smul.addr %s215, 256
        %s217 = scalar_lea.vmem [#allocation8], %s216
        %v218 = vld [vmem:[%s187] sm:$0xff]
        %v219 = vld [vmem:[%s187 + $0x8] sm:$0xff]
        %v220 = vld [vmem:[%s187 + $0x10] sm:$0xff]
        %v221 = vld [vmem:[%s187 + $0x18] sm:$0xff]
        %v222 = vld [vmem:[%s187 + $0x20] sm:$0xff]
        %v223 = vld [vmem:[%s187 + $0x28] sm:$0xff]
        %v224 = vld [vmem:[%s187 + $0x30] sm:$0xff]
        %v225 = vld [vmem:[%s187 + $0x38] sm:$0xff]
        %v226 = vld [vmem:[%s187 + $0x40] sm:$0xff]
        %v227 = vld [vmem:[%s187 + $0x48] sm:$0xff]
        %v228 = vld [vmem:[%s187 + $0x50] sm:$0xff]
        %v229 = vld [vmem:[%s187 + $0x58] sm:$0xff]
        %v230 = vld [vmem:[%s187 + $0x60] sm:$0xff]
        %v231 = vld [vmem:[%s187 + $0x68] sm:$0xff]
        %v232 = vld [vmem:[%s187 + $0x70] sm:$0xff]
        %v233 = vld [vmem:[%s187 + $0x78] sm:$0xff]
        %v234 = vld [vmem:[%s187 + $0x80] sm:$0xff]
        %v235 = vld [vmem:[%s187 + $0x88] sm:$0xff]
        %v236 = vld [vmem:[%s187 + $0x90] sm:$0xff]
        %v237 = vld [vmem:[%s187 + $0x98] sm:$0xff]
        %v238 = vld [vmem:[%s187 + $0xa0] sm:$0xff]
        %v239 = vld [vmem:[%s187 + $0xa8] sm:$0xff]
        %v240 = vld [vmem:[%s187 + $0xb0] sm:$0xff]
        %v241 = vld [vmem:[%s187 + $0xb8] sm:$0xff]
        %v242 = vld [vmem:[%s187 + $0xc0] sm:$0xff]
        %v243 = vld [vmem:[%s187 + $0xc8] sm:$0xff]
        %v244 = vld [vmem:[%s187 + $0xd0] sm:$0xff]
        %v245 = vld [vmem:[%s187 + $0xd8] sm:$0xff]
        %v246 = vld [vmem:[%s187 + $0xe0] sm:$0xff]
        %v247 = vld [vmem:[%s187 + $0xe8] sm:$0xff]
        %v248 = vld [vmem:[%s187 + $0xf0] sm:$0xff]
        %v249 = vld [vmem:[%s187 + $0xf8] sm:$0xff]
        %v250 = vmul.f32 %v218, %v218
        %v251 = vmul.f32 %v219, %v219
        %v252 = vmul.f32 %v220, %v220
        %v253 = vmul.f32 %v221, %v221
        %v254 = vmul.f32 %v222, %v222
        %v255 = vmul.f32 %v223, %v223
        %v256 = vmul.f32 %v224, %v224
        %v257 = vmul.f32 %v225, %v225
        %v258 = vmul.f32 %v226, %v226
        %v259 = vmul.f32 %v227, %v227
        %v260 = vmul.f32 %v228, %v228
        %v261 = vmul.f32 %v229, %v229
        %v262 = vmul.f32 %v230, %v230
        %v263 = vmul.f32 %v231, %v231
        %v264 = vmul.f32 %v232, %v232
        %v265 = vmul.f32 %v233, %v233
        %v266 = vmul.f32 %v234, %v234
        %v267 = vmul.f32 %v235, %v235
        %v268 = vmul.f32 %v236, %v236
        %v269 = vmul.f32 %v237, %v237
        %v270 = vmul.f32 %v238, %v238
        %v271 = vmul.f32 %v239, %v239
        %v272 = vmul.f32 %v240, %v240
        %v273 = vmul.f32 %v241, %v241
        %v274 = vmul.f32 %v242, %v242
        %v275 = vmul.f32 %v243, %v243
        %v276 = vmul.f32 %v244, %v244
        %v277 = vmul.f32 %v245, %v245
        %v278 = vmul.f32 %v246, %v246
        %v279 = vmul.f32 %v247, %v247
        %v280 = vmul.f32 %v248, %v248
        %v281 = vmul.f32 %v249, %v249
        %v282 = vadd.f32 %v250, %v251
        %283 = vadd.xlane.f32.xlu0 %v282
        %v284 = vpop.xlane.xlu0 %283
        %v285 = vadd.f32 %v252, %v253
        %286 = vadd.xlane.f32.xlu0 %v285
        %v287 = vpop.xlane.xlu0 %286
        %v288 = vadd.f32 %v254, %v255
        %289 = vadd.xlane.f32.xlu0 %v288
        %v290 = vpop.xlane.xlu0 %289
        %v291 = vadd.f32 %v256, %v257
        %292 = vadd.xlane.f32.xlu0 %v291
        %v293 = vpop.xlane.xlu0 %292
        %v294 = vadd.f32 %v258, %v259
        %295 = vadd.xlane.f32.xlu0 %v294
        %v296 = vpop.xlane.xlu0 %295
        %v297 = vadd.f32 %v260, %v261
        %298 = vadd.xlane.f32.xlu0 %v297
        %v299 = vpop.xlane.xlu0 %298
        %v300 = vadd.f32 %v262, %v263
        %301 = vadd.xlane.f32.xlu0 %v300
        %v302 = vpop.xlane.xlu0 %301
        %v303 = vadd.f32 %v264, %v265
        %304 = vadd.xlane.f32.xlu0 %v303
        %v305 = vpop.xlane.xlu0 %304
        %v306 = vadd.f32 %v266, %v267
        %307 = vadd.xlane.f32.xlu0 %v306
        %v308 = vpop.xlane.xlu0 %307
        %v309 = vadd.f32 %v268, %v269
        %310 = vadd.xlane.f32.xlu0 %v309
        %v311 = vpop.xlane.xlu0 %310
        %v312 = vadd.f32 %v270, %v271
        %313 = vadd.xlane.f32.xlu0 %v312
        %v314 = vpop.xlane.xlu0 %313
        %v315 = vadd.f32 %v272, %v273
        %316 = vadd.xlane.f32.xlu0 %v315
        %v317 = vpop.xlane.xlu0 %316
        %v318 = vadd.f32 %v274, %v275
        %319 = vadd.xlane.f32.xlu0 %v318
        %v320 = vpop.xlane.xlu0 %319
        %v321 = vadd.f32 %v276, %v277
        %322 = vadd.xlane.f32.xlu0 %v321
        %v323 = vpop.xlane.xlu0 %322
        %v324 = vadd.f32 %v278, %v279
        %325 = vadd.xlane.f32.xlu0 %v324
        %v326 = vpop.xlane.xlu0 %325
        %v327 = vadd.f32 %v280, %v281
        %328 = vadd.xlane.f32.xlu0 %v327
        %v329 = vpop.xlane.xlu0 %328
        %v330 = vrcp.pop 256.0
        %v331 = vmul.f32 %v284, %v330
        %v332 = vmul.f32 %v287, %v330
        %v333 = vmul.f32 %v290, %v330
        %v334 = vmul.f32 %v293, %v330
        %v335 = vmul.f32 %v296, %v330
        %v336 = vmul.f32 %v299, %v330
        %v337 = vmul.f32 %v302, %v330
        %v338 = vmul.f32 %v305, %v330
        %v339 = vmul.f32 %v308, %v330
        %v340 = vmul.f32 %v311, %v330
        %v341 = vmul.f32 %v314, %v330
        %v342 = vmul.f32 %v317, %v330
        %v343 = vmul.f32 %v320, %v330
        %v344 = vmul.f32 %v323, %v330
        %v345 = vmul.f32 %v326, %v330
        %v346 = vmul.f32 %v329, %v330
        %v347 = vadd.f32 %v331, 1e-06
        %v348 = vadd.f32 %v332, 1e-06
        %v349 = vadd.f32 %v333, 1e-06
        %v350 = vadd.f32 %v334, 1e-06
        %v351 = vadd.f32 %v335, 1e-06
        %v352 = vadd.f32 %v336, 1e-06
        %v353 = vadd.f32 %v337, 1e-06
        %v354 = vadd.f32 %v338, 1e-06
        %v355 = vadd.f32 %v339, 1e-06
        %v356 = vadd.f32 %v340, 1e-06
        %v357 = vadd.f32 %v341, 1e-06
        %v358 = vadd.f32 %v342, 1e-06
        %v359 = vadd.f32 %v343, 1e-06
        %v360 = vadd.f32 %v344, 1e-06
        %v361 = vadd.f32 %v345, 1e-06
        %v362 = vadd.f32 %v346, 1e-06
        %v363 = vrsqrt.pop %v347
        %v364 = vrsqrt.pop %v348
        %v365 = vrsqrt.pop %v349
        %v366 = vrsqrt.pop %v350
        %v367 = vrsqrt.pop %v351
        %v368 = vrsqrt.pop %v352
        %v369 = vrsqrt.pop %v353
        %v370 = vrsqrt.pop %v354
        %v371 = vrsqrt.pop %v355
        %v372 = vrsqrt.pop %v356
        %v373 = vrsqrt.pop %v357
        %v374 = vrsqrt.pop %v358
        %v375 = vrsqrt.pop %v359
        %v376 = vrsqrt.pop %v360
        %v377 = vrsqrt.pop %v361
        %v378 = vrsqrt.pop %v362
        %v379 = vmul.f32 %v218, %v363
        %v380 = vmul.f32 %v219, %v363
        %v381 = vmul.f32 %v220, %v364
        %v382 = vmul.f32 %v221, %v364
        %v383 = vmul.f32 %v222, %v365
        %v384 = vmul.f32 %v223, %v365
        %v385 = vmul.f32 %v224, %v366
        %v386 = vmul.f32 %v225, %v366
        %v387 = vmul.f32 %v226, %v367
        %v388 = vmul.f32 %v227, %v367
        %v389 = vmul.f32 %v228, %v368
        %v390 = vmul.f32 %v229, %v368
        %v391 = vmul.f32 %v230, %v369
        %v392 = vmul.f32 %v231, %v369
        %v393 = vmul.f32 %v232, %v370
        %v394 = vmul.f32 %v233, %v370
        %v395 = vmul.f32 %v234, %v371
        %v396 = vmul.f32 %v235, %v371
        %v397 = vmul.f32 %v236, %v372
        %v398 = vmul.f32 %v237, %v372
        %v399 = vmul.f32 %v238, %v373
        %v400 = vmul.f32 %v239, %v373
        %v401 = vmul.f32 %v240, %v374
        %v402 = vmul.f32 %v241, %v374
        %v403 = vmul.f32 %v242, %v375
        %v404 = vmul.f32 %v243, %v375
        %v405 = vmul.f32 %v244, %v376
        %v406 = vmul.f32 %v245, %v376
        %v407 = vmul.f32 %v246, %v377
        %v408 = vmul.f32 %v247, %v377
        %v409 = vmul.f32 %v248, %v378
        %v410 = vmul.f32 %v249, %v378
        %v411 = vld [vmem:[#allocation5] sm:$0xff]
        %v412 = vld [vmem:[#allocation5 + $0x8] sm:$0xff]
        %v413 = vld [vmem:[#allocation5 + $0x10] sm:$0xff]
        %v414 = vld [vmem:[#allocation5 + $0x18] sm:$0xff]
        %v415 = vld [vmem:[#allocation5 + $0x20] sm:$0xff]
        %v416 = vld [vmem:[#allocation5 + $0x28] sm:$0xff]
        %v417 = vld [vmem:[#allocation5 + $0x30] sm:$0xff]
        %v418 = vld [vmem:[#allocation5 + $0x38] sm:$0xff]
        %v419 = vld [vmem:[#allocation5 + $0x40] sm:$0xff]
        %v420 = vld [vmem:[#allocation5 + $0x48] sm:$0xff]
        %v421 = vld [vmem:[#allocation5 + $0x50] sm:$0xff]
        %v422 = vld [vmem:[#allocation5 + $0x58] sm:$0xff]
        %v423 = vld [vmem:[#allocation5 + $0x60] sm:$0xff]
        %v424 = vld [vmem:[#allocation5 + $0x68] sm:$0xff]
        %v425 = vld [vmem:[#allocation5 + $0x70] sm:$0xff]
        %v426 = vld [vmem:[#allocation5 + $0x78] sm:$0xff]
        %v427 = vld [vmem:[#allocation5 + $0x80] sm:$0xff]
        %v428 = vld [vmem:[#allocation5 + $0x88] sm:$0xff]
        %v429 = vld [vmem:[#allocation5 + $0x90] sm:$0xff]
        %v430 = vld [vmem:[#allocation5 + $0x98] sm:$0xff]
        %v431 = vld [vmem:[#allocation5 + $0xa0] sm:$0xff]
        %v432 = vld [vmem:[#allocation5 + $0xa8] sm:$0xff]
        %v433 = vld [vmem:[#allocation5 + $0xb0] sm:$0xff]
        %v434 = vld [vmem:[#allocation5 + $0xb8] sm:$0xff]
        %v435 = vld [vmem:[#allocation5 + $0xc0] sm:$0xff]
        %v436 = vld [vmem:[#allocation5 + $0xc8] sm:$0xff]
        %v437 = vld [vmem:[#allocation5 + $0xd0] sm:$0xff]
        %v438 = vld [vmem:[#allocation5 + $0xd8] sm:$0xff]
        %v439 = vld [vmem:[#allocation5 + $0xe0] sm:$0xff]
        %v440 = vld [vmem:[#allocation5 + $0xe8] sm:$0xff]
        %v441 = vld [vmem:[#allocation5 + $0xf0] sm:$0xff]
        %v442 = vld [vmem:[#allocation5 + $0xf8] sm:$0xff]
        %v443 = vld [vmem:[#allocation5 + $0x100] sm:$0xff]
        %v444 = vld [vmem:[#allocation5 + $0x108] sm:$0xff]
        %v445 = vld [vmem:[#allocation5 + $0x110] sm:$0xff]
        %v446 = vld [vmem:[#allocation5 + $0x118] sm:$0xff]
        %v447 = vld [vmem:[#allocation5 + $0x120] sm:$0xff]
        %v448 = vld [vmem:[#allocation5 + $0x128] sm:$0xff]
        %v449 = vld [vmem:[#allocation5 + $0x130] sm:$0xff]
        %v450 = vld [vmem:[#allocation5 + $0x138] sm:$0xff]
        %v451 = vld [vmem:[#allocation5 + $0x140] sm:$0xff]
        %v452 = vld [vmem:[#allocation5 + $0x148] sm:$0xff]
        %v453 = vld [vmem:[#allocation5 + $0x150] sm:$0xff]
        %v454 = vld [vmem:[#allocation5 + $0x158] sm:$0xff]
        %v455 = vld [vmem:[#allocation5 + $0x160] sm:$0xff]
        %v456 = vld [vmem:[#allocation5 + $0x168] sm:$0xff]
        %v457 = vld [vmem:[#allocation5 + $0x170] sm:$0xff]
        %v458 = vld [vmem:[#allocation5 + $0x178] sm:$0xff]
        %v459 = vld [vmem:[#allocation5 + $0x180] sm:$0xff]
        %v460 = vld [vmem:[#allocation5 + $0x188] sm:$0xff]
        %v461 = vld [vmem:[#allocation5 + $0x190] sm:$0xff]
        %v462 = vld [vmem:[#allocation5 + $0x198] sm:$0xff]
        %v463 = vld [vmem:[#allocation5 + $0x1a0] sm:$0xff]
        %v464 = vld [vmem:[#allocation5 + $0x1a8] sm:$0xff]
        %v465 = vld [vmem:[#allocation5 + $0x1b0] sm:$0xff]
        %v466 = vld [vmem:[#allocation5 + $0x1b8] sm:$0xff]
        %v467 = vld [vmem:[#allocation5 + $0x1c0] sm:$0xff]
        %v468 = vld [vmem:[#allocation5 + $0x1c8] sm:$0xff]
        %v469 = vld [vmem:[#allocation5 + $0x1d0] sm:$0xff]
        %v470 = vld [vmem:[#allocation5 + $0x1d8] sm:$0xff]
        %v471 = vld [vmem:[#allocation5 + $0x1e0] sm:$0xff]
        %v472 = vld [vmem:[#allocation5 + $0x1e8] sm:$0xff]
        %v473 = vld [vmem:[#allocation5 + $0x1f0] sm:$0xff]
        %v474 = vld [vmem:[#allocation5 + $0x1f8] sm:$0xff]
        %v475 = vld [vmem:[#allocation5 + $0x200] sm:$0xff]
        %v476 = vld [vmem:[#allocation5 + $0x208] sm:$0xff]
        %v477 = vld [vmem:[#allocation5 + $0x210] sm:$0xff]
        %v478 = vld [vmem:[#allocation5 + $0x218] sm:$0xff]
        %v479 = vld [vmem:[#allocation5 + $0x220] sm:$0xff]
        %v480 = vld [vmem:[#allocation5 + $0x228] sm:$0xff]
        %v481 = vld [vmem:[#allocation5 + $0x230] sm:$0xff]
        %v482 = vld [vmem:[#allocation5 + $0x238] sm:$0xff]
        %v483 = vld [vmem:[#allocation5 + $0x240] sm:$0xff]
        %v484 = vld [vmem:[#allocation5 + $0x248] sm:$0xff]
        %v485 = vld [vmem:[#allocation5 + $0x250] sm:$0xff]
        %v486 = vld [vmem:[#allocation5 + $0x258] sm:$0xff]
        %v487 = vld [vmem:[#allocation5 + $0x260] sm:$0xff]
        %v488 = vld [vmem:[#allocation5 + $0x268] sm:$0xff]
        %v489 = vld [vmem:[#allocation5 + $0x270] sm:$0xff]
        %v490 = vld [vmem:[#allocation5 + $0x278] sm:$0xff]
        %v491 = vld [vmem:[#allocation5 + $0x280] sm:$0xff]
        %v492 = vld [vmem:[#allocation5 + $0x288] sm:$0xff]
        %v493 = vld [vmem:[#allocation5 + $0x290] sm:$0xff]
        %v494 = vld [vmem:[#allocation5 + $0x298] sm:$0xff]
        %v495 = vld [vmem:[#allocation5 + $0x2a0] sm:$0xff]
        %v496 = vld [vmem:[#allocation5 + $0x2a8] sm:$0xff]
        %v497 = vld [vmem:[#allocation5 + $0x2b0] sm:$0xff]
        %v498 = vld [vmem:[#allocation5 + $0x2b8] sm:$0xff]
        %v499 = vld [vmem:[#allocation5 + $0x2c0] sm:$0xff]
        %v500 = vld [vmem:[#allocation5 + $0x2c8] sm:$0xff]
        %v501 = vld [vmem:[#allocation5 + $0x2d0] sm:$0xff]
        %v502 = vld [vmem:[#allocation5 + $0x2d8] sm:$0xff]
        %v503 = vld [vmem:[#allocation5 + $0x2e0] sm:$0xff]
        %v504 = vld [vmem:[#allocation5 + $0x2e8] sm:$0xff]
        %v505 = vld [vmem:[#allocation5 + $0x2f0] sm:$0xff]
        %v506 = vld [vmem:[#allocation5 + $0x2f8] sm:$0xff]
        %v507 = vld [vmem:[#allocation5 + $0x300] sm:$0xff]
        %v508 = vld [vmem:[#allocation5 + $0x308] sm:$0xff]
        %v509 = vld [vmem:[#allocation5 + $0x310] sm:$0xff]
        %v510 = vld [vmem:[#allocation5 + $0x318] sm:$0xff]
        %v511 = vld [vmem:[#allocation5 + $0x320] sm:$0xff]
        %v512 = vld [vmem:[#allocation5 + $0x328] sm:$0xff]
        %v513 = vld [vmem:[#allocation5 + $0x330] sm:$0xff]
        %v514 = vld [vmem:[#allocation5 + $0x338] sm:$0xff]
        %v515 = vld [vmem:[#allocation5 + $0x340] sm:$0xff]
        %v516 = vld [vmem:[#allocation5 + $0x348] sm:$0xff]
        %v517 = vld [vmem:[#allocation5 + $0x350] sm:$0xff]
        %v518 = vld [vmem:[#allocation5 + $0x358] sm:$0xff]
        %v519 = vld [vmem:[#allocation5 + $0x360] sm:$0xff]
        %v520 = vld [vmem:[#allocation5 + $0x368] sm:$0xff]
        %v521 = vld [vmem:[#allocation5 + $0x370] sm:$0xff]
        %v522 = vld [vmem:[#allocation5 + $0x378] sm:$0xff]
        %v523 = vld [vmem:[#allocation5 + $0x380] sm:$0xff]
        %v524 = vld [vmem:[#allocation5 + $0x388] sm:$0xff]
        %v525 = vld [vmem:[#allocation5 + $0x390] sm:$0xff]
        %v526 = vld [vmem:[#allocation5 + $0x398] sm:$0xff]
        %v527 = vld [vmem:[#allocation5 + $0x3a0] sm:$0xff]
        %v528 = vld [vmem:[#allocation5 + $0x3a8] sm:$0xff]
        %v529 = vld [vmem:[#allocation5 + $0x3b0] sm:$0xff]
        %v530 = vld [vmem:[#allocation5 + $0x3b8] sm:$0xff]
        %v531 = vld [vmem:[#allocation5 + $0x3c0] sm:$0xff]
        %v532 = vld [vmem:[#allocation5 + $0x3c8] sm:$0xff]
        %v533 = vld [vmem:[#allocation5 + $0x3d0] sm:$0xff]
        %v534 = vld [vmem:[#allocation5 + $0x3d8] sm:$0xff]
        %v535 = vld [vmem:[#allocation5 + $0x3e0] sm:$0xff]
        %v536 = vld [vmem:[#allocation5 + $0x3e8] sm:$0xff]
        %v537 = vld [vmem:[#allocation5 + $0x3f0] sm:$0xff]
        %v538 = vld [vmem:[#allocation5 + $0x3f8] sm:$0xff]
        %v539 = vld [vmem:[#allocation5 + $0x400] sm:$0xff]
        %v540 = vld [vmem:[#allocation5 + $0x408] sm:$0xff]
        %v541 = vld [vmem:[#allocation5 + $0x410] sm:$0xff]
        %v542 = vld [vmem:[#allocation5 + $0x418] sm:$0xff]
        %v543 = vld [vmem:[#allocation5 + $0x420] sm:$0xff]
        %v544 = vld [vmem:[#allocation5 + $0x428] sm:$0xff]
        %v545 = vld [vmem:[#allocation5 + $0x430] sm:$0xff]
        %v546 = vld [vmem:[#allocation5 + $0x438] sm:$0xff]
        %v547 = vld [vmem:[#allocation5 + $0x440] sm:$0xff]
        %v548 = vld [vmem:[#allocation5 + $0x448] sm:$0xff]
        %v549 = vld [vmem:[#allocation5 + $0x450] sm:$0xff]
        %v550 = vld [vmem:[#allocation5 + $0x458] sm:$0xff]
        %v551 = vld [vmem:[#allocation5 + $0x460] sm:$0xff]
        %v552 = vld [vmem:[#allocation5 + $0x468] sm:$0xff]
        %v553 = vld [vmem:[#allocation5 + $0x470] sm:$0xff]
        %v554 = vld [vmem:[#allocation5 + $0x478] sm:$0xff]
        %v555 = vld [vmem:[#allocation5 + $0x480] sm:$0xff]
        %v556 = vld [vmem:[#allocation5 + $0x488] sm:$0xff]
        %v557 = vld [vmem:[#allocation5 + $0x490] sm:$0xff]
        %v558 = vld [vmem:[#allocation5 + $0x498] sm:$0xff]
        %v559 = vld [vmem:[#allocation5 + $0x4a0] sm:$0xff]
        %v560 = vld [vmem:[#allocation5 + $0x4a8] sm:$0xff]
        %v561 = vld [vmem:[#allocation5 + $0x4b0] sm:$0xff]
        %v562 = vld [vmem:[#allocation5 + $0x4b8] sm:$0xff]
        %v563 = vld [vmem:[#allocation5 + $0x4c0] sm:$0xff]
        %v564 = vld [vmem:[#allocation5 + $0x4c8] sm:$0xff]
        %v565 = vld [vmem:[#allocation5 + $0x4d0] sm:$0xff]
        %v566 = vld [vmem:[#allocation5 + $0x4d8] sm:$0xff]
        %v567 = vld [vmem:[#allocation5 + $0x4e0] sm:$0xff]
        %v568 = vld [vmem:[#allocation5 + $0x4e8] sm:$0xff]
        %v569 = vld [vmem:[#allocation5 + $0x4f0] sm:$0xff]
        %v570 = vld [vmem:[#allocation5 + $0x4f8] sm:$0xff]
        %v571 = vld [vmem:[#allocation5 + $0x500] sm:$0xff]
        %v572 = vld [vmem:[#allocation5 + $0x508] sm:$0xff]
        %v573 = vld [vmem:[#allocation5 + $0x510] sm:$0xff]
        %v574 = vld [vmem:[#allocation5 + $0x518] sm:$0xff]
        %v575 = vld [vmem:[#allocation5 + $0x520] sm:$0xff]
        %v576 = vld [vmem:[#allocation5 + $0x528] sm:$0xff]
        %v577 = vld [vmem:[#allocation5 + $0x530] sm:$0xff]
        %v578 = vld [vmem:[#allocation5 + $0x538] sm:$0xff]
        %v579 = vld [vmem:[#allocation5 + $0x540] sm:$0xff]
        %v580 = vld [vmem:[#allocation5 + $0x548] sm:$0xff]
        %v581 = vld [vmem:[#allocation5 + $0x550] sm:$0xff]
        %v582 = vld [vmem:[#allocation5 + $0x558] sm:$0xff]
        %v583 = vld [vmem:[#allocation5 + $0x560] sm:$0xff]
        %v584 = vld [vmem:[#allocation5 + $0x568] sm:$0xff]
        %v585 = vld [vmem:[#allocation5 + $0x570] sm:$0xff]
        %v586 = vld [vmem:[#allocation5 + $0x578] sm:$0xff]
        %v587 = vld [vmem:[#allocation5 + $0x580] sm:$0xff]
        %v588 = vld [vmem:[#allocation5 + $0x588] sm:$0xff]
        %v589 = vld [vmem:[#allocation5 + $0x590] sm:$0xff]
        %v590 = vld [vmem:[#allocation5 + $0x598] sm:$0xff]
        %v591 = vld [vmem:[#allocation5 + $0x5a0] sm:$0xff]
        %v592 = vld [vmem:[#allocation5 + $0x5a8] sm:$0xff]
        %v593 = vld [vmem:[#allocation5 + $0x5b0] sm:$0xff]
        %v594 = vld [vmem:[#allocation5 + $0x5b8] sm:$0xff]
        %v595 = vld [vmem:[#allocation5 + $0x5c0] sm:$0xff]
        %v596 = vld [vmem:[#allocation5 + $0x5c8] sm:$0xff]
        %v597 = vld [vmem:[#allocation5 + $0x5d0] sm:$0xff]
        %v598 = vld [vmem:[#allocation5 + $0x5d8] sm:$0xff]
        %v599 = vld [vmem:[#allocation5 + $0x5e0] sm:$0xff]
        %v600 = vld [vmem:[#allocation5 + $0x5e8] sm:$0xff]
        %v601 = vld [vmem:[#allocation5 + $0x5f0] sm:$0xff]
        %v602 = vld [vmem:[#allocation5 + $0x5f8] sm:$0xff]
        %603 = vmatprep.subr.mxu0 %v412
        %604 = vmatpush1.msra.mxu0 %v411
        %605 = vmatprep.subr.mxu0 %v418
        %606 = vmatpush1.msra.mxu0 %v417
        %607 = vmatprep.subr.mxu0 %v424
        %608 = vmatpush1.msra.mxu0 %v423
        %609 = vmatprep.subr.mxu0 %v430
        %610 = vmatpush1.msra.mxu0 %v429
        %611 = vmatprep.subr.mxu0 %v436
        %612 = vmatpush1.msra.mxu0 %v435
        %613 = vmatprep.subr.mxu0 %v442
        %614 = vmatpush1.msra.mxu0 %v441
        %615 = vmatprep.subr.mxu0 %v448
        %616 = vmatpush1.msra.mxu0 %v447
        %617 = vmatprep.subr.mxu0 %v454
        %618 = vmatpush1.msra.mxu0 %v453
        %619 = vmatprep.subr.mxu0 %v460
        %620 = vmatpush1.msra.mxu0 %v459
        %621 = vmatprep.subr.mxu0 %v466
        %622 = vmatpush1.msra.mxu0 %v465
        %623 = vmatprep.subr.mxu0 %v472
        %624 = vmatpush1.msra.mxu0 %v471
        %625 = vmatprep.subr.mxu0 %v478
        %626 = vmatpush1.msra.mxu0 %v477
        %627 = vmatprep.subr.mxu0 %v484
        %628 = vmatpush1.msra.mxu0 %v483
        %629 = vmatprep.subr.mxu0 %v490
        %630 = vmatpush1.msra.mxu0 %v489
        %631 = vmatprep.subr.mxu0 %v496
        %632 = vmatpush1.msra.mxu0 %v495
        %633 = vmatprep.subr.mxu0 %v502
        %634 = vmatpush1.msra.mxu0 %v501
        %635 = vmatprep.subr.mxu0 %v508
        %636 = vmatpush1.msra.mxu0 %v507
        %637 = vmatprep.subr.mxu0 %v514
        %638 = vmatpush1.msra.mxu0 %v513
        %639 = vmatprep.subr.mxu0 %v520
        %640 = vmatpush1.msra.mxu0 %v519
        %641 = vmatprep.subr.mxu0 %v526
        %642 = vmatpush1.msra.mxu0 %v525
        %643 = vmatprep.subr.mxu0 %v532
        %644 = vmatpush1.msra.mxu0 %v531
        %645 = vmatprep.subr.mxu0 %v538
        %646 = vmatpush1.msra.mxu0 %v537
        %647 = vmatprep.subr.mxu0 %v544
        %648 = vmatpush1.msra.mxu0 %v543
        %649 = vmatprep.subr.mxu0 %v550
        %650 = vmatpush1.msra.mxu0 %v549
        %651 = vmatprep.subr.mxu0 %v556
        %652 = vmatpush1.msra.mxu0 %v555
        %653 = vmatprep.subr.mxu0 %v562
        %654 = vmatpush1.msra.mxu0 %v561
        %655 = vmatprep.subr.mxu0 %v568
        %656 = vmatpush1.msra.mxu0 %v567
        %657 = vmatprep.subr.mxu0 %v574
        %658 = vmatpush1.msra.mxu0 %v573
        %659 = vmatprep.subr.mxu0 %v580
        %660 = vmatpush1.msra.mxu0 %v579
        %661 = vmatprep.subr.mxu0 %v586
        %662 = vmatpush1.msra.mxu0 %v585
        %663 = vmatprep.subr.mxu0 %v592
        %664 = vmatpush1.msra.mxu0 %v591
        %665 = vmatprep.subr.mxu0 %v598
        %666 = vmatpush1.msra.mxu0 %v597
        %667 = vmatprep.mubr.f32.mxu0 %v380
        %668 = vmatmul.mubr.f32.gmra.mrb[0].mxu0 %v379
        %v669 = vpop.f32.mrb[0].mxu0
        %v670 = vadd.f32 0.0, %v669
        %v671 = vpop.f32.mrb[0].mxu0
        %v672 = vadd.f32 0.0, %v671
        %673 = vmatprep.mubr.f32.mxu0 %v382
        %674 = vmatmul.mubr.f32.gmra.mrb[0].mxu0 %v381
        %v675 = vpop.f32.mrb[0].mxu0
        %v676 = vadd.f32 0.0, %v675
        %v677 = vpop.f32.mrb[0].mxu0
        %v678 = vadd.f32 0.0, %v677
        %679 = vmatprep.mubr.f32.mxu0 %v384
        %680 = vmatmul.mubr.f32.gmra.mrb[0].mxu0 %v383
        %v681 = vpop.f32.mrb[0].mxu0
        %v682 = vadd.f32 0.0, %v681
        %v683 = vpop.f32.mrb[0].mxu0
        %v684 = vadd.f32 0.0, %v683
        %685 = vmatprep.mubr.f32.mxu0 %v386
        %686 = vmatmul.mubr.f32.gmra.mrb[0].mxu0 %v385
        %v687 = vpop.f32.mrb[0].mxu0
        %v688 = vadd.f32 0.0, %v687
        %v689 = vpop.f32.mrb[0].mxu0
        %v690 = vadd.f32 0.0, %v689
        %691 = vmatprep.mubr.f32.mxu0 %v388
        %692 = vmatmul.mubr.f32.gmra.mrb[0].mxu0 %v387
        %v693 = vpop.f32.mrb[0].mxu0
        %v694 = vadd.f32 0.0, %v693
        %v695 = vpop.f32.mrb[0].mxu0
        %v696 = vadd.f32 0.0, %v695
        %697 = vmatprep.mubr.f32.mxu0 %v390
        %698 = vmatmul.mubr.f32.gmra.mrb[0].mxu0 %v389
        %v699 = vpop.f32.mrb[0].mxu0
        %v700 = vadd.f32 0.0, %v699
        %v701 = vpop.f32.mrb[0].mxu0
        %v702 = vadd.f32 0.0, %v701
        %703 = vmatprep.mubr.f32.mxu0 %v392
        %704 = vmatmul.mubr.f32.gmra.mrb[0].mxu0 %v391
        %v705 = vpop.f32.mrb[0].mxu0
        %v706 = vadd.f32 0.0, %v705
        %v707 = vpop.f32.mrb[0].mxu0
        %v708 = vadd.f32 0.0, %v707
        %709 = vmatprep.mubr.f32.mxu0 %v394
        %710 = vmatmul.mubr.f32.gmra.mrb[0].mxu0 %v393
        %v711 = vpop.f32.mrb[0].mxu0
        %v712 = vadd.f32 0.0, %v711
        %v713 = vpop.f32.mrb[0].mxu0
        %v714 = vadd.f32 0.0, %v713
        %715 = vmatprep.mubr.f32.mxu0 %v396
        %716 = vmatmul.mubr.f32.gmra.mrb[0].mxu0 %v395
        %v717 = vpop.f32.mrb[0].mxu0
        %v718 = vadd.f32 0.0, %v717
        %v719 = vpop.f32.mrb[0].mxu0
        %v720 = vadd.f32 0.0, %v719
        %721 = vmatprep.mubr.f32.mxu0 %v398
        %722 = vmatmul.mubr.f32.gmra.mrb[0].mxu0 %v397
        %v723 = vpop.f32.mrb[0].mxu0
        %v724 = vadd.f32 0.0, %v723
        %v725 = vpop.f32.mrb[0].mxu0
        %v726 = vadd.f32 0.0, %v725
        %727 = vmatprep.mubr.f32.mxu0 %v400
        %728 = vmatmul.mubr.f32.gmra.mrb[0].mxu0 %v399
        %v729 = vpop.f32.mrb[0].mxu0
        %v730 = vadd.f32 0.0, %v729
        %v731 = vpop.f32.mrb[0].mxu0
        %v732 = vadd.f32 0.0, %v731
        %733 = vmatprep.mubr.f32.mxu0 %v402
        %734 = vmatmul.mubr.f32.gmra.mrb[0].mxu0 %v401
        %v735 = vpop.f32.mrb[0].mxu0
        %v736 = vadd.f32 0.0, %v735
        %v737 = vpop.f32.mrb[0].mxu0
        %v738 = vadd.f32 0.0, %v737
        %739 = vmatprep.mubr.f32.mxu0 %v404
        %740 = vmatmul.mubr.f32.gmra.mrb[0].mxu0 %v403
        %v741 = vpop.f32.mrb[0].mxu0
        %v742 = vadd.f32 0.0, %v741
        %v743 = vpop.f32.mrb[0].mxu0
        %v744 = vadd.f32 0.0, %v743
        %745 = vmatprep.mubr.f32.mxu0 %v406
        %746 = vmatmul.mubr.f32.gmra.mrb[0].mxu0 %v405
        %v747 = vpop.f32.mrb[0].mxu0
        %v748 = vadd.f32 0.0, %v747
        %v749 = vpop.f32.mrb[0].mxu0
        %v750 = vadd.f32 0.0, %v749
        %751 = vmatprep.mubr.f32.mxu0 %v408
        %752 = vmatmul.mubr.f32.gmra.mrb[0].mxu0 %v407
        %v753 = vpop.f32.mrb[0].mxu0
        %v754 = vadd.f32 0.0, %v753
        %v755 = vpop.f32.mrb[0].mxu0
        %v756 = vadd.f32 0.0, %v755
        %757 = vmatprep.mubr.f32.mxu0 %v410
        %758 = vmatmul.mubr.f32.gmra.mrb[0].mxu0 %v409
        %v759 = vpop.f32.mrb[0].mxu0
        %v760 = vadd.f32 0.0, %v759
        %v761 = vpop.f32.mrb[0].mxu0
        %v762 = vadd.f32 0.0, %v761
        %763 = vdwg.mxu0
        %764 = vmatprep.subr.mxu0 %v414
        %765 = vmatpush1.msra.mxu0 %v413
        %766 = vmatprep.subr.mxu0 %v420
        %767 = vmatpush1.msra.mxu0 %v419
        %768 = vmatprep.subr.mxu0 %v426
        %769 = vmatpush1.msra.mxu0 %v425
        %770 = vmatprep.subr.mxu0 %v432
        %771 = vmatpush1.msra.mxu0 %v431
        %772 = vmatprep.subr.mxu0 %v438
        %773 = vmatpush1.msra.mxu0 %v437
        %774 = vmatprep.subr.mxu0 %v444
        %775 = vmatpush1.msra.mxu0 %v443
        %776 = vmatprep.subr.mxu0 %v450
        %777 = vmatpush1.msra.mxu0 %v449
        %778 = vmatprep.subr.mxu0 %v456
        %779 = vmatpush1.msra.mxu0 %v455
        %780 = vmatprep.subr.mxu0 %v462
        %781 = vmatpush1.msra.mxu0 %v461
        %782 = vmatprep.subr.mxu0 %v468
        %783 = vmatpush1.msra.mxu0 %v467
        %784 = vmatprep.subr.mxu0 %v474
        %785 = vmatpush1.msra.mxu0 %v473
        %786 = vmatprep.subr.mxu0 %v480
        %787 = vmatpush1.msra.mxu0 %v479
        %788 = vmatprep.subr.mxu0 %v486
        %789 = vmatpush1.msra.mxu0 %v485
        %790 = vmatprep.subr.mxu0 %v492
        %791 = vmatpush1.msra.mxu0 %v491
        %792 = vmatprep.subr.mxu0 %v498
        %793 = vmatpush1.msra.mxu0 %v497
        %794 = vmatprep.subr.mxu0 %v504
        %795 = vmatpush1.msra.mxu0 %v503
        %796 = vmatprep.subr.mxu0 %v510
        %797 = vmatpush1.msra.mxu0 %v509
        %798 = vmatprep.subr.mxu0 %v516
        %799 = vmatpush1.msra.mxu0 %v515
        %800 = vmatprep.subr.mxu0 %v522
        %801 = vmatpush1.msra.mxu0 %v521
        %802 = vmatprep.subr.mxu0 %v528
        %803 = vmatpush1.msra.mxu0 %v527
        %804 = vmatprep.subr.mxu0 %v534
        %805 = vmatpush1.msra.mxu0 %v533
        %806 = vmatprep.subr.mxu0 %v540
        %807 = vmatpush1.msra.mxu0 %v539
        %808 = vmatprep.subr.mxu0 %v546
        %809 = vmatpush1.msra.mxu0 %v545
        %810 = vmatprep.subr.mxu0 %v552
        %811 = vmatpush1.msra.mxu0 %v551
        %812 = vmatprep.subr.mxu0 %v558
        %813 = vmatpush1.msra.mxu0 %v557
        %814 = vmatprep.subr.mxu0 %v564
        %815 = vmatpush1.msra.mxu0 %v563
        %816 = vmatprep.subr.mxu0 %v570
        %817 = vmatpush1.msra.mxu0 %v569
        %818 = vmatprep.subr.mxu0 %v576
        %819 = vmatpush1.msra.mxu0 %v575
        %820 = vmatprep.subr.mxu0 %v582
        %821 = vmatpush1.msra.mxu0 %v581
        %822 = vmatprep.subr.mxu0 %v588
        %823 = vmatpush1.msra.mxu0 %v587
        %824 = vmatprep.subr.mxu0 %v594
        %825 = vmatpush1.msra.mxu0 %v593
        %826 = vmatprep.subr.mxu0 %v600
        %827 = vmatpush1.msra.mxu0 %v599
        %828 = vmatprep.mubr.f32.mxu0 %v380
        %829 = vmatmul.mubr.f32.gmra.mrb[0].mxu0 %v379
        %v830 = vpop.f32.mrb[0].mxu0
        %v831 = vadd.f32 0.0, %v830
        %v832 = vpop.f32.mrb[0].mxu0
        %v833 = vadd.f32 0.0, %v832
        %834 = vmatprep.mubr.f32.mxu0 %v382
        %835 = vmatmul.mubr.f32.gmra.mrb[0].mxu0 %v381
        %v836 = vpop.f32.mrb[0].mxu0
        %v837 = vadd.f32 0.0, %v836
        %v838 = vpop.f32.mrb[0].mxu0
        %v839 = vadd.f32 0.0, %v838
        %840 = vmatprep.mubr.f32.mxu0 %v384
        %841 = vmatmul.mubr.f32.gmra.mrb[0].mxu0 %v383
        %v842 = vpop.f32.mrb[0].mxu0
        %v843 = vadd.f32 0.0, %v842
        %v844 = vpop.f32.mrb[0].mxu0
        %v845 = vadd.f32 0.0, %v844
        %846 = vmatprep.mubr.f32.mxu0 %v386
        %847 = vmatmul.mubr.f32.gmra.mrb[0].mxu0 %v385
        %v848 = vpop.f32.mrb[0].mxu0
        %v849 = vadd.f32 0.0, %v848
        %v850 = vpop.f32.mrb[0].mxu0
        %v851 = vadd.f32 0.0, %v850
        %852 = vmatprep.mubr.f32.mxu0 %v388
        %853 = vmatmul.mubr.f32.gmra.mrb[0].mxu0 %v387
        %v854 = vpop.f32.mrb[0].mxu0
        %v855 = vadd.f32 0.0, %v854
        %v856 = vpop.f32.mrb[0].mxu0
        %v857 = vadd.f32 0.0, %v856
        %858 = vmatprep.mubr.f32.mxu0 %v390
        %859 = vmatmul.mubr.f32.gmra.mrb[0].mxu0 %v389
        %v860 = vpop.f32.mrb[0].mxu0
        %v861 = vadd.f32 0.0, %v860
        %v862 = vpop.f32.mrb[0].mxu0
        %v863 = vadd.f32 0.0, %v862
        %864 = vmatprep.mubr.f32.mxu0 %v392
        %865 = vmatmul.mubr.f32.gmra.mrb[0].mxu0 %v391
        %v866 = vpop.f32.mrb[0].mxu0
        %v867 = vadd.f32 0.0, %v866
        %v868 = vpop.f32.mrb[0].mxu0
        %v869 = vadd.f32 0.0, %v868
        %870 = vmatprep.mubr.f32.mxu0 %v394
        %871 = vmatmul.mubr.f32.gmra.mrb[0].mxu0 %v393
        %v872 = vpop.f32.mrb[0].mxu0
        %v873 = vadd.f32 0.0, %v872
        %v874 = vpop.f32.mrb[0].mxu0
        %v875 = vadd.f32 0.0, %v874
        %876 = vmatprep.mubr.f32.mxu0 %v396
        %877 = vmatmul.mubr.f32.gmra.mrb[0].mxu0 %v395
        %v878 = vpop.f32.mrb[0].mxu0
        %v879 = vadd.f32 0.0, %v878
        %v880 = vpop.f32.mrb[0].mxu0
        %v881 = vadd.f32 0.0, %v880
        %882 = vmatprep.mubr.f32.mxu0 %v398
        %883 = vmatmul.mubr.f32.gmra.mrb[0].mxu0 %v397
        %v884 = vpop.f32.mrb[0].mxu0
        %v885 = vadd.f32 0.0, %v884
        %v886 = vpop.f32.mrb[0].mxu0
        %v887 = vadd.f32 0.0, %v886
        %888 = vmatprep.mubr.f32.mxu0 %v400
        %889 = vmatmul.mubr.f32.gmra.mrb[0].mxu0 %v399
        %v890 = vpop.f32.mrb[0].mxu0
        %v891 = vadd.f32 0.0, %v890
        %v892 = vpop.f32.mrb[0].mxu0
        %v893 = vadd.f32 0.0, %v892
        %894 = vmatprep.mubr.f32.mxu0 %v402
        %895 = vmatmul.mubr.f32.gmra.mrb[0].mxu0 %v401
        %v896 = vpop.f32.mrb[0].mxu0
        %v897 = vadd.f32 0.0, %v896
        %v898 = vpop.f32.mrb[0].mxu0
        %v899 = vadd.f32 0.0, %v898
        %900 = vmatprep.mubr.f32.mxu0 %v404
        %901 = vmatmul.mubr.f32.gmra.mrb[0].mxu0 %v403
        %v902 = vpop.f32.mrb[0].mxu0
        %v903 = vadd.f32 0.0, %v902
        %v904 = vpop.f32.mrb[0].mxu0
        %v905 = vadd.f32 0.0, %v904
        %906 = vmatprep.mubr.f32.mxu0 %v406
        %907 = vmatmul.mubr.f32.gmra.mrb[0].mxu0 %v405
        %v908 = vpop.f32.mrb[0].mxu0
        %v909 = vadd.f32 0.0, %v908
        %v910 = vpop.f32.mrb[0].mxu0
        %v911 = vadd.f32 0.0, %v910
        %912 = vmatprep.mubr.f32.mxu0 %v408
        %913 = vmatmul.mubr.f32.gmra.mrb[0].mxu0 %v407
        %v914 = vpop.f32.mrb[0].mxu0
        %v915 = vadd.f32 0.0, %v914
        %v916 = vpop.f32.mrb[0].mxu0
        %v917 = vadd.f32 0.0, %v916
        %918 = vmatprep.mubr.f32.mxu0 %v410
        %919 = vmatmul.mubr.f32.gmra.mrb[0].mxu0 %v409
        %v920 = vpop.f32.mrb[0].mxu0
        %v921 = vadd.f32 0.0, %v920
        %v922 = vpop.f32.mrb[0].mxu0
        %v923 = vadd.f32 0.0, %v922
        %924 = vdwg.mxu0
        %925 = vmatprep.subr.mxu0 %v416
        %926 = vmatpush1.msra.mxu0 %v415
        %927 = vmatprep.subr.mxu0 %v422
        %928 = vmatpush1.msra.mxu0 %v421
        %929 = vmatprep.subr.mxu0 %v428
        %930 = vmatpush1.msra.mxu0 %v427
        %931 = vmatprep.subr.mxu0 %v434
        %932 = vmatpush1.msra.mxu0 %v433
        %933 = vmatprep.subr.mxu0 %v440
        %934 = vmatpush1.msra.mxu0 %v439
        %935 = vmatprep.subr.mxu0 %v446
        %936 = vmatpush1.msra.mxu0 %v445
        %937 = vmatprep.subr.mxu0 %v452
        %938 = vmatpush1.msra.mxu0 %v451
        %939 = vmatprep.subr.mxu0 %v458
        %940 = vmatpush1.msra.mxu0 %v457
        %941 = vmatprep.subr.mxu0 %v464
        %942 = vmatpush1.msra.mxu0 %v463
        %943 = vmatprep.subr.mxu0 %v470
        %944 = vmatpush1.msra.mxu0 %v469
        %945 = vmatprep.subr.mxu0 %v476
        %946 = vmatpush1.msra.mxu0 %v475
        %947 = vmatprep.subr.mxu0 %v482
        %948 = vmatpush1.msra.mxu0 %v481
        %949 = vmatprep.subr.mxu0 %v488
        %950 = vmatpush1.msra.mxu0 %v487
        %951 = vmatprep.subr.mxu0 %v494
        %952 = vmatpush1.msra.mxu0 %v493
        %953 = vmatprep.subr.mxu0 %v500
        %954 = vmatpush1.msra.mxu0 %v499
        %955 = vmatprep.subr.mxu0 %v506
        %956 = vmatpush1.msra.mxu0 %v505
        %957 = vmatprep.subr.mxu0 %v512
        %958 = vmatpush1.msra.mxu0 %v511
        %959 = vmatprep.subr.mxu0 %v518
        %960 = vmatpush1.msra.mxu0 %v517
        %961 = vmatprep.subr.mxu0 %v524
        %962 = vmatpush1.msra.mxu0 %v523
        %963 = vmatprep.subr.mxu0 %v530
        %964 = vmatpush1.msra.mxu0 %v529
        %965 = vmatprep.subr.mxu0 %v536
        %966 = vmatpush1.msra.mxu0 %v535
        %967 = vmatprep.subr.mxu0 %v542
        %968 = vmatpush1.msra.mxu0 %v541
        %969 = vmatprep.subr.mxu0 %v548
        %970 = vmatpush1.msra.mxu0 %v547
        %971 = vmatprep.subr.mxu0 %v554
        %972 = vmatpush1.msra.mxu0 %v553
        %973 = vmatprep.subr.mxu0 %v560
        %974 = vmatpush1.msra.mxu0 %v559
        %975 = vmatprep.subr.mxu0 %v566
        %976 = vmatpush1.msra.mxu0 %v565
        %977 = vmatprep.subr.mxu0 %v572
        %978 = vmatpush1.msra.mxu0 %v571
        %979 = vmatprep.subr.mxu0 %v578
        %980 = vmatpush1.msra.mxu0 %v577
        %981 = vmatprep.subr.mxu0 %v584
        %982 = vmatpush1.msra.mxu0 %v583
        %983 = vmatprep.subr.mxu0 %v590
        %984 = vmatpush1.msra.mxu0 %v589
        %985 = vmatprep.subr.mxu0 %v596
        %986 = vmatpush1.msra.mxu0 %v595
        %987 = vmatprep.subr.mxu0 %v602
        %988 = vmatpush1.msra.mxu0 %v601
        %989 = vmatprep.mubr.f32.mxu0 %v380
        %990 = vmatmul.mubr.f32.gmra.mrb[0].mxu0 %v379
        %v991 = vpop.f32.mrb[0].mxu0
        %v992 = vadd.f32 0.0, %v991
        %v993 = vpop.f32.mrb[0].mxu0
        %v994 = vadd.f32 0.0, %v993
        %995 = vmatprep.mubr.f32.mxu0 %v382
        %996 = vmatmul.mubr.f32.gmra.mrb[0].mxu0 %v381
        %v997 = vpop.f32.mrb[0].mxu0
        %v998 = vadd.f32 0.0, %v997
        %v999 = vpop.f32.mrb[0].mxu0
        %v1000 = vadd.f32 0.0, %v999
        %1001 = vmatprep.mubr.f32.mxu0 %v384
        %1002 = vmatmul.mubr.f32.gmra.mrb[0].mxu0 %v383
        %v1003 = vpop.f32.mrb[0].mxu0
        %v1004 = vadd.f32 0.0, %v1003
        %v1005 = vpop.f32.mrb[0].mxu0
        %v1006 = vadd.f32 0.0, %v1005
        %1007 = vmatprep.mubr.f32.mxu0 %v386
        %1008 = vmatmul.mubr.f32.gmra.mrb[0].mxu0 %v385
        %v1009 = vpop.f32.mrb[0].mxu0
        %v1010 = vadd.f32 0.0, %v1009
        %v1011 = vpop.f32.mrb[0].mxu0
        %v1012 = vadd.f32 0.0, %v1011
        %1013 = vmatprep.mubr.f32.mxu0 %v388
        %1014 = vmatmul.mubr.f32.gmra.mrb[0].mxu0 %v387
        %v1015 = vpop.f32.mrb[0].mxu0
        %v1016 = vadd.f32 0.0, %v1015
        %v1017 = vpop.f32.mrb[0].mxu0
        %v1018 = vadd.f32 0.0, %v1017
        %1019 = vmatprep.mubr.f32.mxu0 %v390
        %1020 = vmatmul.mubr.f32.gmra.mrb[0].mxu0 %v389
        %v1021 = vpop.f32.mrb[0].mxu0
        %v1022 = vadd.f32 0.0, %v1021
        %v1023 = vpop.f32.mrb[0].mxu0
        %v1024 = vadd.f32 0.0, %v1023
        %1025 = vmatprep.mubr.f32.mxu0 %v392
        %1026 = vmatmul.mubr.f32.gmra.mrb[0].mxu0 %v391
        %v1027 = vpop.f32.mrb[0].mxu0
        %v1028 = vadd.f32 0.0, %v1027
        %v1029 = vpop.f32.mrb[0].mxu0
        %v1030 = vadd.f32 0.0, %v1029
        %1031 = vmatprep.mubr.f32.mxu0 %v394
        %1032 = vmatmul.mubr.f32.gmra.mrb[0].mxu0 %v393
        %v1033 = vpop.f32.mrb[0].mxu0
        %v1034 = vadd.f32 0.0, %v1033
        %v1035 = vpop.f32.mrb[0].mxu0
        %v1036 = vadd.f32 0.0, %v1035
        %1037 = vmatprep.mubr.f32.mxu0 %v396
        %1038 = vmatmul.mubr.f32.gmra.mrb[0].mxu0 %v395
        %v1039 = vpop.f32.mrb[0].mxu0
        %v1040 = vadd.f32 0.0, %v1039
        %v1041 = vpop.f32.mrb[0].mxu0
        %v1042 = vadd.f32 0.0, %v1041
        %1043 = vmatprep.mubr.f32.mxu0 %v398
        %1044 = vmatmul.mubr.f32.gmra.mrb[0].mxu0 %v397
        %v1045 = vpop.f32.mrb[0].mxu0
        %v1046 = vadd.f32 0.0, %v1045
        %v1047 = vpop.f32.mrb[0].mxu0
        %v1048 = vadd.f32 0.0, %v1047
        %1049 = vmatprep.mubr.f32.mxu0 %v400
        %1050 = vmatmul.mubr.f32.gmra.mrb[0].mxu0 %v399
        %v1051 = vpop.f32.mrb[0].mxu0
        %v1052 = vadd.f32 0.0, %v1051
        %v1053 = vpop.f32.mrb[0].mxu0
        %v1054 = vadd.f32 0.0, %v1053
        %1055 = vmatprep.mubr.f32.mxu0 %v402
        %1056 = vmatmul.mubr.f32.gmra.mrb[0].mxu0 %v401
        %v1057 = vpop.f32.mrb[0].mxu0
        %v1058 = vadd.f32 0.0, %v1057
        %v1059 = vpop.f32.mrb[0].mxu0
        %v1060 = vadd.f32 0.0, %v1059
        %1061 = vmatprep.mubr.f32.mxu0 %v404
        %1062 = vmatmul.mubr.f32.gmra.mrb[0].mxu0 %v403
        %v1063 = vpop.f32.mrb[0].mxu0
        %v1064 = vadd.f32 0.0, %v1063
        %v1065 = vpop.f32.mrb[0].mxu0
        %v1066 = vadd.f32 0.0, %v1065
        %1067 = vmatprep.mubr.f32.mxu0 %v406
        %1068 = vmatmul.mubr.f32.gmra.mrb[0].mxu0 %v405
        %v1069 = vpop.f32.mrb[0].mxu0
        %v1070 = vadd.f32 0.0, %v1069
        %v1071 = vpop.f32.mrb[0].mxu0
        %v1072 = vadd.f32 0.0, %v1071
        %1073 = vmatprep.mubr.f32.mxu0 %v408
        %1074 = vmatmul.mubr.f32.gmra.mrb[0].mxu0 %v407
        %v1075 = vpop.f32.mrb[0].mxu0
        %v1076 = vadd.f32 0.0, %v1075
        %v1077 = vpop.f32.mrb[0].mxu0
        %v1078 = vadd.f32 0.0, %v1077
        %1079 = vmatprep.mubr.f32.mxu0 %v410
        %1080 = vmatmul.mubr.f32.gmra.mrb[0].mxu0 %v409
        %v1081 = vpop.f32.mrb[0].mxu0
        %v1082 = vadd.f32 0.0, %v1081
        %v1083 = vpop.f32.mrb[0].mxu0
        %v1084 = vadd.f32 0.0, %v1083
        %1085 = vdwg.mxu0
        %v1086 = vmul.f32 %v670, 0.125
        %v1087 = vmul.f32 %v672, 0.125
        %v1088 = vmul.f32 %v676, 0.125
        %v1089 = vmul.f32 %v678, 0.125
        %v1090 = vmul.f32 %v682, 0.125
        %v1091 = vmul.f32 %v684, 0.125
        %v1092 = vmul.f32 %v688, 0.125
        %v1093 = vmul.f32 %v690, 0.125
        %v1094 = vmul.f32 %v694, 0.125
        %v1095 = vmul.f32 %v696, 0.125
        %v1096 = vmul.f32 %v700, 0.125
        %v1097 = vmul.f32 %v702, 0.125
        %v1098 = vmul.f32 %v706, 0.125
        %v1099 = vmul.f32 %v708, 0.125
        %v1100 = vmul.f32 %v712, 0.125
        %v1101 = vmul.f32 %v714, 0.125
        %v1102 = vmul.f32 %v718, 0.125
        %v1103 = vmul.f32 %v720, 0.125
        %v1104 = vmul.f32 %v724, 0.125
        %v1105 = vmul.f32 %v726, 0.125
        %v1106 = vmul.f32 %v730, 0.125
        %v1107 = vmul.f32 %v732, 0.125
        %v1108 = vmul.f32 %v736, 0.125
        %v1109 = vmul.f32 %v738, 0.125
        %v1110 = vmul.f32 %v742, 0.125
        %v1111 = vmul.f32 %v744, 0.125
        %v1112 = vmul.f32 %v748, 0.125
        %v1113 = vmul.f32 %v750, 0.125
        %v1114 = vmul.f32 %v754, 0.125
        %v1115 = vmul.f32 %v756, 0.125
        %v1116 = vmul.f32 %v760, 0.125
        %v1117 = vmul.f32 %v762, 0.125
        %v1118 = vlaneseq
        %v1119 = vshrl.u32 %v1118, 7
        %v1120 = vadd.s32 %v1119, 8
        %v1121 = vadd.s32 %v1119, 16
        %v1122 = vadd.s32 %v1119, 24
        %v1123 = vadd.s32 %v1119, 32
        %v1124 = vadd.s32 %v1119, 40
        %v1125 = vadd.s32 %v1119, 48
        %v1126 = vadd.s32 %v1119, 56
        %v1127 = vadd.s32 %v1119, 64
        %v1128 = vadd.s32 %v1119, 72
        %v1129 = vadd.s32 %v1119, 80
        %v1130 = vadd.s32 %v1119, 88
        %v1131 = vadd.s32 %v1119, 96
        %v1132 = vadd.s32 %v1119, 104
        %v1133 = vadd.s32 %v1119, 112
        %v1134 = vadd.s32 %v1119, 120
        %v1135 = vlaneseq
        %v1136 = vand.u32 %v1135, 127
        %vm1137 = vcmp.ge.s32.totalorder %v1119, %v1136
        %vm1138 = vcmp.ge.s32.totalorder %v1120, %v1136
        %vm1139 = vcmp.ge.s32.totalorder %v1121, %v1136
        %vm1140 = vcmp.ge.s32.totalorder %v1122, %v1136
        %vm1141 = vcmp.ge.s32.totalorder %v1123, %v1136
        %vm1142 = vcmp.ge.s32.totalorder %v1124, %v1136
        %vm1143 = vcmp.ge.s32.totalorder %v1125, %v1136
        %vm1144 = vcmp.ge.s32.totalorder %v1126, %v1136
        %vm1145 = vcmp.ge.s32.totalorder %v1127, %v1136
        %vm1146 = vcmp.ge.s32.totalorder %v1128, %v1136
        %vm1147 = vcmp.ge.s32.totalorder %v1129, %v1136
        %vm1148 = vcmp.ge.s32.totalorder %v1130, %v1136
        %vm1149 = vcmp.ge.s32.totalorder %v1131, %v1136
        %vm1150 = vcmp.ge.s32.totalorder %v1132, %v1136
        %vm1151 = vcmp.ge.s32.totalorder %v1133, %v1136
        %vm1152 = vcmp.ge.s32.totalorder %v1134, %v1136
        %vm1153 = vcmask 523264
        %v1155 = vsel %vm1153, %v1086, 0
        %v1158 = vsel %vm1153, %v1088, 0
        %v1161 = vsel %vm1153, %v1090, 0
        %v1164 = vsel %vm1153, %v1092, 0
        %v1167 = vsel %vm1153, %v1094, 0
        %v1170 = vsel %vm1153, %v1096, 0
        %v1173 = vsel %vm1153, %v1098, 0
        %v1176 = vsel %vm1153, %v1100, 0
        %v1179 = vsel %vm1153, %v1102, 0
        %v1182 = vsel %vm1153, %v1104, 0
        %v1185 = vsel %vm1153, %v1106, 0
        %v1188 = vsel %vm1153, %v1108, 0
        %v1191 = vsel %vm1153, %v1110, 0
        %v1194 = vsel %vm1153, %v1112, 0
        %v1197 = vsel %vm1153, %v1114, 0
        %v1200 = vsel %vm1153, %v1116, 0
        %v1203 = vsel %vm1153, %v831, 0
        %v1206 = vsel %vm1153, %v837, 0
        %v1209 = vsel %vm1153, %v843, 0
        %v1212 = vsel %vm1153, %v849, 0
        %v1215 = vsel %vm1153, %v855, 0
        %v1218 = vsel %vm1153, %v861, 0
        %v1221 = vsel %vm1153, %v867, 0
        %v1224 = vsel %vm1153, %v873, 0
        %v1227 = vsel %vm1153, %v879, 0
        %v1230 = vsel %vm1153, %v885, 0
        %v1233 = vsel %vm1153, %v891, 0
        %v1236 = vsel %vm1153, %v897, 0
        %v1239 = vsel %vm1153, %v903, 0
        %v1242 = vsel %vm1153, %v909, 0
        %v1245 = vsel %vm1153, %v915, 0
        %v1248 = vsel %vm1153, %v921, 0
        %1250 = vmatprep.subr.mxu0 0.0
        %1251 = vmatpush1.xpose.msra.mxu0 %v1203
        %1252 = vmatprep.subr.mxu0 0.0
        %1253 = vmatpush1.xpose.msra.mxu0 %v1206
        %1254 = vmatprep.subr.mxu0 0.0
        %1255 = vmatpush1.xpose.msra.mxu0 %v1209
        %1256 = vmatprep.subr.mxu0 0.0
        %1257 = vmatpush1.xpose.msra.mxu0 %v1212
        %1258 = vmatprep.subr.mxu0 0.0
        %1259 = vmatpush1.xpose.msra.mxu0 %v1215
        %1260 = vmatprep.subr.mxu0 0.0
        %1261 = vmatpush1.xpose.msra.mxu0 %v1218
        %1262 = vmatprep.subr.mxu0 0.0
        %1263 = vmatpush1.xpose.msra.mxu0 %v1221
        %1264 = vmatprep.subr.mxu0 0.0
        %1265 = vmatpush1.xpose.msra.mxu0 %v1224
        %1266 = vmatprep.subr.mxu0 0.0
        %1267 = vmatpush1.xpose.msra.mxu0 %v1227
        %1268 = vmatprep.subr.mxu0 0.0
        %1269 = vmatpush1.xpose.msra.mxu0 %v1230
        %1270 = vmatprep.subr.mxu0 0.0
        %1271 = vmatpush1.xpose.msra.mxu0 %v1233
        %1272 = vmatprep.subr.mxu0 0.0
        %1273 = vmatpush1.xpose.msra.mxu0 %v1236
        %1274 = vmatprep.subr.mxu0 0.0
        %1275 = vmatpush1.xpose.msra.mxu0 %v1239
        %1276 = vmatprep.subr.mxu0 0.0
        %1277 = vmatpush1.xpose.msra.mxu0 %v1242
        %1278 = vmatprep.subr.mxu0 0.0
        %1279 = vmatpush1.xpose.msra.mxu0 %v1245
        %1280 = vmatprep.subr.mxu0 0.0
        %1281 = vmatpush1.xpose.msra.mxu0 %v1248
        %1282 = vmatprep.subr.mxu0 0.0
        %1283 = vmatpush1.xpose.msra.mxu0 0.0
        %1284 = vmatprep.subr.mxu0 0.0
        %1285 = vmatpush1.xpose.msra.mxu0 0.0
        %1286 = vmatprep.subr.mxu0 0.0
        %1287 = vmatpush1.xpose.msra.mxu0 0.0
        %1288 = vmatprep.subr.mxu0 0.0
        %1289 = vmatpush1.xpose.msra.mxu0 0.0
        %1290 = vmatprep.subr.mxu0 0.0
        %1291 = vmatpush1.xpose.msra.mxu0 0.0
        %1292 = vmatprep.subr.mxu0 0.0
        %1293 = vmatpush1.xpose.msra.mxu0 0.0
        %1294 = vmatprep.subr.mxu0 0.0
        %1295 = vmatpush1.xpose.msra.mxu0 0.0
        %1296 = vmatprep.subr.mxu0 0.0
        %1297 = vmatpush1.xpose.msra.mxu0 0.0
        %1298 = vmatprep.subr.mxu0 0.0
        %1299 = vmatpush1.xpose.msra.mxu0 0.0
        %1300 = vmatprep.subr.mxu0 0.0
        %1301 = vmatpush1.xpose.msra.mxu0 0.0
        %1302 = vmatprep.subr.mxu0 0.0
        %1303 = vmatpush1.xpose.msra.mxu0 0.0
        %1304 = vmatprep.subr.mxu0 0.0
        %1305 = vmatpush1.xpose.msra.mxu0 0.0
        %1306 = vmatprep.subr.mxu0 0.0
        %1307 = vmatpush1.xpose.msra.mxu0 0.0
        %1308 = vmatprep.subr.mxu0 0.0
        %1309 = vmatpush1.xpose.msra.mxu0 0.0
        %1310 = vmatprep.subr.mxu0 0.0
        %1311 = vmatpush1.xpose.msra.mxu0 0.0
        %1312 = vmatprep.subr.mxu0 0.0
        %1313 = vmatpush1.xpose.msra.mxu0 0.0
        %1314 = vmatprep.mubr.f32.mxu0 0.0
        %1315 = vmatmul.mubr.f32.gmra.mrb[0].mxu0 %v1155
        %v1316 = vpop.f32.mrb[0].mxu0
        %v1317 = vadd.f32 0.0, %v1316
        %v1318 = vpop.f32.mrb[0].mxu0
        %1319 = vmatprep.mubr.f32.mxu0 0.0
        %1320 = vmatmul.mubr.f32.gmra.mrb[0].mxu0 %v1158
        %v1321 = vpop.f32.mrb[0].mxu0
        %v1322 = vadd.f32 0.0, %v1321
        %v1323 = vpop.f32.mrb[0].mxu0
        %1324 = vmatprep.mubr.f32.mxu0 0.0
        %1325 = vmatmul.mubr.f32.gmra.mrb[0].mxu0 %v1161
        %v1326 = vpop.f32.mrb[0].mxu0
        %v1327 = vadd.f32 0.0, %v1326
        %v1328 = vpop.f32.mrb[0].mxu0
        %1329 = vmatprep.mubr.f32.mxu0 0.0
        %1330 = vmatmul.mubr.f32.gmra.mrb[0].mxu0 %v1164
        %v1331 = vpop.f32.mrb[0].mxu0
        %v1332 = vadd.f32 0.0, %v1331
        %v1333 = vpop.f32.mrb[0].mxu0
        %1334 = vmatprep.mubr.f32.mxu0 0.0
        %1335 = vmatmul.mubr.f32.gmra.mrb[0].mxu0 %v1167
        %v1336 = vpop.f32.mrb[0].mxu0
        %v1337 = vadd.f32 0.0, %v1336
        %v1338 = vpop.f32.mrb[0].mxu0
        %1339 = vmatprep.mubr.f32.mxu0 0.0
        %1340 = vmatmul.mubr.f32.gmra.mrb[0].mxu0 %v1170
        %v1341 = vpop.f32.mrb[0].mxu0
        %v1342 = vadd.f32 0.0, %v1341
        %v1343 = vpop.f32.mrb[0].mxu0
        %1344 = vmatprep.mubr.f32.mxu0 0.0
        %1345 = vmatmul.mubr.f32.gmra.mrb[0].mxu0 %v1173
        %v1346 = vpop.f32.mrb[0].mxu0
        %v1347 = vadd.f32 0.0, %v1346
        %v1348 = vpop.f32.mrb[0].mxu0
        %1349 = vmatprep.mubr.f32.mxu0 0.0
        %1350 = vmatmul.mubr.f32.gmra.mrb[0].mxu0 %v1176
        %v1351 = vpop.f32.mrb[0].mxu0
        %v1352 = vadd.f32 0.0, %v1351
        %v1353 = vpop.f32.mrb[0].mxu0
        %1354 = vmatprep.mubr.f32.mxu0 0.0
        %1355 = vmatmul.mubr.f32.gmra.mrb[0].mxu0 %v1179
        %v1356 = vpop.f32.mrb[0].mxu0
        %v1357 = vadd.f32 0.0, %v1356
        %v1358 = vpop.f32.mrb[0].mxu0
        %1359 = vmatprep.mubr.f32.mxu0 0.0
        %1360 = vmatmul.mubr.f32.gmra.mrb[0].mxu0 %v1182
        %v1361 = vpop.f32.mrb[0].mxu0
        %v1362 = vadd.f32 0.0, %v1361
        %v1363 = vpop.f32.mrb[0].mxu0
        %1364 = vmatprep.mubr.f32.mxu0 0.0
        %1365 = vmatmul.mubr.f32.gmra.mrb[0].mxu0 %v1185
        %v1366 = vpop.f32.mrb[0].mxu0
        %v1367 = vadd.f32 0.0, %v1366
        %v1368 = vpop.f32.mrb[0].mxu0
        %1369 = vmatprep.mubr.f32.mxu0 0.0
        %1370 = vmatmul.mubr.f32.gmra.mrb[0].mxu0 %v1188
        %v1371 = vpop.f32.mrb[0].mxu0
        %v1372 = vadd.f32 0.0, %v1371
        %v1373 = vpop.f32.mrb[0].mxu0
        %1374 = vmatprep.mubr.f32.mxu0 0.0
        %1375 = vmatmul.mubr.f32.gmra.mrb[0].mxu0 %v1191
        %v1376 = vpop.f32.mrb[0].mxu0
        %v1377 = vadd.f32 0.0, %v1376
        %v1378 = vpop.f32.mrb[0].mxu0
        %1379 = vmatprep.mubr.f32.mxu0 0.0
        %1380 = vmatmul.mubr.f32.gmra.mrb[0].mxu0 %v1194
        %v1381 = vpop.f32.mrb[0].mxu0
        %v1382 = vadd.f32 0.0, %v1381
        %v1383 = vpop.f32.mrb[0].mxu0
        %1384 = vmatprep.mubr.f32.mxu0 0.0
        %1385 = vmatmul.mubr.f32.gmra.mrb[0].mxu0 %v1197
        %v1386 = vpop.f32.mrb[0].mxu0
        %v1387 = vadd.f32 0.0, %v1386
        %v1388 = vpop.f32.mrb[0].mxu0
        %1389 = vmatprep.mubr.f32.mxu0 0.0
        %1390 = vmatmul.mubr.f32.gmra.mrb[0].mxu0 %v1200
        %v1391 = vpop.f32.mrb[0].mxu0
        %v1392 = vadd.f32 0.0, %v1391
        %v1393 = vpop.f32.mrb[0].mxu0
        %1394 = vdwg.mxu0
        %v1395 = vsel %vm1137, %v1317, -inf
        %v1396 = vsel %vm1138, %v1322, -inf
        %v1397 = vsel %vm1139, %v1327, -inf
        %v1398 = vsel %vm1140, %v1332, -inf
        %v1399 = vsel %vm1141, %v1337, -inf
        %v1400 = vsel %vm1142, %v1342, -inf
        %v1401 = vsel %vm1143, %v1347, -inf
        %v1402 = vsel %vm1144, %v1352, -inf
        %v1403 = vsel %vm1145, %v1357, -inf
        %v1404 = vsel %vm1146, %v1362, -inf
        %v1405 = vsel %vm1147, %v1367, -inf
        %v1406 = vsel %vm1148, %v1372, -inf
        %v1407 = vsel %vm1149, %v1377, -inf
        %v1408 = vsel %vm1150, %v1382, -inf
        %v1409 = vsel %vm1151, %v1387, -inf
        %v1410 = vsel %vm1152, %v1392, -inf
        %1411 = vmax.xlane.f32.xlu0 %v1395
        %v1412 = vpop.xlane.xlu0 %1411
        %1413 = vmax.xlane.f32.xlu0 %v1396
        %v1414 = vpop.xlane.xlu0 %1413
        %1415 = vmax.xlane.f32.xlu0 %v1397
        %v1416 = vpop.xlane.xlu0 %1415
        %1417 = vmax.xlane.f32.xlu0 %v1398
        %v1418 = vpop.xlane.xlu0 %1417
        %1419 = vmax.xlane.f32.xlu0 %v1399
        %v1420 = vpop.xlane.xlu0 %1419
        %1421 = vmax.xlane.f32.xlu0 %v1400
        %v1422 = vpop.xlane.xlu0 %1421
        %1423 = vmax.xlane.f32.xlu0 %v1401
        %v1424 = vpop.xlane.xlu0 %1423
        %1425 = vmax.xlane.f32.xlu0 %v1402
        %v1426 = vpop.xlane.xlu0 %1425
        %1427 = vmax.xlane.f32.xlu0 %v1403
        %v1428 = vpop.xlane.xlu0 %1427
        %1429 = vmax.xlane.f32.xlu0 %v1404
        %v1430 = vpop.xlane.xlu0 %1429
        %1431 = vmax.xlane.f32.xlu0 %v1405
        %v1432 = vpop.xlane.xlu0 %1431
        %1433 = vmax.xlane.f32.xlu0 %v1406
        %v1434 = vpop.xlane.xlu0 %1433
        %1435 = vmax.xlane.f32.xlu0 %v1407
        %v1436 = vpop.xlane.xlu0 %1435
        %1437 = vmax.xlane.f32.xlu0 %v1408
        %v1438 = vpop.xlane.xlu0 %1437
        %1439 = vmax.xlane.f32.xlu0 %v1409
        %v1440 = vpop.xlane.xlu0 %1439
        %1441 = vmax.xlane.f32.xlu0 %v1410
        %v1442 = vpop.xlane.xlu0 %1441
        %v1443 = vsub.f32 %v1395, %v1412
        %v1444 = vsub.f32 %v1396, %v1414
        %v1445 = vsub.f32 %v1397, %v1416
        %v1446 = vsub.f32 %v1398, %v1418
        %v1447 = vsub.f32 %v1399, %v1420
        %v1448 = vsub.f32 %v1400, %v1422
        %v1449 = vsub.f32 %v1401, %v1424
        %v1450 = vsub.f32 %v1402, %v1426
        %v1451 = vsub.f32 %v1403, %v1428
        %v1452 = vsub.f32 %v1404, %v1430
        %v1453 = vsub.f32 %v1405, %v1432
        %v1454 = vsub.f32 %v1406, %v1434
        %v1455 = vsub.f32 %v1407, %v1436
        %v1456 = vsub.f32 %v1408, %v1438
        %v1457 = vsub.f32 %v1409, %v1440
        %v1458 = vsub.f32 %v1410, %v1442
        %v1459 = vmul.f32 %v1443, 1.442695
        %v1460 = vpow.pop %v1459
        %v1461 = vmul.f32 %v1444, 1.442695
        %v1462 = vpow.pop %v1461
        %v1463 = vmul.f32 %v1445, 1.442695
        %v1464 = vpow.pop %v1463
        %v1465 = vmul.f32 %v1446, 1.442695
        %v1466 = vpow.pop %v1465
        %v1467 = vmul.f32 %v1447, 1.442695
        %v1468 = vpow.pop %v1467
        %v1469 = vmul.f32 %v1448, 1.442695
        %v1470 = vpow.pop %v1469
        %v1471 = vmul.f32 %v1449, 1.442695
        %v1472 = vpow.pop %v1471
        %v1473 = vmul.f32 %v1450, 1.442695
        %v1474 = vpow.pop %v1473
        %v1475 = vmul.f32 %v1451, 1.442695
        %v1476 = vpow.pop %v1475
        %v1477 = vmul.f32 %v1452, 1.442695
        %v1478 = vpow.pop %v1477
        %v1479 = vmul.f32 %v1453, 1.442695
        %v1480 = vpow.pop %v1479
        %v1481 = vmul.f32 %v1454, 1.442695
        %v1482 = vpow.pop %v1481
        %v1483 = vmul.f32 %v1455, 1.442695
        %v1484 = vpow.pop %v1483
        %v1485 = vmul.f32 %v1456, 1.442695
        %v1486 = vpow.pop %v1485
        %v1487 = vmul.f32 %v1457, 1.442695
        %v1488 = vpow.pop %v1487
        %v1489 = vmul.f32 %v1458, 1.442695
        %v1490 = vpow.pop %v1489
        %1491 = vadd.xlane.f32.xlu0 %v1460
        %v1492 = vpop.xlane.xlu0 %1491
        %1493 = vadd.xlane.f32.xlu0 %v1462
        %v1494 = vpop.xlane.xlu0 %1493
        %1495 = vadd.xlane.f32.xlu0 %v1464
        %v1496 = vpop.xlane.xlu0 %1495
        %1497 = vadd.xlane.f32.xlu0 %v1466
        %v1498 = vpop.xlane.xlu0 %1497
        %1499 = vadd.xlane.f32.xlu0 %v1468
        %v1500 = vpop.xlane.xlu0 %1499
        %1501 = vadd.xlane.f32.xlu0 %v1470
        %v1502 = vpop.xlane.xlu0 %1501
        %1503 = vadd.xlane.f32.xlu0 %v1472
        %v1504 = vpop.xlane.xlu0 %1503
        %1505 = vadd.xlane.f32.xlu0 %v1474
        %v1506 = vpop.xlane.xlu0 %1505
        %1507 = vadd.xlane.f32.xlu0 %v1476
        %v1508 = vpop.xlane.xlu0 %1507
        %1509 = vadd.xlane.f32.xlu0 %v1478
        %v1510 = vpop.xlane.xlu0 %1509
        %1511 = vadd.xlane.f32.xlu0 %v1480
        %v1512 = vpop.xlane.xlu0 %1511
        %1513 = vadd.xlane.f32.xlu0 %v1482
        %v1514 = vpop.xlane.xlu0 %1513
        %1515 = vadd.xlane.f32.xlu0 %v1484
        %v1516 = vpop.xlane.xlu0 %1515
        %1517 = vadd.xlane.f32.xlu0 %v1486
        %v1518 = vpop.xlane.xlu0 %1517
        %1519 = vadd.xlane.f32.xlu0 %v1488
        %v1520 = vpop.xlane.xlu0 %1519
        %1521 = vadd.xlane.f32.xlu0 %v1490
        %v1522 = vpop.xlane.xlu0 %1521
        %v1523 = vrcp.pop %v1492
        %v1524 = vrcp.pop %v1494
        %v1525 = vrcp.pop %v1496
        %v1526 = vrcp.pop %v1498
        %v1527 = vrcp.pop %v1500
        %v1528 = vrcp.pop %v1502
        %v1529 = vrcp.pop %v1504
        %v1530 = vrcp.pop %v1506
        %v1531 = vrcp.pop %v1508
        %v1532 = vrcp.pop %v1510
        %v1533 = vrcp.pop %v1512
        %v1534 = vrcp.pop %v1514
        %v1535 = vrcp.pop %v1516
        %v1536 = vrcp.pop %v1518
        %v1537 = vrcp.pop %v1520
        %v1538 = vrcp.pop %v1522
        %v1539 = vmul.f32 %v1460, %v1523
        %v1540 = vmul.f32 %v1462, %v1524
        %v1541 = vmul.f32 %v1464, %v1525
        %v1542 = vmul.f32 %v1466, %v1526
        %v1543 = vmul.f32 %v1468, %v1527
        %v1544 = vmul.f32 %v1470, %v1528
        %v1545 = vmul.f32 %v1472, %v1529
        %v1546 = vmul.f32 %v1474, %v1530
        %v1547 = vmul.f32 %v1476, %v1531
        %v1548 = vmul.f32 %v1478, %v1532
        %v1549 = vmul.f32 %v1480, %v1533
        %v1550 = vmul.f32 %v1482, %v1534
        %v1551 = vmul.f32 %v1484, %v1535
        %v1552 = vmul.f32 %v1486, %v1536
        %v1553 = vmul.f32 %v1488, %v1537
        %v1554 = vmul.f32 %v1490, %v1538
        %1555 = vmatprep.subr.mxu0 0.0
        %1556 = vmatpush1.msra.mxu0 %v992
        %1557 = vmatprep.subr.mxu0 0.0
        %1558 = vmatpush1.msra.mxu0 %v998
        %1559 = vmatprep.subr.mxu0 0.0
        %1560 = vmatpush1.msra.mxu0 %v1004
        %1561 = vmatprep.subr.mxu0 0.0
        %1562 = vmatpush1.msra.mxu0 %v1010
        %1563 = vmatprep.subr.mxu0 0.0
        %1564 = vmatpush1.msra.mxu0 %v1016
        %1565 = vmatprep.subr.mxu0 0.0
        %1566 = vmatpush1.msra.mxu0 %v1022
        %1567 = vmatprep.subr.mxu0 0.0
        %1568 = vmatpush1.msra.mxu0 %v1028
        %1569 = vmatprep.subr.mxu0 0.0
        %1570 = vmatpush1.msra.mxu0 %v1034
        %1571 = vmatprep.subr.mxu0 0.0
        %1572 = vmatpush1.msra.mxu0 %v1040
        %1573 = vmatprep.subr.mxu0 0.0
        %1574 = vmatpush1.msra.mxu0 %v1046
        %1575 = vmatprep.subr.mxu0 0.0
        %1576 = vmatpush1.msra.mxu0 %v1052
        %1577 = vmatprep.subr.mxu0 0.0
        %1578 = vmatpush1.msra.mxu0 %v1058
        %1579 = vmatprep.subr.mxu0 0.0
        %1580 = vmatpush1.msra.mxu0 %v1064
        %1581 = vmatprep.subr.mxu0 0.0
        %1582 = vmatpush1.msra.mxu0 %v1070
        %1583 = vmatprep.subr.mxu0 0.0
        %1584 = vmatpush1.msra.mxu0 %v1076
        %1585 = vmatprep.subr.mxu0 0.0
        %1586 = vmatpush1.msra.mxu0 %v1082
        %1587 = vmatprep.subr.mxu0 0.0
        %1588 = vmatpush1.msra.mxu0 0.0
        %1589 = vmatprep.subr.mxu0 0.0
        %1590 = vmatpush1.msra.mxu0 0.0
        %1591 = vmatprep.subr.mxu0 0.0
        %1592 = vmatpush1.msra.mxu0 0.0
        %1593 = vmatprep.subr.mxu0 0.0
        %1594 = vmatpush1.msra.mxu0 0.0
        %1595 = vmatprep.subr.mxu0 0.0
        %1596 = vmatpush1.msra.mxu0 0.0
        %1597 = vmatprep.subr.mxu0 0.0
        %1598 = vmatpush1.msra.mxu0 0.0
        %1599 = vmatprep.subr.mxu0 0.0
        %1600 = vmatpush1.msra.mxu0 0.0
        %1601 = vmatprep.subr.mxu0 0.0
        %1602 = vmatpush1.msra.mxu0 0.0
        %1603 = vmatprep.subr.mxu0 0.0
        %1604 = vmatpush1.msra.mxu0 0.0
        %1605 = vmatprep.subr.mxu0 0.0
        %1606 = vmatpush1.msra.mxu0 0.0
        %1607 = vmatprep.subr.mxu0 0.0
        %1608 = vmatpush1.msra.mxu0 0.0
        %1609 = vmatprep.subr.mxu0 0.0
        %1610 = vmatpush1.msra.mxu0 0.0
        %1611 = vmatprep.subr.mxu0 0.0
        %1612 = vmatpush1.msra.mxu0 0.0
        %1613 = vmatprep.subr.mxu0 0.0
        %1614 = vmatpush1.msra.mxu0 0.0
        %1615 = vmatprep.subr.mxu0 0.0
        %1616 = vmatpush1.msra.mxu0 0.0
        %1617 = vmatprep.subr.mxu0 0.0
        %1618 = vmatpush1.msra.mxu0 0.0
        %1619 = vmatprep.mubr.f32.mxu0 0.0
        %1620 = vmatmul.mubr.f32.gmra.mrb[0].mxu0 %v1539
        %v1621 = vpop.f32.mrb[0].mxu0
        %v1622 = vadd.f32 0.0, %v1621
        %v1623 = vpop.f32.mrb[0].mxu0
        %1624 = vmatprep.mubr.f32.mxu0 0.0
        %1625 = vmatmul.mubr.f32.gmra.mrb[0].mxu0 %v1540
        %v1626 = vpop.f32.mrb[0].mxu0
        %v1627 = vadd.f32 0.0, %v1626
        %v1628 = vpop.f32.mrb[0].mxu0
        %1629 = vmatprep.mubr.f32.mxu0 0.0
        %1630 = vmatmul.mubr.f32.gmra.mrb[0].mxu0 %v1541
        %v1631 = vpop.f32.mrb[0].mxu0
        %v1632 = vadd.f32 0.0, %v1631
        %v1633 = vpop.f32.mrb[0].mxu0
        %1634 = vmatprep.mubr.f32.mxu0 0.0
        %1635 = vmatmul.mubr.f32.gmra.mrb[0].mxu0 %v1542
        %v1636 = vpop.f32.mrb[0].mxu0
        %v1637 = vadd.f32 0.0, %v1636
        %v1638 = vpop.f32.mrb[0].mxu0
        %1639 = vmatprep.mubr.f32.mxu0 0.0
        %1640 = vmatmul.mubr.f32.gmra.mrb[0].mxu0 %v1543
        %v1641 = vpop.f32.mrb[0].mxu0
        %v1642 = vadd.f32 0.0, %v1641
        %v1643 = vpop.f32.mrb[0].mxu0
        %1644 = vmatprep.mubr.f32.mxu0 0.0
        %1645 = vmatmul.mubr.f32.gmra.mrb[0].mxu0 %v1544
        %v1646 = vpop.f32.mrb[0].mxu0
        %v1647 = vadd.f32 0.0, %v1646
        %v1648 = vpop.f32.mrb[0].mxu0
        %1649 = vmatprep.mubr.f32.mxu0 0.0
        %1650 = vmatmul.mubr.f32.gmra.mrb[0].mxu0 %v1545
        %v1651 = vpop.f32.mrb[0].mxu0
        %v1652 = vadd.f32 0.0, %v1651
        %v1653 = vpop.f32.mrb[0].mxu0
        %1654 = vmatprep.mubr.f32.mxu0 0.0
        %1655 = vmatmul.mubr.f32.gmra.mrb[0].mxu0 %v1546
        %v1656 = vpop.f32.mrb[0].mxu0
        %v1657 = vadd.f32 0.0, %v1656
        %v1658 = vpop.f32.mrb[0].mxu0
        %1659 = vmatprep.mubr.f32.mxu0 0.0
        %1660 = vmatmul.mubr.f32.gmra.mrb[0].mxu0 %v1547
        %v1661 = vpop.f32.mrb[0].mxu0
        %v1662 = vadd.f32 0.0, %v1661
        %v1663 = vpop.f32.mrb[0].mxu0
        %1664 = vmatprep.mubr.f32.mxu0 0.0
        %1665 = vmatmul.mubr.f32.gmra.mrb[0].mxu0 %v1548
        %v1666 = vpop.f32.mrb[0].mxu0
        %v1667 = vadd.f32 0.0, %v1666
        %v1668 = vpop.f32.mrb[0].mxu0
        %1669 = vmatprep.mubr.f32.mxu0 0.0
        %1670 = vmatmul.mubr.f32.gmra.mrb[0].mxu0 %v1549
        %v1671 = vpop.f32.mrb[0].mxu0
        %v1672 = vadd.f32 0.0, %v1671
        %v1673 = vpop.f32.mrb[0].mxu0
        %1674 = vmatprep.mubr.f32.mxu0 0.0
        %1675 = vmatmul.mubr.f32.gmra.mrb[0].mxu0 %v1550
        %v1676 = vpop.f32.mrb[0].mxu0
        %v1677 = vadd.f32 0.0, %v1676
        %v1678 = vpop.f32.mrb[0].mxu0
        %1679 = vmatprep.mubr.f32.mxu0 0.0
        %1680 = vmatmul.mubr.f32.gmra.mrb[0].mxu0 %v1551
        %v1681 = vpop.f32.mrb[0].mxu0
        %v1682 = vadd.f32 0.0, %v1681
        %v1683 = vpop.f32.mrb[0].mxu0
        %1684 = vmatprep.mubr.f32.mxu0 0.0
        %1685 = vmatmul.mubr.f32.gmra.mrb[0].mxu0 %v1552
        %v1686 = vpop.f32.mrb[0].mxu0
        %v1687 = vadd.f32 0.0, %v1686
        %v1688 = vpop.f32.mrb[0].mxu0
        %1689 = vmatprep.mubr.f32.mxu0 0.0
        %1690 = vmatmul.mubr.f32.gmra.mrb[0].mxu0 %v1553
        %v1691 = vpop.f32.mrb[0].mxu0
        %v1692 = vadd.f32 0.0, %v1691
        %v1693 = vpop.f32.mrb[0].mxu0
        %1694 = vmatprep.mubr.f32.mxu0 0.0
        %1695 = vmatmul.mubr.f32.gmra.mrb[0].mxu0 %v1554
        %v1696 = vpop.f32.mrb[0].mxu0
        %v1697 = vadd.f32 0.0, %v1696
        %v1698 = vpop.f32.mrb[0].mxu0
        %1699 = vdwg.mxu0
        %1700 = vrot.lane.b32.xlu0 %v1086, 64
        %v1701 = vpop.permute.xlu0 %1700
        %1702 = vrot.lane.b32.xlu0 %v1088, 64
        %v1703 = vpop.permute.xlu0 %1702
        %1704 = vrot.lane.b32.xlu0 %v1090, 64
        %v1705 = vpop.permute.xlu0 %1704
        %1706 = vrot.lane.b32.xlu0 %v1092, 64
        %v1707 = vpop.permute.xlu0 %1706
        %1708 = vrot.lane.b32.xlu0 %v1094, 64
        %v1709 = vpop.permute.xlu0 %1708
        %1710 = vrot.lane.b32.xlu0 %v1096, 64
        %v1711 = vpop.permute.xlu0 %1710
        %1712 = vrot.lane.b32.xlu0 %v1098, 64
        %v1713 = vpop.permute.xlu0 %1712
        %1714 = vrot.lane.b32.xlu0 %v1100, 64
        %v1715 = vpop.permute.xlu0 %1714
        %1716 = vrot.lane.b32.xlu0 %v1102, 64
        %v1717 = vpop.permute.xlu0 %1716
        %1718 = vrot.lane.b32.xlu0 %v1104, 64
        %v1719 = vpop.permute.xlu0 %1718
        %1720 = vrot.lane.b32.xlu0 %v1106, 64
        %v1721 = vpop.permute.xlu0 %1720
        %1722 = vrot.lane.b32.xlu0 %v1108, 64
        %v1723 = vpop.permute.xlu0 %1722
        %1724 = vrot.lane.b32.xlu0 %v1110, 64
        %v1725 = vpop.permute.xlu0 %1724
        %1726 = vrot.lane.b32.xlu0 %v1112, 64
        %v1727 = vpop.permute.xlu0 %1726
        %1728 = vrot.lane.b32.xlu0 %v1114, 64
        %v1729 = vpop.permute.xlu0 %1728
        %1730 = vrot.lane.b32.xlu0 %v1116, 64
        %v1731 = vpop.permute.xlu0 %1730
        %1732 = vrot.lane.b32.xlu0 %v831, 64
        %v1733 = vpop.permute.xlu0 %1732
        %1734 = vrot.lane.b32.xlu0 %v837, 64
        %v1735 = vpop.permute.xlu0 %1734
        %1736 = vrot.lane.b32.xlu0 %v843, 64
        %v1737 = vpop.permute.xlu0 %1736
        %1738 = vrot.lane.b32.xlu0 %v849, 64
        %v1739 = vpop.permute.xlu0 %1738
        %1740 = vrot.lane.b32.xlu0 %v855, 64
        %v1741 = vpop.permute.xlu0 %1740
        %1742 = vrot.lane.b32.xlu0 %v861, 64
        %v1743 = vpop.permute.xlu0 %1742
        %1744 = vrot.lane.b32.xlu0 %v867, 64
        %v1745 = vpop.permute.xlu0 %1744
        %1746 = vrot.lane.b32.xlu0 %v873, 64
        %v1747 = vpop.permute.xlu0 %1746
        %1748 = vrot.lane.b32.xlu0 %v879, 64
        %v1749 = vpop.permute.xlu0 %1748
        %1750 = vrot.lane.b32.xlu0 %v885, 64
        %v1751 = vpop.permute.xlu0 %1750
        %1752 = vrot.lane.b32.xlu0 %v891, 64
        %v1753 = vpop.permute.xlu0 %1752
        %1754 = vrot.lane.b32.xlu0 %v897, 64
        %v1755 = vpop.permute.xlu0 %1754
        %1756 = vrot.lane.b32.xlu0 %v903, 64
        %v1757 = vpop.permute.xlu0 %1756
        %1758 = vrot.lane.b32.xlu0 %v909, 64
        %v1759 = vpop.permute.xlu0 %1758
        %1760 = vrot.lane.b32.xlu0 %v915, 64
        %v1761 = vpop.permute.xlu0 %1760
        %1762 = vrot.lane.b32.xlu0 %v921, 64
        %v1763 = vpop.permute.xlu0 %1762
        %v1764 = vsel %vm1153, %v1701, 0
        %v1766 = vsel %vm1153, %v1703, 0
        %v1768 = vsel %vm1153, %v1705, 0
        %v1770 = vsel %vm1153, %v1707, 0
        %v1772 = vsel %vm1153, %v1709, 0
        %v1774 = vsel %vm1153, %v1711, 0
        %v1776 = vsel %vm1153, %v1713, 0
        %v1778 = vsel %vm1153, %v1715, 0
        %v1780 = vsel %vm1153, %v1717, 0
        %v1782 = vsel %vm1153, %v1719, 0
        %v1784 = vsel %vm1153, %v1721, 0
        %v1786 = vsel %vm1153, %v1723, 0
        %v1788 = vsel %vm1153, %v1725, 0
        %v1790 = vsel %vm1153, %v1727, 0
        %v1792 = vsel %vm1153, %v1729, 0
        %v1794 = vsel %vm1153, %v1731, 0
        %v1796 = vsel %vm1153, %v1733, 0
        %v1798 = vsel %vm1153, %v1735, 0
        %v1800 = vsel %vm1153, %v1737, 0
        %v1802 = vsel %vm1153, %v1739, 0
        %v1804 = vsel %vm1153, %v1741, 0
        %v1806 = vsel %vm1153, %v1743, 0
        %v1808 = vsel %vm1153, %v1745, 0
        %v1810 = vsel %vm1153, %v1747, 0
        %v1812 = vsel %vm1153, %v1749, 0
        %v1814 = vsel %vm1153, %v1751, 0
        %v1816 = vsel %vm1153, %v1753, 0
        %v1818 = vsel %vm1153, %v1755, 0
        %v1820 = vsel %vm1153, %v1757, 0
        %v1822 = vsel %vm1153, %v1759, 0
        %v1824 = vsel %vm1153, %v1761, 0
        %v1826 = vsel %vm1153, %v1763, 0
        %1828 = vmatprep.subr.mxu0 0.0
        %1829 = vmatpush1.xpose.msra.mxu0 %v1796
        %1830 = vmatprep.subr.mxu0 0.0
        %1831 = vmatpush1.xpose.msra.mxu0 %v1798
        %1832 = vmatprep.subr.mxu0 0.0
        %1833 = vmatpush1.xpose.msra.mxu0 %v1800
        %1834 = vmatprep.subr.mxu0 0.0
        %1835 = vmatpush1.xpose.msra.mxu0 %v1802
        %1836 = vmatprep.subr.mxu0 0.0
        %1837 = vmatpush1.xpose.msra.mxu0 %v1804
        %1838 = vmatprep.subr.mxu0 0.0
        %1839 = vmatpush1.xpose.msra.mxu0 %v1806
        %1840 = vmatprep.subr.mxu0 0.0
        %1841 = vmatpush1.xpose.msra.mxu0 %v1808
        %1842 = vmatprep.subr.mxu0 0.0
        %1843 = vmatpush1.xpose.msra.mxu0 %v1810
        %1844 = vmatprep.subr.mxu0 0.0
        %1845 = vmatpush1.xpose.msra.mxu0 %v1812
        %1846 = vmatprep.subr.mxu0 0.0
        %1847 = vmatpush1.xpose.msra.mxu0 %v1814
        %1848 = vmatprep.subr.mxu0 0.0
        %1849 = vmatpush1.xpose.msra.mxu0 %v1816
        %1850 = vmatprep.subr.mxu0 0.0
        %1851 = vmatpush1.xpose.msra.mxu0 %v1818
        %1852 = vmatprep.subr.mxu0 0.0
        %1853 = vmatpush1.xpose.msra.mxu0 %v1820
        %1854 = vmatprep.subr.mxu0 0.0
        %1855 = vmatpush1.xpose.msra.mxu0 %v1822
        %1856 = vmatprep.subr.mxu0 0.0
        %1857 = vmatpush1.xpose.msra.mxu0 %v1824
        %1858 = vmatprep.subr.mxu0 0.0
        %1859 = vmatpush1.xpose.msra.mxu0 %v1826
        %1860 = vmatprep.subr.mxu0 0.0
        %1861 = vmatpush1.xpose.msra.mxu0 0.0
        %1862 = vmatprep.subr.mxu0 0.0
        %1863 = vmatpush1.xpose.msra.mxu0 0.0
        %1864 = vmatprep.subr.mxu0 0.0
        %1865 = vmatpush1.xpose.msra.mxu0 0.0
        %1866 = vmatprep.subr.mxu0 0.0
        %1867 = vmatpush1.xpose.msra.mxu0 0.0
        %1868 = vmatprep.subr.mxu0 0.0
        %1869 = vmatpush1.xpose.msra.mxu0 0.0
        %1870 = vmatprep.subr.mxu0 0.0
        %1871 = vmatpush1.xpose.msra.mxu0 0.0
        %1872 = vmatprep.subr.mxu0 0.0
        %1873 = vmatpush1.xpose.msra.mxu0 0.0
        %1874 = vmatprep.subr.mxu0 0.0
        %1875 = vmatpush1.xpose.msra.mxu0 0.0
        %1876 = vmatprep.subr.mxu0 0.0
        %1877 = vmatpush1.xpose.msra.mxu0 0.0
        %1878 = vmatprep.subr.mxu0 0.0
        %1879 = vmatpush1.xpose.msra.mxu0 0.0
        %1880 = vmatprep.subr.mxu0 0.0
        %1881 = vmatpush1.xpose.msra.mxu0 0.0
        %1882 = vmatprep.subr.mxu0 0.0
        %1883 = vmatpush1.xpose.msra.mxu0 0.0
        %1884 = vmatprep.subr.mxu0 0.0
        %1885 = vmatpush1.xpose.msra.mxu0 0.0
        %1886 = vmatprep.subr.mxu0 0.0
        %1887 = vmatpush1.xpose.msra.mxu0 0.0
        %1888 = vmatprep.subr.mxu0 0.0
        %1889 = vmatpush1.xpose.msra.mxu0 0.0
        %1890 = vmatprep.subr.mxu0 0.0
        %1891 = vmatpush1.xpose.msra.mxu0 0.0
        %1892 = vmatprep.mubr.f32.mxu0 0.0
        %1893 = vmatmul.mubr.f32.gmra.mrb[0].mxu0 %v1764
        %v1894 = vpop.f32.mrb[0].mxu0
        %v1895 = vadd.f32 0.0, %v1894
        %v1896 = vpop.f32.mrb[0].mxu0
        %1897 = vmatprep.mubr.f32.mxu0 0.0
        %1898 = vmatmul.mubr.f32.gmra.mrb[0].mxu0 %v1766
        %v1899 = vpop.f32.mrb[0].mxu0
        %v1900 = vadd.f32 0.0, %v1899
        %v1901 = vpop.f32.mrb[0].mxu0
        %1902 = vmatprep.mubr.f32.mxu0 0.0
        %1903 = vmatmul.mubr.f32.gmra.mrb[0].mxu0 %v1768
        %v1904 = vpop.f32.mrb[0].mxu0
        %v1905 = vadd.f32 0.0, %v1904
        %v1906 = vpop.f32.mrb[0].mxu0
        %1907 = vmatprep.mubr.f32.mxu0 0.0
        %1908 = vmatmul.mubr.f32.gmra.mrb[0].mxu0 %v1770
        %v1909 = vpop.f32.mrb[0].mxu0
        %v1910 = vadd.f32 0.0, %v1909
        %v1911 = vpop.f32.mrb[0].mxu0
        %1912 = vmatprep.mubr.f32.mxu0 0.0
        %1913 = vmatmul.mubr.f32.gmra.mrb[0].mxu0 %v1772
        %v1914 = vpop.f32.mrb[0].mxu0
        %v1915 = vadd.f32 0.0, %v1914
        %v1916 = vpop.f32.mrb[0].mxu0
        %1917 = vmatprep.mubr.f32.mxu0 0.0
        %1918 = vmatmul.mubr.f32.gmra.mrb[0].mxu0 %v1774
        %v1919 = vpop.f32.mrb[0].mxu0
        %v1920 = vadd.f32 0.0, %v1919
        %v1921 = vpop.f32.mrb[0].mxu0
        %1922 = vmatprep.mubr.f32.mxu0 0.0
        %1923 = vmatmul.mubr.f32.gmra.mrb[0].mxu0 %v1776
        %v1924 = vpop.f32.mrb[0].mxu0
        %v1925 = vadd.f32 0.0, %v1924
        %v1926 = vpop.f32.mrb[0].mxu0
        %1927 = vmatprep.mubr.f32.mxu0 0.0
        %1928 = vmatmul.mubr.f32.gmra.mrb[0].mxu0 %v1778
        %v1929 = vpop.f32.mrb[0].mxu0
        %v1930 = vadd.f32 0.0, %v1929
        %v1931 = vpop.f32.mrb[0].mxu0
        %1932 = vmatprep.mubr.f32.mxu0 0.0
        %1933 = vmatmul.mubr.f32.gmra.mrb[0].mxu0 %v1780
        %v1934 = vpop.f32.mrb[0].mxu0
        %v1935 = vadd.f32 0.0, %v1934
        %v1936 = vpop.f32.mrb[0].mxu0
        %1937 = vmatprep.mubr.f32.mxu0 0.0
        %1938 = vmatmul.mubr.f32.gmra.mrb[0].mxu0 %v1782
        %v1939 = vpop.f32.mrb[0].mxu0
        %v1940 = vadd.f32 0.0, %v1939
        %v1941 = vpop.f32.mrb[0].mxu0
        %1942 = vmatprep.mubr.f32.mxu0 0.0
        %1943 = vmatmul.mubr.f32.gmra.mrb[0].mxu0 %v1784
        %v1944 = vpop.f32.mrb[0].mxu0
        %v1945 = vadd.f32 0.0, %v1944
        %v1946 = vpop.f32.mrb[0].mxu0
        %1947 = vmatprep.mubr.f32.mxu0 0.0
        %1948 = vmatmul.mubr.f32.gmra.mrb[0].mxu0 %v1786
        %v1949 = vpop.f32.mrb[0].mxu0
        %v1950 = vadd.f32 0.0, %v1949
        %v1951 = vpop.f32.mrb[0].mxu0
        %1952 = vmatprep.mubr.f32.mxu0 0.0
        %1953 = vmatmul.mubr.f32.gmra.mrb[0].mxu0 %v1788
        %v1954 = vpop.f32.mrb[0].mxu0
        %v1955 = vadd.f32 0.0, %v1954
        %v1956 = vpop.f32.mrb[0].mxu0
        %1957 = vmatprep.mubr.f32.mxu0 0.0
        %1958 = vmatmul.mubr.f32.gmra.mrb[0].mxu0 %v1790
        %v1959 = vpop.f32.mrb[0].mxu0
        %v1960 = vadd.f32 0.0, %v1959
        %v1961 = vpop.f32.mrb[0].mxu0
        %1962 = vmatprep.mubr.f32.mxu0 0.0
        %1963 = vmatmul.mubr.f32.gmra.mrb[0].mxu0 %v1792
        %v1964 = vpop.f32.mrb[0].mxu0
        %v1965 = vadd.f32 0.0, %v1964
        %v1966 = vpop.f32.mrb[0].mxu0
        %1967 = vmatprep.mubr.f32.mxu0 0.0
        %1968 = vmatmul.mubr.f32.gmra.mrb[0].mxu0 %v1794
        %v1969 = vpop.f32.mrb[0].mxu0
        %v1970 = vadd.f32 0.0, %v1969
        %v1971 = vpop.f32.mrb[0].mxu0
        %1972 = vdwg.mxu0
        %v1973 = vsel %vm1137, %v1895, -inf
        %v1974 = vsel %vm1138, %v1900, -inf
        %v1975 = vsel %vm1139, %v1905, -inf
        %v1976 = vsel %vm1140, %v1910, -inf
        %v1977 = vsel %vm1141, %v1915, -inf
        %v1978 = vsel %vm1142, %v1920, -inf
        %v1979 = vsel %vm1143, %v1925, -inf
        %v1980 = vsel %vm1144, %v1930, -inf
        %v1981 = vsel %vm1145, %v1935, -inf
        %v1982 = vsel %vm1146, %v1940, -inf
        %v1983 = vsel %vm1147, %v1945, -inf
        %v1984 = vsel %vm1148, %v1950, -inf
        %v1985 = vsel %vm1149, %v1955, -inf
        %v1986 = vsel %vm1150, %v1960, -inf
        %v1987 = vsel %vm1151, %v1965, -inf
        %v1988 = vsel %vm1152, %v1970, -inf
        %1989 = vmax.xlane.f32.xlu0 %v1973
        %v1990 = vpop.xlane.xlu0 %1989
        %1991 = vmax.xlane.f32.xlu0 %v1974
        %v1992 = vpop.xlane.xlu0 %1991
        %1993 = vmax.xlane.f32.xlu0 %v1975
        %v1994 = vpop.xlane.xlu0 %1993
        %1995 = vmax.xlane.f32.xlu0 %v1976
        %v1996 = vpop.xlane.xlu0 %1995
        %1997 = vmax.xlane.f32.xlu0 %v1977
        %v1998 = vpop.xlane.xlu0 %1997
        %1999 = vmax.xlane.f32.xlu0 %v1978
        %v2000 = vpop.xlane.xlu0 %1999
        %2001 = vmax.xlane.f32.xlu0 %v1979
        %v2002 = vpop.xlane.xlu0 %2001
        %2003 = vmax.xlane.f32.xlu0 %v1980
        %v2004 = vpop.xlane.xlu0 %2003
        %2005 = vmax.xlane.f32.xlu0 %v1981
        %v2006 = vpop.xlane.xlu0 %2005
        %2007 = vmax.xlane.f32.xlu0 %v1982
        %v2008 = vpop.xlane.xlu0 %2007
        %2009 = vmax.xlane.f32.xlu0 %v1983
        %v2010 = vpop.xlane.xlu0 %2009
        %2011 = vmax.xlane.f32.xlu0 %v1984
        %v2012 = vpop.xlane.xlu0 %2011
        %2013 = vmax.xlane.f32.xlu0 %v1985
        %v2014 = vpop.xlane.xlu0 %2013
        %2015 = vmax.xlane.f32.xlu0 %v1986
        %v2016 = vpop.xlane.xlu0 %2015
        %2017 = vmax.xlane.f32.xlu0 %v1987
        %v2018 = vpop.xlane.xlu0 %2017
        %2019 = vmax.xlane.f32.xlu0 %v1988
        %v2020 = vpop.xlane.xlu0 %2019
        %v2021 = vsub.f32 %v1973, %v1990
        %v2022 = vsub.f32 %v1974, %v1992
        %v2023 = vsub.f32 %v1975, %v1994
        %v2024 = vsub.f32 %v1976, %v1996
        %v2025 = vsub.f32 %v1977, %v1998
        %v2026 = vsub.f32 %v1978, %v2000
        %v2027 = vsub.f32 %v1979, %v2002
        %v2028 = vsub.f32 %v1980, %v2004
        %v2029 = vsub.f32 %v1981, %v2006
        %v2030 = vsub.f32 %v1982, %v2008
        %v2031 = vsub.f32 %v1983, %v2010
        %v2032 = vsub.f32 %v1984, %v2012
        %v2033 = vsub.f32 %v1985, %v2014
        %v2034 = vsub.f32 %v1986, %v2016
        %v2035 = vsub.f32 %v1987, %v2018
        %v2036 = vsub.f32 %v1988, %v2020
        %v2037 = vmul.f32 %v2021, 1.442695
        %v2038 = vpow.pop %v2037
        %v2039 = vmul.f32 %v2022, 1.442695
        %v2040 = vpow.pop %v2039
        %v2041 = vmul.f32 %v2023, 1.442695
        %v2042 = vpow.pop %v2041
        %v2043 = vmul.f32 %v2024, 1.442695
        %v2044 = vpow.pop %v2043
        %v2045 = vmul.f32 %v2025, 1.442695
        %v2046 = vpow.pop %v2045
        %v2047 = vmul.f32 %v2026, 1.442695
        %v2048 = vpow.pop %v2047
        %v2049 = vmul.f32 %v2027, 1.442695
        %v2050 = vpow.pop %v2049
        %v2051 = vmul.f32 %v2028, 1.442695
        %v2052 = vpow.pop %v2051
        %v2053 = vmul.f32 %v2029, 1.442695
        %v2054 = vpow.pop %v2053
        %v2055 = vmul.f32 %v2030, 1.442695
        %v2056 = vpow.pop %v2055
        %v2057 = vmul.f32 %v2031, 1.442695
        %v2058 = vpow.pop %v2057
        %v2059 = vmul.f32 %v2032, 1.442695
        %v2060 = vpow.pop %v2059
        %v2061 = vmul.f32 %v2033, 1.442695
        %v2062 = vpow.pop %v2061
        %v2063 = vmul.f32 %v2034, 1.442695
        %v2064 = vpow.pop %v2063
        %v2065 = vmul.f32 %v2035, 1.442695
        %v2066 = vpow.pop %v2065
        %v2067 = vmul.f32 %v2036, 1.442695
        %v2068 = vpow.pop %v2067
        %2069 = vadd.xlane.f32.xlu0 %v2038
        %v2070 = vpop.xlane.xlu0 %2069
        %2071 = vadd.xlane.f32.xlu0 %v2040
        %v2072 = vpop.xlane.xlu0 %2071
        %2073 = vadd.xlane.f32.xlu0 %v2042
        %v2074 = vpop.xlane.xlu0 %2073
        %2075 = vadd.xlane.f32.xlu0 %v2044
        %v2076 = vpop.xlane.xlu0 %2075
        %2077 = vadd.xlane.f32.xlu0 %v2046
        %v2078 = vpop.xlane.xlu0 %2077
        %2079 = vadd.xlane.f32.xlu0 %v2048
        %v2080 = vpop.xlane.xlu0 %2079
        %2081 = vadd.xlane.f32.xlu0 %v2050
        %v2082 = vpop.xlane.xlu0 %2081
        %2083 = vadd.xlane.f32.xlu0 %v2052
        %v2084 = vpop.xlane.xlu0 %2083
        %2085 = vadd.xlane.f32.xlu0 %v2054
        %v2086 = vpop.xlane.xlu0 %2085
        %2087 = vadd.xlane.f32.xlu0 %v2056
        %v2088 = vpop.xlane.xlu0 %2087
        %2089 = vadd.xlane.f32.xlu0 %v2058
        %v2090 = vpop.xlane.xlu0 %2089
        %2091 = vadd.xlane.f32.xlu0 %v2060
        %v2092 = vpop.xlane.xlu0 %2091
        %2093 = vadd.xlane.f32.xlu0 %v2062
        %v2094 = vpop.xlane.xlu0 %2093
        %2095 = vadd.xlane.f32.xlu0 %v2064
        %v2096 = vpop.xlane.xlu0 %2095
        %2097 = vadd.xlane.f32.xlu0 %v2066
        %v2098 = vpop.xlane.xlu0 %2097
        %2099 = vadd.xlane.f32.xlu0 %v2068
        %v2100 = vpop.xlane.xlu0 %2099
        %v2101 = vrcp.pop %v2070
        %v2102 = vrcp.pop %v2072
        %v2103 = vrcp.pop %v2074
        %v2104 = vrcp.pop %v2076
        %v2105 = vrcp.pop %v2078
        %v2106 = vrcp.pop %v2080
        %v2107 = vrcp.pop %v2082
        %v2108 = vrcp.pop %v2084
        %v2109 = vrcp.pop %v2086
        %v2110 = vrcp.pop %v2088
        %v2111 = vrcp.pop %v2090
        %v2112 = vrcp.pop %v2092
        %v2113 = vrcp.pop %v2094
        %v2114 = vrcp.pop %v2096
        %v2115 = vrcp.pop %v2098
        %v2116 = vrcp.pop %v2100
        %v2117 = vmul.f32 %v2038, %v2101
        %v2118 = vmul.f32 %v2040, %v2102
        %v2119 = vmul.f32 %v2042, %v2103
        %v2120 = vmul.f32 %v2044, %v2104
        %v2121 = vmul.f32 %v2046, %v2105
        %v2122 = vmul.f32 %v2048, %v2106
        %v2123 = vmul.f32 %v2050, %v2107
        %v2124 = vmul.f32 %v2052, %v2108
        %v2125 = vmul.f32 %v2054, %v2109
        %v2126 = vmul.f32 %v2056, %v2110
        %v2127 = vmul.f32 %v2058, %v2111
        %v2128 = vmul.f32 %v2060, %v2112
        %v2129 = vmul.f32 %v2062, %v2113
        %v2130 = vmul.f32 %v2064, %v2114
        %v2131 = vmul.f32 %v2066, %v2115
        %v2132 = vmul.f32 %v2068, %v2116
        %2149 = vrot.lane.b32.xlu0 %v992, 64
        %v2150 = vpop.permute.xlu0 %2149
        %2151 = vrot.lane.b32.xlu0 %v998, 64
        %v2152 = vpop.permute.xlu0 %2151
        %2153 = vrot.lane.b32.xlu0 %v1004, 64
        %v2154 = vpop.permute.xlu0 %2153
        %2155 = vrot.lane.b32.xlu0 %v1010, 64
        %v2156 = vpop.permute.xlu0 %2155
        %2157 = vrot.lane.b32.xlu0 %v1016, 64
        %v2158 = vpop.permute.xlu0 %2157
        %2159 = vrot.lane.b32.xlu0 %v1022, 64
        %v2160 = vpop.permute.xlu0 %2159
        %2161 = vrot.lane.b32.xlu0 %v1028, 64
        %v2162 = vpop.permute.xlu0 %2161
        %2163 = vrot.lane.b32.xlu0 %v1034, 64
        %v2164 = vpop.permute.xlu0 %2163
        %2165 = vrot.lane.b32.xlu0 %v1040, 64
        %v2166 = vpop.permute.xlu0 %2165
        %2167 = vrot.lane.b32.xlu0 %v1046, 64
        %v2168 = vpop.permute.xlu0 %2167
        %2169 = vrot.lane.b32.xlu0 %v1052, 64
        %v2170 = vpop.permute.xlu0 %2169
        %2171 = vrot.lane.b32.xlu0 %v1058, 64
        %v2172 = vpop.permute.xlu0 %2171
        %2173 = vrot.lane.b32.xlu0 %v1064, 64
        %v2174 = vpop.permute.xlu0 %2173
        %2175 = vrot.lane.b32.xlu0 %v1070, 64
        %v2176 = vpop.permute.xlu0 %2175
        %2177 = vrot.lane.b32.xlu0 %v1076, 64
        %v2178 = vpop.permute.xlu0 %2177
        %2179 = vrot.lane.b32.xlu0 %v1082, 64
        %v2180 = vpop.permute.xlu0 %2179
        %2197 = vmatprep.subr.mxu0 0.0
        %2198 = vmatpush1.msra.mxu0 %v2150
        %2199 = vmatprep.subr.mxu0 0.0
        %2200 = vmatpush1.msra.mxu0 %v2152
        %2201 = vmatprep.subr.mxu0 0.0
        %2202 = vmatpush1.msra.mxu0 %v2154
        %2203 = vmatprep.subr.mxu0 0.0
        %2204 = vmatpush1.msra.mxu0 %v2156
        %2205 = vmatprep.subr.mxu0 0.0
        %2206 = vmatpush1.msra.mxu0 %v2158
        %2207 = vmatprep.subr.mxu0 0.0
        %2208 = vmatpush1.msra.mxu0 %v2160
        %2209 = vmatprep.subr.mxu0 0.0
        %2210 = vmatpush1.msra.mxu0 %v2162
        %2211 = vmatprep.subr.mxu0 0.0
        %2212 = vmatpush1.msra.mxu0 %v2164
        %2213 = vmatprep.subr.mxu0 0.0
        %2214 = vmatpush1.msra.mxu0 %v2166
        %2215 = vmatprep.subr.mxu0 0.0
        %2216 = vmatpush1.msra.mxu0 %v2168
        %2217 = vmatprep.subr.mxu0 0.0
        %2218 = vmatpush1.msra.mxu0 %v2170
        %2219 = vmatprep.subr.mxu0 0.0
        %2220 = vmatpush1.msra.mxu0 %v2172
        %2221 = vmatprep.subr.mxu0 0.0
        %2222 = vmatpush1.msra.mxu0 %v2174
        %2223 = vmatprep.subr.mxu0 0.0
        %2224 = vmatpush1.msra.mxu0 %v2176
        %2225 = vmatprep.subr.mxu0 0.0
        %2226 = vmatpush1.msra.mxu0 %v2178
        %2227 = vmatprep.subr.mxu0 0.0
        %2228 = vmatpush1.msra.mxu0 %v2180
        %2229 = vmatprep.subr.mxu0 0.0
        %2230 = vmatpush1.msra.mxu0 0.0
        %2231 = vmatprep.subr.mxu0 0.0
        %2232 = vmatpush1.msra.mxu0 0.0
        %2233 = vmatprep.subr.mxu0 0.0
        %2234 = vmatpush1.msra.mxu0 0.0
        %2235 = vmatprep.subr.mxu0 0.0
        %2236 = vmatpush1.msra.mxu0 0.0
        %2237 = vmatprep.subr.mxu0 0.0
        %2238 = vmatpush1.msra.mxu0 0.0
        %2239 = vmatprep.subr.mxu0 0.0
        %2240 = vmatpush1.msra.mxu0 0.0
        %2241 = vmatprep.subr.mxu0 0.0
        %2242 = vmatpush1.msra.mxu0 0.0
        %2243 = vmatprep.subr.mxu0 0.0
        %2244 = vmatpush1.msra.mxu0 0.0
        %2245 = vmatprep.subr.mxu0 0.0
        %2246 = vmatpush1.msra.mxu0 0.0
        %2247 = vmatprep.subr.mxu0 0.0
        %2248 = vmatpush1.msra.mxu0 0.0
        %2249 = vmatprep.subr.mxu0 0.0
        %2250 = vmatpush1.msra.mxu0 0.0
        %2251 = vmatprep.subr.mxu0 0.0
        %2252 = vmatpush1.msra.mxu0 0.0
        %2253 = vmatprep.subr.mxu0 0.0
        %2254 = vmatpush1.msra.mxu0 0.0
        %2255 = vmatprep.subr.mxu0 0.0
        %2256 = vmatpush1.msra.mxu0 0.0
        %2257 = vmatprep.subr.mxu0 0.0
        %2258 = vmatpush1.msra.mxu0 0.0
        %2259 = vmatprep.subr.mxu0 0.0
        %2260 = vmatpush1.msra.mxu0 0.0
        %2261 = vmatprep.mubr.f32.mxu0 0.0
        %2262 = vmatmul.mubr.f32.gmra.mrb[0].mxu0 %v2117
        %v2263 = vpop.f32.mrb[0].mxu0
        %v2264 = vadd.f32 0.0, %v2263
        %v2265 = vpop.f32.mrb[0].mxu0
        %2266 = vmatprep.mubr.f32.mxu0 0.0
        %2267 = vmatmul.mubr.f32.gmra.mrb[0].mxu0 %v2118
        %v2268 = vpop.f32.mrb[0].mxu0
        %v2269 = vadd.f32 0.0, %v2268
        %v2270 = vpop.f32.mrb[0].mxu0
        %2271 = vmatprep.mubr.f32.mxu0 0.0
        %2272 = vmatmul.mubr.f32.gmra.mrb[0].mxu0 %v2119
        %v2273 = vpop.f32.mrb[0].mxu0
        %v2274 = vadd.f32 0.0, %v2273
        %v2275 = vpop.f32.mrb[0].mxu0
        %2276 = vmatprep.mubr.f32.mxu0 0.0
        %2277 = vmatmul.mubr.f32.gmra.mrb[0].mxu0 %v2120
        %v2278 = vpop.f32.mrb[0].mxu0
        %v2279 = vadd.f32 0.0, %v2278
        %v2280 = vpop.f32.mrb[0].mxu0
        %2281 = vmatprep.mubr.f32.mxu0 0.0
        %2282 = vmatmul.mubr.f32.gmra.mrb[0].mxu0 %v2121
        %v2283 = vpop.f32.mrb[0].mxu0
        %v2284 = vadd.f32 0.0, %v2283
        %v2285 = vpop.f32.mrb[0].mxu0
        %2286 = vmatprep.mubr.f32.mxu0 0.0
        %2287 = vmatmul.mubr.f32.gmra.mrb[0].mxu0 %v2122
        %v2288 = vpop.f32.mrb[0].mxu0
        %v2289 = vadd.f32 0.0, %v2288
        %v2290 = vpop.f32.mrb[0].mxu0
        %2291 = vmatprep.mubr.f32.mxu0 0.0
        %2292 = vmatmul.mubr.f32.gmra.mrb[0].mxu0 %v2123
        %v2293 = vpop.f32.mrb[0].mxu0
        %v2294 = vadd.f32 0.0, %v2293
        %v2295 = vpop.f32.mrb[0].mxu0
        %2296 = vmatprep.mubr.f32.mxu0 0.0
        %2297 = vmatmul.mubr.f32.gmra.mrb[0].mxu0 %v2124
        %v2298 = vpop.f32.mrb[0].mxu0
        %v2299 = vadd.f32 0.0, %v2298
        %v2300 = vpop.f32.mrb[0].mxu0
        %2301 = vmatprep.mubr.f32.mxu0 0.0
        %2302 = vmatmul.mubr.f32.gmra.mrb[0].mxu0 %v2125
        %v2303 = vpop.f32.mrb[0].mxu0
        %v2304 = vadd.f32 0.0, %v2303
        %v2305 = vpop.f32.mrb[0].mxu0
        %2306 = vmatprep.mubr.f32.mxu0 0.0
        %2307 = vmatmul.mubr.f32.gmra.mrb[0].mxu0 %v2126
        %v2308 = vpop.f32.mrb[0].mxu0
        %v2309 = vadd.f32 0.0, %v2308
        %v2310 = vpop.f32.mrb[0].mxu0
        %2311 = vmatprep.mubr.f32.mxu0 0.0
        %2312 = vmatmul.mubr.f32.gmra.mrb[0].mxu0 %v2127
        %v2313 = vpop.f32.mrb[0].mxu0
        %v2314 = vadd.f32 0.0, %v2313
        %v2315 = vpop.f32.mrb[0].mxu0
        %2316 = vmatprep.mubr.f32.mxu0 0.0
        %2317 = vmatmul.mubr.f32.gmra.mrb[0].mxu0 %v2128
        %v2318 = vpop.f32.mrb[0].mxu0
        %v2319 = vadd.f32 0.0, %v2318
        %v2320 = vpop.f32.mrb[0].mxu0
        %2321 = vmatprep.mubr.f32.mxu0 0.0
        %2322 = vmatmul.mubr.f32.gmra.mrb[0].mxu0 %v2129
        %v2323 = vpop.f32.mrb[0].mxu0
        %v2324 = vadd.f32 0.0, %v2323
        %v2325 = vpop.f32.mrb[0].mxu0
        %2326 = vmatprep.mubr.f32.mxu0 0.0
        %2327 = vmatmul.mubr.f32.gmra.mrb[0].mxu0 %v2130
        %v2328 = vpop.f32.mrb[0].mxu0
        %v2329 = vadd.f32 0.0, %v2328
        %v2330 = vpop.f32.mrb[0].mxu0
        %2331 = vmatprep.mubr.f32.mxu0 0.0
        %2332 = vmatmul.mubr.f32.gmra.mrb[0].mxu0 %v2131
        %v2333 = vpop.f32.mrb[0].mxu0
        %v2334 = vadd.f32 0.0, %v2333
        %v2335 = vpop.f32.mrb[0].mxu0
        %2336 = vmatprep.mubr.f32.mxu0 0.0
        %2337 = vmatmul.mubr.f32.gmra.mrb[0].mxu0 %v2132
        %v2338 = vpop.f32.mrb[0].mxu0
        %v2339 = vadd.f32 0.0, %v2338
        %v2340 = vpop.f32.mrb[0].mxu0
        %2341 = vdwg.mxu0
        %v2343 = vsel %vm1153, %v1087, 0
        %v2346 = vsel %vm1153, %v1089, 0
        %v2349 = vsel %vm1153, %v1091, 0
        %v2352 = vsel %vm1153, %v1093, 0
        %v2355 = vsel %vm1153, %v1095, 0
        %v2358 = vsel %vm1153, %v1097, 0
        %v2361 = vsel %vm1153, %v1099, 0
        %v2364 = vsel %vm1153, %v1101, 0
        %v2367 = vsel %vm1153, %v1103, 0
        %v2370 = vsel %vm1153, %v1105, 0
        %v2373 = vsel %vm1153, %v1107, 0
        %v2376 = vsel %vm1153, %v1109, 0
        %v2379 = vsel %vm1153, %v1111, 0
        %v2382 = vsel %vm1153, %v1113, 0
        %v2385 = vsel %vm1153, %v1115, 0
        %v2388 = vsel %vm1153, %v1117, 0
        %v2391 = vsel %vm1153, %v833, 0
        %v2394 = vsel %vm1153, %v839, 0
        %v2397 = vsel %vm1153, %v845, 0
        %v2400 = vsel %vm1153, %v851, 0
        %v2403 = vsel %vm1153, %v857, 0
        %v2406 = vsel %vm1153, %v863, 0
        %v2409 = vsel %vm1153, %v869, 0
        %v2412 = vsel %vm1153, %v875, 0
        %v2415 = vsel %vm1153, %v881, 0
        %v2418 = vsel %vm1153, %v887, 0
        %v2421 = vsel %vm1153, %v893, 0
        %v2424 = vsel %vm1153, %v899, 0
        %v2427 = vsel %vm1153, %v905, 0
        %v2430 = vsel %vm1153, %v911, 0
        %v2433 = vsel %vm1153, %v917, 0
        %v2436 = vsel %vm1153, %v923, 0
        %2438 = vmatprep.subr.mxu0 0.0
        %2439 = vmatpush1.xpose.msra.mxu0 %v2391
        %2440 = vmatprep.subr.mxu0 0.0
        %2441 = vmatpush1.xpose.msra.mxu0 %v2394
        %2442 = vmatprep.subr.mxu0 0.0
        %2443 = vmatpush1.xpose.msra.mxu0 %v2397
        %2444 = vmatprep.subr.mxu0 0.0
        %2445 = vmatpush1.xpose.msra.mxu0 %v2400
        %2446 = vmatprep.subr.mxu0 0.0
        %2447 = vmatpush1.xpose.msra.mxu0 %v2403
        %2448 = vmatprep.subr.mxu0 0.0
        %2449 = vmatpush1.xpose.msra.mxu0 %v2406
        %2450 = vmatprep.subr.mxu0 0.0
        %2451 = vmatpush1.xpose.msra.mxu0 %v2409
        %2452 = vmatprep.subr.mxu0 0.0
        %2453 = vmatpush1.xpose.msra.mxu0 %v2412
        %2454 = vmatprep.subr.mxu0 0.0
        %2455 = vmatpush1.xpose.msra.mxu0 %v2415
        %2456 = vmatprep.subr.mxu0 0.0
        %2457 = vmatpush1.xpose.msra.mxu0 %v2418
        %2458 = vmatprep.subr.mxu0 0.0
        %2459 = vmatpush1.xpose.msra.mxu0 %v2421
        %2460 = vmatprep.subr.mxu0 0.0
        %2461 = vmatpush1.xpose.msra.mxu0 %v2424
        %2462 = vmatprep.subr.mxu0 0.0
        %2463 = vmatpush1.xpose.msra.mxu0 %v2427
        %2464 = vmatprep.subr.mxu0 0.0
        %2465 = vmatpush1.xpose.msra.mxu0 %v2430
        %2466 = vmatprep.subr.mxu0 0.0
        %2467 = vmatpush1.xpose.msra.mxu0 %v2433
        %2468 = vmatprep.subr.mxu0 0.0
        %2469 = vmatpush1.xpose.msra.mxu0 %v2436
        %2470 = vmatprep.subr.mxu0 0.0
        %2471 = vmatpush1.xpose.msra.mxu0 0.0
        %2472 = vmatprep.subr.mxu0 0.0
        %2473 = vmatpush1.xpose.msra.mxu0 0.0
        %2474 = vmatprep.subr.mxu0 0.0
        %2475 = vmatpush1.xpose.msra.mxu0 0.0
        %2476 = vmatprep.subr.mxu0 0.0
        %2477 = vmatpush1.xpose.msra.mxu0 0.0
        %2478 = vmatprep.subr.mxu0 0.0
        %2479 = vmatpush1.xpose.msra.mxu0 0.0
        %2480 = vmatprep.subr.mxu0 0.0
        %2481 = vmatpush1.xpose.msra.mxu0 0.0
        %2482 = vmatprep.subr.mxu0 0.0
        %2483 = vmatpush1.xpose.msra.mxu0 0.0
        %2484 = vmatprep.subr.mxu0 0.0
        %2485 = vmatpush1.xpose.msra.mxu0 0.0
        %2486 = vmatprep.subr.mxu0 0.0
        %2487 = vmatpush1.xpose.msra.mxu0 0.0
        %2488 = vmatprep.subr.mxu0 0.0
        %2489 = vmatpush1.xpose.msra.mxu0 0.0
        %2490 = vmatprep.subr.mxu0 0.0
        %2491 = vmatpush1.xpose.msra.mxu0 0.0
        %2492 = vmatprep.subr.mxu0 0.0
        %2493 = vmatpush1.xpose.msra.mxu0 0.0
        %2494 = vmatprep.subr.mxu0 0.0
        %2495 = vmatpush1.xpose.msra.mxu0 0.0
        %2496 = vmatprep.subr.mxu0 0.0
        %2497 = vmatpush1.xpose.msra.mxu0 0.0
        %2498 = vmatprep.subr.mxu0 0.0
        %2499 = vmatpush1.xpose.msra.mxu0 0.0
        %2500 = vmatprep.subr.mxu0 0.0
        %2501 = vmatpush1.xpose.msra.mxu0 0.0
        %2502 = vmatprep.mubr.f32.mxu0 0.0
        %2503 = vmatmul.mubr.f32.gmra.mrb[0].mxu0 %v2343
        %v2504 = vpop.f32.mrb[0].mxu0
        %v2505 = vadd.f32 0.0, %v2504
        %v2506 = vpop.f32.mrb[0].mxu0
        %2507 = vmatprep.mubr.f32.mxu0 0.0
        %2508 = vmatmul.mubr.f32.gmra.mrb[0].mxu0 %v2346
        %v2509 = vpop.f32.mrb[0].mxu0
        %v2510 = vadd.f32 0.0, %v2509
        %v2511 = vpop.f32.mrb[0].mxu0
        %2512 = vmatprep.mubr.f32.mxu0 0.0
        %2513 = vmatmul.mubr.f32.gmra.mrb[0].mxu0 %v2349
        %v2514 = vpop.f32.mrb[0].mxu0
        %v2515 = vadd.f32 0.0, %v2514
        %v2516 = vpop.f32.mrb[0].mxu0
        %2517 = vmatprep.mubr.f32.mxu0 0.0
        %2518 = vmatmul.mubr.f32.gmra.mrb[0].mxu0 %v2352
        %v2519 = vpop.f32.mrb[0].mxu0
        %v2520 = vadd.f32 0.0, %v2519
        %v2521 = vpop.f32.mrb[0].mxu0
        %2522 = vmatprep.mubr.f32.mxu0 0.0
        %2523 = vmatmul.mubr.f32.gmra.mrb[0].mxu0 %v2355
        %v2524 = vpop.f32.mrb[0].mxu0
        %v2525 = vadd.f32 0.0, %v2524
        %v2526 = vpop.f32.mrb[0].mxu0
        %2527 = vmatprep.mubr.f32.mxu0 0.0
        %2528 = vmatmul.mubr.f32.gmra.mrb[0].mxu0 %v2358
        %v2529 = vpop.f32.mrb[0].mxu0
        %v2530 = vadd.f32 0.0, %v2529
        %v2531 = vpop.f32.mrb[0].mxu0
        %2532 = vmatprep.mubr.f32.mxu0 0.0
        %2533 = vmatmul.mubr.f32.gmra.mrb[0].mxu0 %v2361
        %v2534 = vpop.f32.mrb[0].mxu0
        %v2535 = vadd.f32 0.0, %v2534
        %v2536 = vpop.f32.mrb[0].mxu0
        %2537 = vmatprep.mubr.f32.mxu0 0.0
        %2538 = vmatmul.mubr.f32.gmra.mrb[0].mxu0 %v2364
        %v2539 = vpop.f32.mrb[0].mxu0
        %v2540 = vadd.f32 0.0, %v2539
        %v2541 = vpop.f32.mrb[0].mxu0
        %2542 = vmatprep.mubr.f32.mxu0 0.0
        %2543 = vmatmul.mubr.f32.gmra.mrb[0].mxu0 %v2367
        %v2544 = vpop.f32.mrb[0].mxu0
        %v2545 = vadd.f32 0.0, %v2544
        %v2546 = vpop.f32.mrb[0].mxu0
        %2547 = vmatprep.mubr.f32.mxu0 0.0
        %2548 = vmatmul.mubr.f32.gmra.mrb[0].mxu0 %v2370
        %v2549 = vpop.f32.mrb[0].mxu0
        %v2550 = vadd.f32 0.0, %v2549
        %v2551 = vpop.f32.mrb[0].mxu0
        %2552 = vmatprep.mubr.f32.mxu0 0.0
        %2553 = vmatmul.mubr.f32.gmra.mrb[0].mxu0 %v2373
        %v2554 = vpop.f32.mrb[0].mxu0
        %v2555 = vadd.f32 0.0, %v2554
        %v2556 = vpop.f32.mrb[0].mxu0
        %2557 = vmatprep.mubr.f32.mxu0 0.0
        %2558 = vmatmul.mubr.f32.gmra.mrb[0].mxu0 %v2376
        %v2559 = vpop.f32.mrb[0].mxu0
        %v2560 = vadd.f32 0.0, %v2559
        %v2561 = vpop.f32.mrb[0].mxu0
        %2562 = vmatprep.mubr.f32.mxu0 0.0
        %2563 = vmatmul.mubr.f32.gmra.mrb[0].mxu0 %v2379
        %v2564 = vpop.f32.mrb[0].mxu0
        %v2565 = vadd.f32 0.0, %v2564
        %v2566 = vpop.f32.mrb[0].mxu0
        %2567 = vmatprep.mubr.f32.mxu0 0.0
        %2568 = vmatmul.mubr.f32.gmra.mrb[0].mxu0 %v2382
        %v2569 = vpop.f32.mrb[0].mxu0
        %v2570 = vadd.f32 0.0, %v2569
        %v2571 = vpop.f32.mrb[0].mxu0
        %2572 = vmatprep.mubr.f32.mxu0 0.0
        %2573 = vmatmul.mubr.f32.gmra.mrb[0].mxu0 %v2385
        %v2574 = vpop.f32.mrb[0].mxu0
        %v2575 = vadd.f32 0.0, %v2574
        %v2576 = vpop.f32.mrb[0].mxu0
        %2577 = vmatprep.mubr.f32.mxu0 0.0
        %2578 = vmatmul.mubr.f32.gmra.mrb[0].mxu0 %v2388
        %v2579 = vpop.f32.mrb[0].mxu0
        %v2580 = vadd.f32 0.0, %v2579
        %v2581 = vpop.f32.mrb[0].mxu0
        %2582 = vdwg.mxu0
        %v2583 = vsel %vm1137, %v2505, -inf
        %v2584 = vsel %vm1138, %v2510, -inf
        %v2585 = vsel %vm1139, %v2515, -inf
        %v2586 = vsel %vm1140, %v2520, -inf
        %v2587 = vsel %vm1141, %v2525, -inf
        %v2588 = vsel %vm1142, %v2530, -inf
        %v2589 = vsel %vm1143, %v2535, -inf
        %v2590 = vsel %vm1144, %v2540, -inf
        %v2591 = vsel %vm1145, %v2545, -inf
        %v2592 = vsel %vm1146, %v2550, -inf
        %v2593 = vsel %vm1147, %v2555, -inf
        %v2594 = vsel %vm1148, %v2560, -inf
        %v2595 = vsel %vm1149, %v2565, -inf
        %v2596 = vsel %vm1150, %v2570, -inf
        %v2597 = vsel %vm1151, %v2575, -inf
        %v2598 = vsel %vm1152, %v2580, -inf
        %2599 = vmax.xlane.f32.xlu0 %v2583
        %v2600 = vpop.xlane.xlu0 %2599
        %2601 = vmax.xlane.f32.xlu0 %v2584
        %v2602 = vpop.xlane.xlu0 %2601
        %2603 = vmax.xlane.f32.xlu0 %v2585
        %v2604 = vpop.xlane.xlu0 %2603
        %2605 = vmax.xlane.f32.xlu0 %v2586
        %v2606 = vpop.xlane.xlu0 %2605
        %2607 = vmax.xlane.f32.xlu0 %v2587
        %v2608 = vpop.xlane.xlu0 %2607
        %2609 = vmax.xlane.f32.xlu0 %v2588
        %v2610 = vpop.xlane.xlu0 %2609
        %2611 = vmax.xlane.f32.xlu0 %v2589
        %v2612 = vpop.xlane.xlu0 %2611
        %2613 = vmax.xlane.f32.xlu0 %v2590
        %v2614 = vpop.xlane.xlu0 %2613
        %2615 = vmax.xlane.f32.xlu0 %v2591
        %v2616 = vpop.xlane.xlu0 %2615
        %2617 = vmax.xlane.f32.xlu0 %v2592
        %v2618 = vpop.xlane.xlu0 %2617
        %2619 = vmax.xlane.f32.xlu0 %v2593
        %v2620 = vpop.xlane.xlu0 %2619
        %2621 = vmax.xlane.f32.xlu0 %v2594
        %v2622 = vpop.xlane.xlu0 %2621
        %2623 = vmax.xlane.f32.xlu0 %v2595
        %v2624 = vpop.xlane.xlu0 %2623
        %2625 = vmax.xlane.f32.xlu0 %v2596
        %v2626 = vpop.xlane.xlu0 %2625
        %2627 = vmax.xlane.f32.xlu0 %v2597
        %v2628 = vpop.xlane.xlu0 %2627
        %2629 = vmax.xlane.f32.xlu0 %v2598
        %v2630 = vpop.xlane.xlu0 %2629
        %v2631 = vsub.f32 %v2583, %v2600
        %v2632 = vsub.f32 %v2584, %v2602
        %v2633 = vsub.f32 %v2585, %v2604
        %v2634 = vsub.f32 %v2586, %v2606
        %v2635 = vsub.f32 %v2587, %v2608
        %v2636 = vsub.f32 %v2588, %v2610
        %v2637 = vsub.f32 %v2589, %v2612
        %v2638 = vsub.f32 %v2590, %v2614
        %v2639 = vsub.f32 %v2591, %v2616
        %v2640 = vsub.f32 %v2592, %v2618
        %v2641 = vsub.f32 %v2593, %v2620
        %v2642 = vsub.f32 %v2594, %v2622
        %v2643 = vsub.f32 %v2595, %v2624
        %v2644 = vsub.f32 %v2596, %v2626
        %v2645 = vsub.f32 %v2597, %v2628
        %v2646 = vsub.f32 %v2598, %v2630
        %v2647 = vmul.f32 %v2631, 1.442695
        %v2648 = vpow.pop %v2647
        %v2649 = vmul.f32 %v2632, 1.442695
        %v2650 = vpow.pop %v2649
        %v2651 = vmul.f32 %v2633, 1.442695
        %v2652 = vpow.pop %v2651
        %v2653 = vmul.f32 %v2634, 1.442695
        %v2654 = vpow.pop %v2653
        %v2655 = vmul.f32 %v2635, 1.442695
        %v2656 = vpow.pop %v2655
        %v2657 = vmul.f32 %v2636, 1.442695
        %v2658 = vpow.pop %v2657
        %v2659 = vmul.f32 %v2637, 1.442695
        %v2660 = vpow.pop %v2659
        %v2661 = vmul.f32 %v2638, 1.442695
        %v2662 = vpow.pop %v2661
        %v2663 = vmul.f32 %v2639, 1.442695
        %v2664 = vpow.pop %v2663
        %v2665 = vmul.f32 %v2640, 1.442695
        %v2666 = vpow.pop %v2665
        %v2667 = vmul.f32 %v2641, 1.442695
        %v2668 = vpow.pop %v2667
        %v2669 = vmul.f32 %v2642, 1.442695
        %v2670 = vpow.pop %v2669
        %v2671 = vmul.f32 %v2643, 1.442695
        %v2672 = vpow.pop %v2671
        %v2673 = vmul.f32 %v2644, 1.442695
        %v2674 = vpow.pop %v2673
        %v2675 = vmul.f32 %v2645, 1.442695
        %v2676 = vpow.pop %v2675
        %v2677 = vmul.f32 %v2646, 1.442695
        %v2678 = vpow.pop %v2677
        %2679 = vadd.xlane.f32.xlu0 %v2648
        %v2680 = vpop.xlane.xlu0 %2679
        %2681 = vadd.xlane.f32.xlu0 %v2650
        %v2682 = vpop.xlane.xlu0 %2681
        %2683 = vadd.xlane.f32.xlu0 %v2652
        %v2684 = vpop.xlane.xlu0 %2683
        %2685 = vadd.xlane.f32.xlu0 %v2654
        %v2686 = vpop.xlane.xlu0 %2685
        %2687 = vadd.xlane.f32.xlu0 %v2656
        %v2688 = vpop.xlane.xlu0 %2687
        %2689 = vadd.xlane.f32.xlu0 %v2658
        %v2690 = vpop.xlane.xlu0 %2689
        %2691 = vadd.xlane.f32.xlu0 %v2660
        %v2692 = vpop.xlane.xlu0 %2691
        %2693 = vadd.xlane.f32.xlu0 %v2662
        %v2694 = vpop.xlane.xlu0 %2693
        %2695 = vadd.xlane.f32.xlu0 %v2664
        %v2696 = vpop.xlane.xlu0 %2695
        %2697 = vadd.xlane.f32.xlu0 %v2666
        %v2698 = vpop.xlane.xlu0 %2697
        %2699 = vadd.xlane.f32.xlu0 %v2668
        %v2700 = vpop.xlane.xlu0 %2699
        %2701 = vadd.xlane.f32.xlu0 %v2670
        %v2702 = vpop.xlane.xlu0 %2701
        %2703 = vadd.xlane.f32.xlu0 %v2672
        %v2704 = vpop.xlane.xlu0 %2703
        %2705 = vadd.xlane.f32.xlu0 %v2674
        %v2706 = vpop.xlane.xlu0 %2705
        %2707 = vadd.xlane.f32.xlu0 %v2676
        %v2708 = vpop.xlane.xlu0 %2707
        %2709 = vadd.xlane.f32.xlu0 %v2678
        %v2710 = vpop.xlane.xlu0 %2709
        %v2711 = vrcp.pop %v2680
        %v2712 = vrcp.pop %v2682
        %v2713 = vrcp.pop %v2684
        %v2714 = vrcp.pop %v2686
        %v2715 = vrcp.pop %v2688
        %v2716 = vrcp.pop %v2690
        %v2717 = vrcp.pop %v2692
        %v2718 = vrcp.pop %v2694
        %v2719 = vrcp.pop %v2696
        %v2720 = vrcp.pop %v2698
        %v2721 = vrcp.pop %v2700
        %v2722 = vrcp.pop %v2702
        %v2723 = vrcp.pop %v2704
        %v2724 = vrcp.pop %v2706
        %v2725 = vrcp.pop %v2708
        %v2726 = vrcp.pop %v2710
        %v2727 = vmul.f32 %v2648, %v2711
        %v2728 = vmul.f32 %v2650, %v2712
        %v2729 = vmul.f32 %v2652, %v2713
        %v2730 = vmul.f32 %v2654, %v2714
        %v2731 = vmul.f32 %v2656, %v2715
        %v2732 = vmul.f32 %v2658, %v2716
        %v2733 = vmul.f32 %v2660, %v2717
        %v2734 = vmul.f32 %v2662, %v2718
        %v2735 = vmul.f32 %v2664, %v2719
        %v2736 = vmul.f32 %v2666, %v2720
        %v2737 = vmul.f32 %v2668, %v2721
        %v2738 = vmul.f32 %v2670, %v2722
        %v2739 = vmul.f32 %v2672, %v2723
        %v2740 = vmul.f32 %v2674, %v2724
        %v2741 = vmul.f32 %v2676, %v2725
        %v2742 = vmul.f32 %v2678, %v2726
        %2743 = vmatprep.subr.mxu0 0.0
        %2744 = vmatpush1.msra.mxu0 %v994
        %2745 = vmatprep.subr.mxu0 0.0
        %2746 = vmatpush1.msra.mxu0 %v1000
        %2747 = vmatprep.subr.mxu0 0.0
        %2748 = vmatpush1.msra.mxu0 %v1006
        %2749 = vmatprep.subr.mxu0 0.0
        %2750 = vmatpush1.msra.mxu0 %v1012
        %2751 = vmatprep.subr.mxu0 0.0
        %2752 = vmatpush1.msra.mxu0 %v1018
        %2753 = vmatprep.subr.mxu0 0.0
        %2754 = vmatpush1.msra.mxu0 %v1024
        %2755 = vmatprep.subr.mxu0 0.0
        %2756 = vmatpush1.msra.mxu0 %v1030
        %2757 = vmatprep.subr.mxu0 0.0
        %2758 = vmatpush1.msra.mxu0 %v1036
        %2759 = vmatprep.subr.mxu0 0.0
        %2760 = vmatpush1.msra.mxu0 %v1042
        %2761 = vmatprep.subr.mxu0 0.0
        %2762 = vmatpush1.msra.mxu0 %v1048
        %2763 = vmatprep.subr.mxu0 0.0
        %2764 = vmatpush1.msra.mxu0 %v1054
        %2765 = vmatprep.subr.mxu0 0.0
        %2766 = vmatpush1.msra.mxu0 %v1060
        %2767 = vmatprep.subr.mxu0 0.0
        %2768 = vmatpush1.msra.mxu0 %v1066
        %2769 = vmatprep.subr.mxu0 0.0
        %2770 = vmatpush1.msra.mxu0 %v1072
        %2771 = vmatprep.subr.mxu0 0.0
        %2772 = vmatpush1.msra.mxu0 %v1078
        %2773 = vmatprep.subr.mxu0 0.0
        %2774 = vmatpush1.msra.mxu0 %v1084
        %2775 = vmatprep.subr.mxu0 0.0
        %2776 = vmatpush1.msra.mxu0 0.0
        %2777 = vmatprep.subr.mxu0 0.0
        %2778 = vmatpush1.msra.mxu0 0.0
        %2779 = vmatprep.subr.mxu0 0.0
        %2780 = vmatpush1.msra.mxu0 0.0
        %2781 = vmatprep.subr.mxu0 0.0
        %2782 = vmatpush1.msra.mxu0 0.0
        %2783 = vmatprep.subr.mxu0 0.0
        %2784 = vmatpush1.msra.mxu0 0.0
        %2785 = vmatprep.subr.mxu0 0.0
        %2786 = vmatpush1.msra.mxu0 0.0
        %2787 = vmatprep.subr.mxu0 0.0
        %2788 = vmatpush1.msra.mxu0 0.0
        %2789 = vmatprep.subr.mxu0 0.0
        %2790 = vmatpush1.msra.mxu0 0.0
        %2791 = vmatprep.subr.mxu0 0.0
        %2792 = vmatpush1.msra.mxu0 0.0
        %2793 = vmatprep.subr.mxu0 0.0
        %2794 = vmatpush1.msra.mxu0 0.0
        %2795 = vmatprep.subr.mxu0 0.0
        %2796 = vmatpush1.msra.mxu0 0.0
        %2797 = vmatprep.subr.mxu0 0.0
        %2798 = vmatpush1.msra.mxu0 0.0
        %2799 = vmatprep.subr.mxu0 0.0
        %2800 = vmatpush1.msra.mxu0 0.0
        %2801 = vmatprep.subr.mxu0 0.0
        %2802 = vmatpush1.msra.mxu0 0.0
        %2803 = vmatprep.subr.mxu0 0.0
        %2804 = vmatpush1.msra.mxu0 0.0
        %2805 = vmatprep.subr.mxu0 0.0
        %2806 = vmatpush1.msra.mxu0 0.0
        %2807 = vmatprep.mubr.f32.mxu0 0.0
        %2808 = vmatmul.mubr.f32.gmra.mrb[0].mxu0 %v2727
        %v2809 = vpop.f32.mrb[0].mxu0
        %v2810 = vadd.f32 0.0, %v2809
        %v2811 = vpop.f32.mrb[0].mxu0
        %2812 = vmatprep.mubr.f32.mxu0 0.0
        %2813 = vmatmul.mubr.f32.gmra.mrb[0].mxu0 %v2728
        %v2814 = vpop.f32.mrb[0].mxu0
        %v2815 = vadd.f32 0.0, %v2814
        %v2816 = vpop.f32.mrb[0].mxu0
        %2817 = vmatprep.mubr.f32.mxu0 0.0
        %2818 = vmatmul.mubr.f32.gmra.mrb[0].mxu0 %v2729
        %v2819 = vpop.f32.mrb[0].mxu0
        %v2820 = vadd.f32 0.0, %v2819
        %v2821 = vpop.f32.mrb[0].mxu0
        %2822 = vmatprep.mubr.f32.mxu0 0.0
        %2823 = vmatmul.mubr.f32.gmra.mrb[0].mxu0 %v2730
        %v2824 = vpop.f32.mrb[0].mxu0
        %v2825 = vadd.f32 0.0, %v2824
        %v2826 = vpop.f32.mrb[0].mxu0
        %2827 = vmatprep.mubr.f32.mxu0 0.0
        %2828 = vmatmul.mubr.f32.gmra.mrb[0].mxu0 %v2731
        %v2829 = vpop.f32.mrb[0].mxu0
        %v2830 = vadd.f32 0.0, %v2829
        %v2831 = vpop.f32.mrb[0].mxu0
        %2832 = vmatprep.mubr.f32.mxu0 0.0
        %2833 = vmatmul.mubr.f32.gmra.mrb[0].mxu0 %v2732
        %v2834 = vpop.f32.mrb[0].mxu0
        %v2835 = vadd.f32 0.0, %v2834
        %v2836 = vpop.f32.mrb[0].mxu0
        %2837 = vmatprep.mubr.f32.mxu0 0.0
        %2838 = vmatmul.mubr.f32.gmra.mrb[0].mxu0 %v2733
        %v2839 = vpop.f32.mrb[0].mxu0
        %v2840 = vadd.f32 0.0, %v2839
        %v2841 = vpop.f32.mrb[0].mxu0
        %2842 = vmatprep.mubr.f32.mxu0 0.0
        %2843 = vmatmul.mubr.f32.gmra.mrb[0].mxu0 %v2734
        %v2844 = vpop.f32.mrb[0].mxu0
        %v2845 = vadd.f32 0.0, %v2844
        %v2846 = vpop.f32.mrb[0].mxu0
        %2847 = vmatprep.mubr.f32.mxu0 0.0
        %2848 = vmatmul.mubr.f32.gmra.mrb[0].mxu0 %v2735
        %v2849 = vpop.f32.mrb[0].mxu0
        %v2850 = vadd.f32 0.0, %v2849
        %v2851 = vpop.f32.mrb[0].mxu0
        %2852 = vmatprep.mubr.f32.mxu0 0.0
        %2853 = vmatmul.mubr.f32.gmra.mrb[0].mxu0 %v2736
        %v2854 = vpop.f32.mrb[0].mxu0
        %v2855 = vadd.f32 0.0, %v2854
        %v2856 = vpop.f32.mrb[0].mxu0
        %2857 = vmatprep.mubr.f32.mxu0 0.0
        %2858 = vmatmul.mubr.f32.gmra.mrb[0].mxu0 %v2737
        %v2859 = vpop.f32.mrb[0].mxu0
        %v2860 = vadd.f32 0.0, %v2859
        %v2861 = vpop.f32.mrb[0].mxu0
        %2862 = vmatprep.mubr.f32.mxu0 0.0
        %2863 = vmatmul.mubr.f32.gmra.mrb[0].mxu0 %v2738
        %v2864 = vpop.f32.mrb[0].mxu0
        %v2865 = vadd.f32 0.0, %v2864
        %v2866 = vpop.f32.mrb[0].mxu0
        %2867 = vmatprep.mubr.f32.mxu0 0.0
        %2868 = vmatmul.mubr.f32.gmra.mrb[0].mxu0 %v2739
        %v2869 = vpop.f32.mrb[0].mxu0
        %v2870 = vadd.f32 0.0, %v2869
        %v2871 = vpop.f32.mrb[0].mxu0
        %2872 = vmatprep.mubr.f32.mxu0 0.0
        %2873 = vmatmul.mubr.f32.gmra.mrb[0].mxu0 %v2740
        %v2874 = vpop.f32.mrb[0].mxu0
        %v2875 = vadd.f32 0.0, %v2874
        %v2876 = vpop.f32.mrb[0].mxu0
        %2877 = vmatprep.mubr.f32.mxu0 0.0
        %2878 = vmatmul.mubr.f32.gmra.mrb[0].mxu0 %v2741
        %v2879 = vpop.f32.mrb[0].mxu0
        %v2880 = vadd.f32 0.0, %v2879
        %v2881 = vpop.f32.mrb[0].mxu0
        %2882 = vmatprep.mubr.f32.mxu0 0.0
        %2883 = vmatmul.mubr.f32.gmra.mrb[0].mxu0 %v2742
        %v2884 = vpop.f32.mrb[0].mxu0
        %v2885 = vadd.f32 0.0, %v2884
        %v2886 = vpop.f32.mrb[0].mxu0
        %2887 = vdwg.mxu0
        %2888 = vrot.lane.b32.xlu0 %v1087, 64
        %v2889 = vpop.permute.xlu0 %2888
        %2890 = vrot.lane.b32.xlu0 %v1089, 64
        %v2891 = vpop.permute.xlu0 %2890
        %2892 = vrot.lane.b32.xlu0 %v1091, 64
        %v2893 = vpop.permute.xlu0 %2892
        %2894 = vrot.lane.b32.xlu0 %v1093, 64
        %v2895 = vpop.permute.xlu0 %2894
        %2896 = vrot.lane.b32.xlu0 %v1095, 64
        %v2897 = vpop.permute.xlu0 %2896
        %2898 = vrot.lane.b32.xlu0 %v1097, 64
        %v2899 = vpop.permute.xlu0 %2898
        %2900 = vrot.lane.b32.xlu0 %v1099, 64
        %v2901 = vpop.permute.xlu0 %2900
        %2902 = vrot.lane.b32.xlu0 %v1101, 64
        %v2903 = vpop.permute.xlu0 %2902
        %2904 = vrot.lane.b32.xlu0 %v1103, 64
        %v2905 = vpop.permute.xlu0 %2904
        %2906 = vrot.lane.b32.xlu0 %v1105, 64
        %v2907 = vpop.permute.xlu0 %2906
        %2908 = vrot.lane.b32.xlu0 %v1107, 64
        %v2909 = vpop.permute.xlu0 %2908
        %2910 = vrot.lane.b32.xlu0 %v1109, 64
        %v2911 = vpop.permute.xlu0 %2910
        %2912 = vrot.lane.b32.xlu0 %v1111, 64
        %v2913 = vpop.permute.xlu0 %2912
        %2914 = vrot.lane.b32.xlu0 %v1113, 64
        %v2915 = vpop.permute.xlu0 %2914
        %2916 = vrot.lane.b32.xlu0 %v1115, 64
        %v2917 = vpop.permute.xlu0 %2916
        %2918 = vrot.lane.b32.xlu0 %v1117, 64
        %v2919 = vpop.permute.xlu0 %2918
        %2920 = vrot.lane.b32.xlu0 %v833, 64
        %v2921 = vpop.permute.xlu0 %2920
        %2922 = vrot.lane.b32.xlu0 %v839, 64
        %v2923 = vpop.permute.xlu0 %2922
        %2924 = vrot.lane.b32.xlu0 %v845, 64
        %v2925 = vpop.permute.xlu0 %2924
        %2926 = vrot.lane.b32.xlu0 %v851, 64
        %v2927 = vpop.permute.xlu0 %2926
        %2928 = vrot.lane.b32.xlu0 %v857, 64
        %v2929 = vpop.permute.xlu0 %2928
        %2930 = vrot.lane.b32.xlu0 %v863, 64
        %v2931 = vpop.permute.xlu0 %2930
        %2932 = vrot.lane.b32.xlu0 %v869, 64
        %v2933 = vpop.permute.xlu0 %2932
        %2934 = vrot.lane.b32.xlu0 %v875, 64
        %v2935 = vpop.permute.xlu0 %2934
        %2936 = vrot.lane.b32.xlu0 %v881, 64
        %v2937 = vpop.permute.xlu0 %2936
        %2938 = vrot.lane.b32.xlu0 %v887, 64
        %v2939 = vpop.permute.xlu0 %2938
        %2940 = vrot.lane.b32.xlu0 %v893, 64
        %v2941 = vpop.permute.xlu0 %2940
        %2942 = vrot.lane.b32.xlu0 %v899, 64
        %v2943 = vpop.permute.xlu0 %2942
        %2944 = vrot.lane.b32.xlu0 %v905, 64
        %v2945 = vpop.permute.xlu0 %2944
        %2946 = vrot.lane.b32.xlu0 %v911, 64
        %v2947 = vpop.permute.xlu0 %2946
        %2948 = vrot.lane.b32.xlu0 %v917, 64
        %v2949 = vpop.permute.xlu0 %2948
        %2950 = vrot.lane.b32.xlu0 %v923, 64
        %v2951 = vpop.permute.xlu0 %2950
        %v2952 = vsel %vm1153, %v2889, 0
        %v2954 = vsel %vm1153, %v2891, 0
        %v2956 = vsel %vm1153, %v2893, 0
        %v2958 = vsel %vm1153, %v2895, 0
        %v2960 = vsel %vm1153, %v2897, 0
        %v2962 = vsel %vm1153, %v2899, 0
        %v2964 = vsel %vm1153, %v2901, 0
        %v2966 = vsel %vm1153, %v2903, 0
        %v2968 = vsel %vm1153, %v2905, 0
        %v2970 = vsel %vm1153, %v2907, 0
        %v2972 = vsel %vm1153, %v2909, 0
        %v2974 = vsel %vm1153, %v2911, 0
        %v2976 = vsel %vm1153, %v2913, 0
        %v2978 = vsel %vm1153, %v2915, 0
        %v2980 = vsel %vm1153, %v2917, 0
        %v2982 = vsel %vm1153, %v2919, 0
        %v2984 = vsel %vm1153, %v2921, 0
        %v2986 = vsel %vm1153, %v2923, 0
        %v2988 = vsel %vm1153, %v2925, 0
        %v2990 = vsel %vm1153, %v2927, 0
        %v2992 = vsel %vm1153, %v2929, 0
        %v2994 = vsel %vm1153, %v2931, 0
        %v2996 = vsel %vm1153, %v2933, 0
        %v2998 = vsel %vm1153, %v2935, 0
        %v3000 = vsel %vm1153, %v2937, 0
        %v3002 = vsel %vm1153, %v2939, 0
        %v3004 = vsel %vm1153, %v2941, 0
        %v3006 = vsel %vm1153, %v2943, 0
        %v3008 = vsel %vm1153, %v2945, 0
        %v3010 = vsel %vm1153, %v2947, 0
        %v3012 = vsel %vm1153, %v2949, 0
        %v3014 = vsel %vm1153, %v2951, 0
        %3016 = vmatprep.subr.mxu0 0.0
        %3017 = vmatpush1.xpose.msra.mxu0 %v2984
        %3018 = vmatprep.subr.mxu0 0.0
        %3019 = vmatpush1.xpose.msra.mxu0 %v2986
        %3020 = vmatprep.subr.mxu0 0.0
        %3021 = vmatpush1.xpose.msra.mxu0 %v2988
        %3022 = vmatprep.subr.mxu0 0.0
        %3023 = vmatpush1.xpose.msra.mxu0 %v2990
        %3024 = vmatprep.subr.mxu0 0.0
        %3025 = vmatpush1.xpose.msra.mxu0 %v2992
        %3026 = vmatprep.subr.mxu0 0.0
        %3027 = vmatpush1.xpose.msra.mxu0 %v2994
        %3028 = vmatprep.subr.mxu0 0.0
        %3029 = vmatpush1.xpose.msra.mxu0 %v2996
        %3030 = vmatprep.subr.mxu0 0.0
        %3031 = vmatpush1.xpose.msra.mxu0 %v2998
        %3032 = vmatprep.subr.mxu0 0.0
        %3033 = vmatpush1.xpose.msra.mxu0 %v3000
        %3034 = vmatprep.subr.mxu0 0.0
        %3035 = vmatpush1.xpose.msra.mxu0 %v3002
        %3036 = vmatprep.subr.mxu0 0.0
        %3037 = vmatpush1.xpose.msra.mxu0 %v3004
        %3038 = vmatprep.subr.mxu0 0.0
        %3039 = vmatpush1.xpose.msra.mxu0 %v3006
        %3040 = vmatprep.subr.mxu0 0.0
        %3041 = vmatpush1.xpose.msra.mxu0 %v3008
        %3042 = vmatprep.subr.mxu0 0.0
        %3043 = vmatpush1.xpose.msra.mxu0 %v3010
        %3044 = vmatprep.subr.mxu0 0.0
        %3045 = vmatpush1.xpose.msra.mxu0 %v3012
        %3046 = vmatprep.subr.mxu0 0.0
        %3047 = vmatpush1.xpose.msra.mxu0 %v3014
        %3048 = vmatprep.subr.mxu0 0.0
        %3049 = vmatpush1.xpose.msra.mxu0 0.0
        %3050 = vmatprep.subr.mxu0 0.0
        %3051 = vmatpush1.xpose.msra.mxu0 0.0
        %3052 = vmatprep.subr.mxu0 0.0
        %3053 = vmatpush1.xpose.msra.mxu0 0.0
        %3054 = vmatprep.subr.mxu0 0.0
        %3055 = vmatpush1.xpose.msra.mxu0 0.0
        %3056 = vmatprep.subr.mxu0 0.0
        %3057 = vmatpush1.xpose.msra.mxu0 0.0
        %3058 = vmatprep.subr.mxu0 0.0
        %3059 = vmatpush1.xpose.msra.mxu0 0.0
        %3060 = vmatprep.subr.mxu0 0.0
        %3061 = vmatpush1.xpose.msra.mxu0 0.0
        %3062 = vmatprep.subr.mxu0 0.0
        %3063 = vmatpush1.xpose.msra.mxu0 0.0
        %3064 = vmatprep.subr.mxu0 0.0
        %3065 = vmatpush1.xpose.msra.mxu0 0.0
        %3066 = vmatprep.subr.mxu0 0.0
        %3067 = vmatpush1.xpose.msra.mxu0 0.0
        %3068 = vmatprep.subr.mxu0 0.0
        %3069 = vmatpush1.xpose.msra.mxu0 0.0
        %3070 = vmatprep.subr.mxu0 0.0
        %3071 = vmatpush1.xpose.msra.mxu0 0.0
        %3072 = vmatprep.subr.mxu0 0.0
        %3073 = vmatpush1.xpose.msra.mxu0 0.0
        %3074 = vmatprep.subr.mxu0 0.0
        %3075 = vmatpush1.xpose.msra.mxu0 0.0
        %3076 = vmatprep.subr.mxu0 0.0
        %3077 = vmatpush1.xpose.msra.mxu0 0.0
        %3078 = vmatprep.subr.mxu0 0.0
        %3079 = vmatpush1.xpose.msra.mxu0 0.0
        %3080 = vmatprep.mubr.f32.mxu0 0.0
        %3081 = vmatmul.mubr.f32.gmra.mrb[0].mxu0 %v2952
        %v3082 = vpop.f32.mrb[0].mxu0
        %v3083 = vadd.f32 0.0, %v3082
        %v3084 = vpop.f32.mrb[0].mxu0
        %3085 = vmatprep.mubr.f32.mxu0 0.0
        %3086 = vmatmul.mubr.f32.gmra.mrb[0].mxu0 %v2954
        %v3087 = vpop.f32.mrb[0].mxu0
        %v3088 = vadd.f32 0.0, %v3087
        %v3089 = vpop.f32.mrb[0].mxu0
        %3090 = vmatprep.mubr.f32.mxu0 0.0
        %3091 = vmatmul.mubr.f32.gmra.mrb[0].mxu0 %v2956
        %v3092 = vpop.f32.mrb[0].mxu0
        %v3093 = vadd.f32 0.0, %v3092
        %v3094 = vpop.f32.mrb[0].mxu0
        %3095 = vmatprep.mubr.f32.mxu0 0.0
        %3096 = vmatmul.mubr.f32.gmra.mrb[0].mxu0 %v2958
        %v3097 = vpop.f32.mrb[0].mxu0
        %v3098 = vadd.f32 0.0, %v3097
        %v3099 = vpop.f32.mrb[0].mxu0
        %3100 = vmatprep.mubr.f32.mxu0 0.0
        %3101 = vmatmul.mubr.f32.gmra.mrb[0].mxu0 %v2960
        %v3102 = vpop.f32.mrb[0].mxu0
        %v3103 = vadd.f32 0.0, %v3102
        %v3104 = vpop.f32.mrb[0].mxu0
        %3105 = vmatprep.mubr.f32.mxu0 0.0
        %3106 = vmatmul.mubr.f32.gmra.mrb[0].mxu0 %v2962
        %v3107 = vpop.f32.mrb[0].mxu0
        %v3108 = vadd.f32 0.0, %v3107
        %v3109 = vpop.f32.mrb[0].mxu0
        %3110 = vmatprep.mubr.f32.mxu0 0.0
        %3111 = vmatmul.mubr.f32.gmra.mrb[0].mxu0 %v2964
        %v3112 = vpop.f32.mrb[0].mxu0
        %v3113 = vadd.f32 0.0, %v3112
        %v3114 = vpop.f32.mrb[0].mxu0
        %3115 = vmatprep.mubr.f32.mxu0 0.0
        %3116 = vmatmul.mubr.f32.gmra.mrb[0].mxu0 %v2966
        %v3117 = vpop.f32.mrb[0].mxu0
        %v3118 = vadd.f32 0.0, %v3117
        %v3119 = vpop.f32.mrb[0].mxu0
        %3120 = vmatprep.mubr.f32.mxu0 0.0
        %3121 = vmatmul.mubr.f32.gmra.mrb[0].mxu0 %v2968
        %v3122 = vpop.f32.mrb[0].mxu0
        %v3123 = vadd.f32 0.0, %v3122
        %v3124 = vpop.f32.mrb[0].mxu0
        %3125 = vmatprep.mubr.f32.mxu0 0.0
        %3126 = vmatmul.mubr.f32.gmra.mrb[0].mxu0 %v2970
        %v3127 = vpop.f32.mrb[0].mxu0
        %v3128 = vadd.f32 0.0, %v3127
        %v3129 = vpop.f32.mrb[0].mxu0
        %3130 = vmatprep.mubr.f32.mxu0 0.0
        %3131 = vmatmul.mubr.f32.gmra.mrb[0].mxu0 %v2972
        %v3132 = vpop.f32.mrb[0].mxu0
        %v3133 = vadd.f32 0.0, %v3132
        %v3134 = vpop.f32.mrb[0].mxu0
        %3135 = vmatprep.mubr.f32.mxu0 0.0
        %3136 = vmatmul.mubr.f32.gmra.mrb[0].mxu0 %v2974
        %v3137 = vpop.f32.mrb[0].mxu0
        %v3138 = vadd.f32 0.0, %v3137
        %v3139 = vpop.f32.mrb[0].mxu0
        %3140 = vmatprep.mubr.f32.mxu0 0.0
        %3141 = vmatmul.mubr.f32.gmra.mrb[0].mxu0 %v2976
        %v3142 = vpop.f32.mrb[0].mxu0
        %v3143 = vadd.f32 0.0, %v3142
        %v3144 = vpop.f32.mrb[0].mxu0
        %3145 = vmatprep.mubr.f32.mxu0 0.0
        %3146 = vmatmul.mubr.f32.gmra.mrb[0].mxu0 %v2978
        %v3147 = vpop.f32.mrb[0].mxu0
        %v3148 = vadd.f32 0.0, %v3147
        %v3149 = vpop.f32.mrb[0].mxu0
        %3150 = vmatprep.mubr.f32.mxu0 0.0
        %3151 = vmatmul.mubr.f32.gmra.mrb[0].mxu0 %v2980
        %v3152 = vpop.f32.mrb[0].mxu0
        %v3153 = vadd.f32 0.0, %v3152
        %v3154 = vpop.f32.mrb[0].mxu0
        %3155 = vmatprep.mubr.f32.mxu0 0.0
        %3156 = vmatmul.mubr.f32.gmra.mrb[0].mxu0 %v2982
        %v3157 = vpop.f32.mrb[0].mxu0
        %v3158 = vadd.f32 0.0, %v3157
        %v3159 = vpop.f32.mrb[0].mxu0
        %3160 = vdwg.mxu0
        %v3161 = vsel %vm1137, %v3083, -inf
        %v3162 = vsel %vm1138, %v3088, -inf
        %v3163 = vsel %vm1139, %v3093, -inf
        %v3164 = vsel %vm1140, %v3098, -inf
        %v3165 = vsel %vm1141, %v3103, -inf
        %v3166 = vsel %vm1142, %v3108, -inf
        %v3167 = vsel %vm1143, %v3113, -inf
        %v3168 = vsel %vm1144, %v3118, -inf
        %v3169 = vsel %vm1145, %v3123, -inf
        %v3170 = vsel %vm1146, %v3128, -inf
        %v3171 = vsel %vm1147, %v3133, -inf
        %v3172 = vsel %vm1148, %v3138, -inf
        %v3173 = vsel %vm1149, %v3143, -inf
        %v3174 = vsel %vm1150, %v3148, -inf
        %v3175 = vsel %vm1151, %v3153, -inf
        %v3176 = vsel %vm1152, %v3158, -inf
        %3177 = vmax.xlane.f32.xlu0 %v3161
        %v3178 = vpop.xlane.xlu0 %3177
        %3179 = vmax.xlane.f32.xlu0 %v3162
        %v3180 = vpop.xlane.xlu0 %3179
        %3181 = vmax.xlane.f32.xlu0 %v3163
        %v3182 = vpop.xlane.xlu0 %3181
        %3183 = vmax.xlane.f32.xlu0 %v3164
        %v3184 = vpop.xlane.xlu0 %3183
        %3185 = vmax.xlane.f32.xlu0 %v3165
        %v3186 = vpop.xlane.xlu0 %3185
        %3187 = vmax.xlane.f32.xlu0 %v3166
        %v3188 = vpop.xlane.xlu0 %3187
        %3189 = vmax.xlane.f32.xlu0 %v3167
        %v3190 = vpop.xlane.xlu0 %3189
        %3191 = vmax.xlane.f32.xlu0 %v3168
        %v3192 = vpop.xlane.xlu0 %3191
        %3193 = vmax.xlane.f32.xlu0 %v3169
        %v3194 = vpop.xlane.xlu0 %3193
        %3195 = vmax.xlane.f32.xlu0 %v3170
        %v3196 = vpop.xlane.xlu0 %3195
        %3197 = vmax.xlane.f32.xlu0 %v3171
        %v3198 = vpop.xlane.xlu0 %3197
        %3199 = vmax.xlane.f32.xlu0 %v3172
        %v3200 = vpop.xlane.xlu0 %3199
        %3201 = vmax.xlane.f32.xlu0 %v3173
        %v3202 = vpop.xlane.xlu0 %3201
        %3203 = vmax.xlane.f32.xlu0 %v3174
        %v3204 = vpop.xlane.xlu0 %3203
        %3205 = vmax.xlane.f32.xlu0 %v3175
        %v3206 = vpop.xlane.xlu0 %3205
        %3207 = vmax.xlane.f32.xlu0 %v3176
        %v3208 = vpop.xlane.xlu0 %3207
        %v3209 = vsub.f32 %v3161, %v3178
        %v3210 = vsub.f32 %v3162, %v3180
        %v3211 = vsub.f32 %v3163, %v3182
        %v3212 = vsub.f32 %v3164, %v3184
        %v3213 = vsub.f32 %v3165, %v3186
        %v3214 = vsub.f32 %v3166, %v3188
        %v3215 = vsub.f32 %v3167, %v3190
        %v3216 = vsub.f32 %v3168, %v3192
        %v3217 = vsub.f32 %v3169, %v3194
        %v3218 = vsub.f32 %v3170, %v3196
        %v3219 = vsub.f32 %v3171, %v3198
        %v3220 = vsub.f32 %v3172, %v3200
        %v3221 = vsub.f32 %v3173, %v3202
        %v3222 = vsub.f32 %v3174, %v3204
        %v3223 = vsub.f32 %v3175, %v3206
        %v3224 = vsub.f32 %v3176, %v3208
        %v3225 = vmul.f32 %v3209, 1.442695
        %v3226 = vpow.pop %v3225
        %v3227 = vmul.f32 %v3210, 1.442695
        %v3228 = vpow.pop %v3227
        %v3229 = vmul.f32 %v3211, 1.442695
        %v3230 = vpow.pop %v3229
        %v3231 = vmul.f32 %v3212, 1.442695
        %v3232 = vpow.pop %v3231
        %v3233 = vmul.f32 %v3213, 1.442695
        %v3234 = vpow.pop %v3233
        %v3235 = vmul.f32 %v3214, 1.442695
        %v3236 = vpow.pop %v3235
        %v3237 = vmul.f32 %v3215, 1.442695
        %v3238 = vpow.pop %v3237
        %v3239 = vmul.f32 %v3216, 1.442695
        %v3240 = vpow.pop %v3239
        %v3241 = vmul.f32 %v3217, 1.442695
        %v3242 = vpow.pop %v3241
        %v3243 = vmul.f32 %v3218, 1.442695
        %v3244 = vpow.pop %v3243
        %v3245 = vmul.f32 %v3219, 1.442695
        %v3246 = vpow.pop %v3245
        %v3247 = vmul.f32 %v3220, 1.442695
        %v3248 = vpow.pop %v3247
        %v3249 = vmul.f32 %v3221, 1.442695
        %v3250 = vpow.pop %v3249
        %v3251 = vmul.f32 %v3222, 1.442695
        %v3252 = vpow.pop %v3251
        %v3253 = vmul.f32 %v3223, 1.442695
        %v3254 = vpow.pop %v3253
        %v3255 = vmul.f32 %v3224, 1.442695
        %v3256 = vpow.pop %v3255
        %3257 = vadd.xlane.f32.xlu0 %v3226
        %v3258 = vpop.xlane.xlu0 %3257
        %3259 = vadd.xlane.f32.xlu0 %v3228
        %v3260 = vpop.xlane.xlu0 %3259
        %3261 = vadd.xlane.f32.xlu0 %v3230
        %v3262 = vpop.xlane.xlu0 %3261
        %3263 = vadd.xlane.f32.xlu0 %v3232
        %v3264 = vpop.xlane.xlu0 %3263
        %3265 = vadd.xlane.f32.xlu0 %v3234
        %v3266 = vpop.xlane.xlu0 %3265
        %3267 = vadd.xlane.f32.xlu0 %v3236
        %v3268 = vpop.xlane.xlu0 %3267
        %3269 = vadd.xlane.f32.xlu0 %v3238
        %v3270 = vpop.xlane.xlu0 %3269
        %3271 = vadd.xlane.f32.xlu0 %v3240
        %v3272 = vpop.xlane.xlu0 %3271
        %3273 = vadd.xlane.f32.xlu0 %v3242
        %v3274 = vpop.xlane.xlu0 %3273
        %3275 = vadd.xlane.f32.xlu0 %v3244
        %v3276 = vpop.xlane.xlu0 %3275
        %3277 = vadd.xlane.f32.xlu0 %v3246
        %v3278 = vpop.xlane.xlu0 %3277
        %3279 = vadd.xlane.f32.xlu0 %v3248
        %v3280 = vpop.xlane.xlu0 %3279
        %3281 = vadd.xlane.f32.xlu0 %v3250
        %v3282 = vpop.xlane.xlu0 %3281
        %3283 = vadd.xlane.f32.xlu0 %v3252
        %v3284 = vpop.xlane.xlu0 %3283
        %3285 = vadd.xlane.f32.xlu0 %v3254
        %v3286 = vpop.xlane.xlu0 %3285
        %3287 = vadd.xlane.f32.xlu0 %v3256
        %v3288 = vpop.xlane.xlu0 %3287
        %v3289 = vrcp.pop %v3258
        %v3290 = vrcp.pop %v3260
        %v3291 = vrcp.pop %v3262
        %v3292 = vrcp.pop %v3264
        %v3293 = vrcp.pop %v3266
        %v3294 = vrcp.pop %v3268
        %v3295 = vrcp.pop %v3270
        %v3296 = vrcp.pop %v3272
        %v3297 = vrcp.pop %v3274
        %v3298 = vrcp.pop %v3276
        %v3299 = vrcp.pop %v3278
        %v3300 = vrcp.pop %v3280
        %v3301 = vrcp.pop %v3282
        %v3302 = vrcp.pop %v3284
        %v3303 = vrcp.pop %v3286
        %v3304 = vrcp.pop %v3288
        %v3305 = vmul.f32 %v3226, %v3289
        %v3306 = vmul.f32 %v3228, %v3290
        %v3307 = vmul.f32 %v3230, %v3291
        %v3308 = vmul.f32 %v3232, %v3292
        %v3309 = vmul.f32 %v3234, %v3293
        %v3310 = vmul.f32 %v3236, %v3294
        %v3311 = vmul.f32 %v3238, %v3295
        %v3312 = vmul.f32 %v3240, %v3296
        %v3313 = vmul.f32 %v3242, %v3297
        %v3314 = vmul.f32 %v3244, %v3298
        %v3315 = vmul.f32 %v3246, %v3299
        %v3316 = vmul.f32 %v3248, %v3300
        %v3317 = vmul.f32 %v3250, %v3301
        %v3318 = vmul.f32 %v3252, %v3302
        %v3319 = vmul.f32 %v3254, %v3303
        %v3320 = vmul.f32 %v3256, %v3304
        %3337 = vrot.lane.b32.xlu0 %v994, 64
        %v3338 = vpop.permute.xlu0 %3337
        %3339 = vrot.lane.b32.xlu0 %v1000, 64
        %v3340 = vpop.permute.xlu0 %3339
        %3341 = vrot.lane.b32.xlu0 %v1006, 64
        %v3342 = vpop.permute.xlu0 %3341
        %3343 = vrot.lane.b32.xlu0 %v1012, 64
        %v3344 = vpop.permute.xlu0 %3343
        %3345 = vrot.lane.b32.xlu0 %v1018, 64
        %v3346 = vpop.permute.xlu0 %3345
        %3347 = vrot.lane.b32.xlu0 %v1024, 64
        %v3348 = vpop.permute.xlu0 %3347
        %3349 = vrot.lane.b32.xlu0 %v1030, 64
        %v3350 = vpop.permute.xlu0 %3349
        %3351 = vrot.lane.b32.xlu0 %v1036, 64
        %v3352 = vpop.permute.xlu0 %3351
        %3353 = vrot.lane.b32.xlu0 %v1042, 64
        %v3354 = vpop.permute.xlu0 %3353
        %3355 = vrot.lane.b32.xlu0 %v1048, 64
        %v3356 = vpop.permute.xlu0 %3355
        %3357 = vrot.lane.b32.xlu0 %v1054, 64
        %v3358 = vpop.permute.xlu0 %3357
        %3359 = vrot.lane.b32.xlu0 %v1060, 64
        %v3360 = vpop.permute.xlu0 %3359
        %3361 = vrot.lane.b32.xlu0 %v1066, 64
        %v3362 = vpop.permute.xlu0 %3361
        %3363 = vrot.lane.b32.xlu0 %v1072, 64
        %v3364 = vpop.permute.xlu0 %3363
        %3365 = vrot.lane.b32.xlu0 %v1078, 64
        %v3366 = vpop.permute.xlu0 %3365
        %3367 = vrot.lane.b32.xlu0 %v1084, 64
        %v3368 = vpop.permute.xlu0 %3367
        %3385 = vmatprep.subr.mxu0 0.0
        %3386 = vmatpush1.msra.mxu0 %v3338
        %3387 = vmatprep.subr.mxu0 0.0
        %3388 = vmatpush1.msra.mxu0 %v3340
        %3389 = vmatprep.subr.mxu0 0.0
        %3390 = vmatpush1.msra.mxu0 %v3342
        %3391 = vmatprep.subr.mxu0 0.0
        %3392 = vmatpush1.msra.mxu0 %v3344
        %3393 = vmatprep.subr.mxu0 0.0
        %3394 = vmatpush1.msra.mxu0 %v3346
        %3395 = vmatprep.subr.mxu0 0.0
        %3396 = vmatpush1.msra.mxu0 %v3348
        %3397 = vmatprep.subr.mxu0 0.0
        %3398 = vmatpush1.msra.mxu0 %v3350
        %3399 = vmatprep.subr.mxu0 0.0
        %3400 = vmatpush1.msra.mxu0 %v3352
        %3401 = vmatprep.subr.mxu0 0.0
        %3402 = vmatpush1.msra.mxu0 %v3354
        %3403 = vmatprep.subr.mxu0 0.0
        %3404 = vmatpush1.msra.mxu0 %v3356
        %3405 = vmatprep.subr.mxu0 0.0
        %3406 = vmatpush1.msra.mxu0 %v3358
        %3407 = vmatprep.subr.mxu0 0.0
        %3408 = vmatpush1.msra.mxu0 %v3360
        %3409 = vmatprep.subr.mxu0 0.0
        %3410 = vmatpush1.msra.mxu0 %v3362
        %3411 = vmatprep.subr.mxu0 0.0
        %3412 = vmatpush1.msra.mxu0 %v3364
        %3413 = vmatprep.subr.mxu0 0.0
        %3414 = vmatpush1.msra.mxu0 %v3366
        %3415 = vmatprep.subr.mxu0 0.0
        %3416 = vmatpush1.msra.mxu0 %v3368
        %3417 = vmatprep.subr.mxu0 0.0
        %3418 = vmatpush1.msra.mxu0 0.0
        %3419 = vmatprep.subr.mxu0 0.0
        %3420 = vmatpush1.msra.mxu0 0.0
        %3421 = vmatprep.subr.mxu0 0.0
        %3422 = vmatpush1.msra.mxu0 0.0
        %3423 = vmatprep.subr.mxu0 0.0
        %3424 = vmatpush1.msra.mxu0 0.0
        %3425 = vmatprep.subr.mxu0 0.0
        %3426 = vmatpush1.msra.mxu0 0.0
        %3427 = vmatprep.subr.mxu0 0.0
        %3428 = vmatpush1.msra.mxu0 0.0
        %3429 = vmatprep.subr.mxu0 0.0
        %3430 = vmatpush1.msra.mxu0 0.0
        %3431 = vmatprep.subr.mxu0 0.0
        %3432 = vmatpush1.msra.mxu0 0.0
        %3433 = vmatprep.subr.mxu0 0.0
        %3434 = vmatpush1.msra.mxu0 0.0
        %3435 = vmatprep.subr.mxu0 0.0
        %3436 = vmatpush1.msra.mxu0 0.0
        %3437 = vmatprep.subr.mxu0 0.0
        %3438 = vmatpush1.msra.mxu0 0.0
        %3439 = vmatprep.subr.mxu0 0.0
        %3440 = vmatpush1.msra.mxu0 0.0
        %3441 = vmatprep.subr.mxu0 0.0
        %3442 = vmatpush1.msra.mxu0 0.0
        %3443 = vmatprep.subr.mxu0 0.0
        %3444 = vmatpush1.msra.mxu0 0.0
        %3445 = vmatprep.subr.mxu0 0.0
        %3446 = vmatpush1.msra.mxu0 0.0
        %3447 = vmatprep.subr.mxu0 0.0
        %3448 = vmatpush1.msra.mxu0 0.0
        %3449 = vmatprep.mubr.f32.mxu0 0.0
        %3450 = vmatmul.mubr.f32.gmra.mrb[0].mxu0 %v3305
        %v3451 = vpop.f32.mrb[0].mxu0
        %v3452 = vadd.f32 0.0, %v3451
        %v3453 = vpop.f32.mrb[0].mxu0
        %3454 = vmatprep.mubr.f32.mxu0 0.0
        %3455 = vmatmul.mubr.f32.gmra.mrb[0].mxu0 %v3306
        %v3456 = vpop.f32.mrb[0].mxu0
        %v3457 = vadd.f32 0.0, %v3456
        %v3458 = vpop.f32.mrb[0].mxu0
        %3459 = vmatprep.mubr.f32.mxu0 0.0
        %3460 = vmatmul.mubr.f32.gmra.mrb[0].mxu0 %v3307
        %v3461 = vpop.f32.mrb[0].mxu0
        %v3462 = vadd.f32 0.0, %v3461
        %v3463 = vpop.f32.mrb[0].mxu0
        %3464 = vmatprep.mubr.f32.mxu0 0.0
        %3465 = vmatmul.mubr.f32.gmra.mrb[0].mxu0 %v3308
        %v3466 = vpop.f32.mrb[0].mxu0
        %v3467 = vadd.f32 0.0, %v3466
        %v3468 = vpop.f32.mrb[0].mxu0
        %3469 = vmatprep.mubr.f32.mxu0 0.0
        %3470 = vmatmul.mubr.f32.gmra.mrb[0].mxu0 %v3309
        %v3471 = vpop.f32.mrb[0].mxu0
        %v3472 = vadd.f32 0.0, %v3471
        %v3473 = vpop.f32.mrb[0].mxu0
        %3474 = vmatprep.mubr.f32.mxu0 0.0
        %3475 = vmatmul.mubr.f32.gmra.mrb[0].mxu0 %v3310
        %v3476 = vpop.f32.mrb[0].mxu0
        %v3477 = vadd.f32 0.0, %v3476
        %v3478 = vpop.f32.mrb[0].mxu0
        %3479 = vmatprep.mubr.f32.mxu0 0.0
        %3480 = vmatmul.mubr.f32.gmra.mrb[0].mxu0 %v3311
        %v3481 = vpop.f32.mrb[0].mxu0
        %v3482 = vadd.f32 0.0, %v3481
        %v3483 = vpop.f32.mrb[0].mxu0
        %3484 = vmatprep.mubr.f32.mxu0 0.0
        %3485 = vmatmul.mubr.f32.gmra.mrb[0].mxu0 %v3312
        %v3486 = vpop.f32.mrb[0].mxu0
        %v3487 = vadd.f32 0.0, %v3486
        %v3488 = vpop.f32.mrb[0].mxu0
        %3489 = vmatprep.mubr.f32.mxu0 0.0
        %3490 = vmatmul.mubr.f32.gmra.mrb[0].mxu0 %v3313
        %v3491 = vpop.f32.mrb[0].mxu0
        %v3492 = vadd.f32 0.0, %v3491
        %v3493 = vpop.f32.mrb[0].mxu0
        %3494 = vmatprep.mubr.f32.mxu0 0.0
        %3495 = vmatmul.mubr.f32.gmra.mrb[0].mxu0 %v3314
        %v3496 = vpop.f32.mrb[0].mxu0
        %v3497 = vadd.f32 0.0, %v3496
        %v3498 = vpop.f32.mrb[0].mxu0
        %3499 = vmatprep.mubr.f32.mxu0 0.0
        %3500 = vmatmul.mubr.f32.gmra.mrb[0].mxu0 %v3315
        %v3501 = vpop.f32.mrb[0].mxu0
        %v3502 = vadd.f32 0.0, %v3501
        %v3503 = vpop.f32.mrb[0].mxu0
        %3504 = vmatprep.mubr.f32.mxu0 0.0
        %3505 = vmatmul.mubr.f32.gmra.mrb[0].mxu0 %v3316
        %v3506 = vpop.f32.mrb[0].mxu0
        %v3507 = vadd.f32 0.0, %v3506
        %v3508 = vpop.f32.mrb[0].mxu0
        %3509 = vmatprep.mubr.f32.mxu0 0.0
        %3510 = vmatmul.mubr.f32.gmra.mrb[0].mxu0 %v3317
        %v3511 = vpop.f32.mrb[0].mxu0
        %v3512 = vadd.f32 0.0, %v3511
        %v3513 = vpop.f32.mrb[0].mxu0
        %3514 = vmatprep.mubr.f32.mxu0 0.0
        %3515 = vmatmul.mubr.f32.gmra.mrb[0].mxu0 %v3318
        %v3516 = vpop.f32.mrb[0].mxu0
        %v3517 = vadd.f32 0.0, %v3516
        %v3518 = vpop.f32.mrb[0].mxu0
        %3519 = vmatprep.mubr.f32.mxu0 0.0
        %3520 = vmatmul.mubr.f32.gmra.mrb[0].mxu0 %v3319
        %v3521 = vpop.f32.mrb[0].mxu0
        %v3522 = vadd.f32 0.0, %v3521
        %v3523 = vpop.f32.mrb[0].mxu0
        %3524 = vmatprep.mubr.f32.mxu0 0.0
        %3525 = vmatmul.mubr.f32.gmra.mrb[0].mxu0 %v3320
        %v3526 = vpop.f32.mrb[0].mxu0
        %v3527 = vadd.f32 0.0, %v3526
        %v3528 = vpop.f32.mrb[0].mxu0
        %3529 = vdwg.mxu0
        %3546 = vrot.lane.b32.xlu0 %v2264, 64
        %v3547 = vpop.permute.xlu0 %3546
        %3548 = vrot.lane.b32.xlu0 %v2269, 64
        %v3549 = vpop.permute.xlu0 %3548
        %3550 = vrot.lane.b32.xlu0 %v2274, 64
        %v3551 = vpop.permute.xlu0 %3550
        %3552 = vrot.lane.b32.xlu0 %v2279, 64
        %v3553 = vpop.permute.xlu0 %3552
        %3554 = vrot.lane.b32.xlu0 %v2284, 64
        %v3555 = vpop.permute.xlu0 %3554
        %3556 = vrot.lane.b32.xlu0 %v2289, 64
        %v3557 = vpop.permute.xlu0 %3556
        %3558 = vrot.lane.b32.xlu0 %v2294, 64
        %v3559 = vpop.permute.xlu0 %3558
        %3560 = vrot.lane.b32.xlu0 %v2299, 64
        %v3561 = vpop.permute.xlu0 %3560
        %3562 = vrot.lane.b32.xlu0 %v2304, 64
        %v3563 = vpop.permute.xlu0 %3562
        %3564 = vrot.lane.b32.xlu0 %v2309, 64
        %v3565 = vpop.permute.xlu0 %3564
        %3566 = vrot.lane.b32.xlu0 %v2314, 64
        %v3567 = vpop.permute.xlu0 %3566
        %3568 = vrot.lane.b32.xlu0 %v2319, 64
        %v3569 = vpop.permute.xlu0 %3568
        %3570 = vrot.lane.b32.xlu0 %v2324, 64
        %v3571 = vpop.permute.xlu0 %3570
        %3572 = vrot.lane.b32.xlu0 %v2329, 64
        %v3573 = vpop.permute.xlu0 %3572
        %3574 = vrot.lane.b32.xlu0 %v2334, 64
        %v3575 = vpop.permute.xlu0 %3574
        %3576 = vrot.lane.b32.xlu0 %v2339, 64
        %v3577 = vpop.permute.xlu0 %3576
        %3610 = vrot.lane.b32.xlu0 %v3452, 64
        %v3611 = vpop.permute.xlu0 %3610
        %3612 = vrot.lane.b32.xlu0 %v3457, 64
        %v3613 = vpop.permute.xlu0 %3612
        %3614 = vrot.lane.b32.xlu0 %v3462, 64
        %v3615 = vpop.permute.xlu0 %3614
        %3616 = vrot.lane.b32.xlu0 %v3467, 64
        %v3617 = vpop.permute.xlu0 %3616
        %3618 = vrot.lane.b32.xlu0 %v3472, 64
        %v3619 = vpop.permute.xlu0 %3618
        %3620 = vrot.lane.b32.xlu0 %v3477, 64
        %v3621 = vpop.permute.xlu0 %3620
        %3622 = vrot.lane.b32.xlu0 %v3482, 64
        %v3623 = vpop.permute.xlu0 %3622
        %3624 = vrot.lane.b32.xlu0 %v3487, 64
        %v3625 = vpop.permute.xlu0 %3624
        %3626 = vrot.lane.b32.xlu0 %v3492, 64
        %v3627 = vpop.permute.xlu0 %3626
        %3628 = vrot.lane.b32.xlu0 %v3497, 64
        %v3629 = vpop.permute.xlu0 %3628
        %3630 = vrot.lane.b32.xlu0 %v3502, 64
        %v3631 = vpop.permute.xlu0 %3630
        %3632 = vrot.lane.b32.xlu0 %v3507, 64
        %v3633 = vpop.permute.xlu0 %3632
        %3634 = vrot.lane.b32.xlu0 %v3512, 64
        %v3635 = vpop.permute.xlu0 %3634
        %3636 = vrot.lane.b32.xlu0 %v3517, 64
        %v3637 = vpop.permute.xlu0 %3636
        %3638 = vrot.lane.b32.xlu0 %v3522, 64
        %v3639 = vpop.permute.xlu0 %3638
        %3640 = vrot.lane.b32.xlu0 %v3527, 64
        %v3641 = vpop.permute.xlu0 %3640
        %v3658 = vsel %vm1153, %v1622, %v3547
        %v3659 = vsel %vm1153, %v1627, %v3549
        %v3660 = vsel %vm1153, %v1632, %v3551
        %v3661 = vsel %vm1153, %v1637, %v3553
        %v3662 = vsel %vm1153, %v1642, %v3555
        %v3663 = vsel %vm1153, %v1647, %v3557
        %v3664 = vsel %vm1153, %v1652, %v3559
        %v3665 = vsel %vm1153, %v1657, %v3561
        %v3666 = vsel %vm1153, %v1662, %v3563
        %v3667 = vsel %vm1153, %v1667, %v3565
        %v3668 = vsel %vm1153, %v1672, %v3567
        %v3669 = vsel %vm1153, %v1677, %v3569
        %v3670 = vsel %vm1153, %v1682, %v3571
        %v3671 = vsel %vm1153, %v1687, %v3573
        %v3672 = vsel %vm1153, %v1692, %v3575
        %v3673 = vsel %vm1153, %v1697, %v3577
        %v3674 = vsel %vm1153, %v2810, %v3611
        %v3675 = vsel %vm1153, %v2815, %v3613
        %v3676 = vsel %vm1153, %v2820, %v3615
        %v3677 = vsel %vm1153, %v2825, %v3617
        %v3678 = vsel %vm1153, %v2830, %v3619
        %v3679 = vsel %vm1153, %v2835, %v3621
        %v3680 = vsel %vm1153, %v2840, %v3623
        %v3681 = vsel %vm1153, %v2845, %v3625
        %v3682 = vsel %vm1153, %v2850, %v3627
        %v3683 = vsel %vm1153, %v2855, %v3629
        %v3684 = vsel %vm1153, %v2860, %v3631
        %v3685 = vsel %vm1153, %v2865, %v3633
        %v3686 = vsel %vm1153, %v2870, %v3635
        %v3687 = vsel %vm1153, %v2875, %v3637
        %v3688 = vsel %vm1153, %v2880, %v3639
        %v3689 = vsel %vm1153, %v2885, %v3641
        %v3690 = vld [vmem:[#allocation7] sm:$0xff]
        %v3691 = vld [vmem:[#allocation7 + $0x8] sm:$0xff]
        %v3692 = vld [vmem:[#allocation7 + $0x10] sm:$0xff]
        %v3693 = vld [vmem:[#allocation7 + $0x18] sm:$0xff]
        %v3694 = vld [vmem:[#allocation7 + $0x20] sm:$0xff]
        %v3695 = vld [vmem:[#allocation7 + $0x28] sm:$0xff]
        %v3696 = vld [vmem:[#allocation7 + $0x30] sm:$0xff]
        %v3697 = vld [vmem:[#allocation7 + $0x38] sm:$0xff]
        %v3698 = vld [vmem:[#allocation7 + $0x40] sm:$0xff]
        %v3699 = vld [vmem:[#allocation7 + $0x48] sm:$0xff]
        %v3700 = vld [vmem:[#allocation7 + $0x50] sm:$0xff]
        %v3701 = vld [vmem:[#allocation7 + $0x58] sm:$0xff]
        %v3702 = vld [vmem:[#allocation7 + $0x60] sm:$0xff]
        %v3703 = vld [vmem:[#allocation7 + $0x68] sm:$0xff]
        %v3704 = vld [vmem:[#allocation7 + $0x70] sm:$0xff]
        %v3705 = vld [vmem:[#allocation7 + $0x78] sm:$0xff]
        %v3706 = vld [vmem:[#allocation7 + $0x80] sm:$0xff]
        %v3707 = vld [vmem:[#allocation7 + $0x88] sm:$0xff]
        %v3708 = vld [vmem:[#allocation7 + $0x90] sm:$0xff]
        %v3709 = vld [vmem:[#allocation7 + $0x98] sm:$0xff]
        %v3710 = vld [vmem:[#allocation7 + $0xa0] sm:$0xff]
        %v3711 = vld [vmem:[#allocation7 + $0xa8] sm:$0xff]
        %v3712 = vld [vmem:[#allocation7 + $0xb0] sm:$0xff]
        %v3713 = vld [vmem:[#allocation7 + $0xb8] sm:$0xff]
        %v3714 = vld [vmem:[#allocation7 + $0xc0] sm:$0xff]
        %v3715 = vld [vmem:[#allocation7 + $0xc8] sm:$0xff]
        %v3716 = vld [vmem:[#allocation7 + $0xd0] sm:$0xff]
        %v3717 = vld [vmem:[#allocation7 + $0xd8] sm:$0xff]
        %v3718 = vld [vmem:[#allocation7 + $0xe0] sm:$0xff]
        %v3719 = vld [vmem:[#allocation7 + $0xe8] sm:$0xff]
        %v3720 = vld [vmem:[#allocation7 + $0xf0] sm:$0xff]
        %v3721 = vld [vmem:[#allocation7 + $0xf8] sm:$0xff]
        %v3722 = vld [vmem:[#allocation7 + $0x100] sm:$0xff]
        %v3723 = vld [vmem:[#allocation7 + $0x108] sm:$0xff]
        %v3724 = vld [vmem:[#allocation7 + $0x110] sm:$0xff]
        %v3725 = vld [vmem:[#allocation7 + $0x118] sm:$0xff]
        %v3726 = vld [vmem:[#allocation7 + $0x120] sm:$0xff]
        %v3727 = vld [vmem:[#allocation7 + $0x128] sm:$0xff]
        %v3728 = vld [vmem:[#allocation7 + $0x130] sm:$0xff]
        %v3729 = vld [vmem:[#allocation7 + $0x138] sm:$0xff]
        %v3730 = vld [vmem:[#allocation7 + $0x140] sm:$0xff]
        %v3731 = vld [vmem:[#allocation7 + $0x148] sm:$0xff]
        %v3732 = vld [vmem:[#allocation7 + $0x150] sm:$0xff]
        %v3733 = vld [vmem:[#allocation7 + $0x158] sm:$0xff]
        %v3734 = vld [vmem:[#allocation7 + $0x160] sm:$0xff]
        %v3735 = vld [vmem:[#allocation7 + $0x168] sm:$0xff]
        %v3736 = vld [vmem:[#allocation7 + $0x170] sm:$0xff]
        %v3737 = vld [vmem:[#allocation7 + $0x178] sm:$0xff]
        %v3738 = vld [vmem:[#allocation7 + $0x180] sm:$0xff]
        %v3739 = vld [vmem:[#allocation7 + $0x188] sm:$0xff]
        %v3740 = vld [vmem:[#allocation7 + $0x190] sm:$0xff]
        %v3741 = vld [vmem:[#allocation7 + $0x198] sm:$0xff]
        %v3742 = vld [vmem:[#allocation7 + $0x1a0] sm:$0xff]
        %v3743 = vld [vmem:[#allocation7 + $0x1a8] sm:$0xff]
        %v3744 = vld [vmem:[#allocation7 + $0x1b0] sm:$0xff]
        %v3745 = vld [vmem:[#allocation7 + $0x1b8] sm:$0xff]
        %v3746 = vld [vmem:[#allocation7 + $0x1c0] sm:$0xff]
        %v3747 = vld [vmem:[#allocation7 + $0x1c8] sm:$0xff]
        %v3748 = vld [vmem:[#allocation7 + $0x1d0] sm:$0xff]
        %v3749 = vld [vmem:[#allocation7 + $0x1d8] sm:$0xff]
        %v3750 = vld [vmem:[#allocation7 + $0x1e0] sm:$0xff]
        %v3751 = vld [vmem:[#allocation7 + $0x1e8] sm:$0xff]
        %v3752 = vld [vmem:[#allocation7 + $0x1f0] sm:$0xff]
        %v3753 = vld [vmem:[#allocation7 + $0x1f8] sm:$0xff]
        %3754 = vmatprep.subr.mxu0 %v3691
        %3755 = vmatpush1.msra.mxu0 %v3690
        %3756 = vmatprep.subr.mxu0 %v3693
        %3757 = vmatpush1.msra.mxu0 %v3692
        %3758 = vmatprep.subr.mxu0 %v3695
        %3759 = vmatpush1.msra.mxu0 %v3694
        %3760 = vmatprep.subr.mxu0 %v3697
        %3761 = vmatpush1.msra.mxu0 %v3696
        %3762 = vmatprep.subr.mxu0 %v3699
        %3763 = vmatpush1.msra.mxu0 %v3698
        %3764 = vmatprep.subr.mxu0 %v3701
        %3765 = vmatpush1.msra.mxu0 %v3700
        %3766 = vmatprep.subr.mxu0 %v3703
        %3767 = vmatpush1.msra.mxu0 %v3702
        %3768 = vmatprep.subr.mxu0 %v3705
        %3769 = vmatpush1.msra.mxu0 %v3704
        %3770 = vmatprep.subr.mxu0 %v3707
        %3771 = vmatpush1.msra.mxu0 %v3706
        %3772 = vmatprep.subr.mxu0 %v3709
        %3773 = vmatpush1.msra.mxu0 %v3708
        %3774 = vmatprep.subr.mxu0 %v3711
        %3775 = vmatpush1.msra.mxu0 %v3710
        %3776 = vmatprep.subr.mxu0 %v3713
        %3777 = vmatpush1.msra.mxu0 %v3712
        %3778 = vmatprep.subr.mxu0 %v3715
        %3779 = vmatpush1.msra.mxu0 %v3714
        %3780 = vmatprep.subr.mxu0 %v3717
        %3781 = vmatpush1.msra.mxu0 %v3716
        %3782 = vmatprep.subr.mxu0 %v3719
        %3783 = vmatpush1.msra.mxu0 %v3718
        %3784 = vmatprep.subr.mxu0 %v3721
        %3785 = vmatpush1.msra.mxu0 %v3720
        %3786 = vmatprep.subr.mxu0 %v3723
        %3787 = vmatpush1.msra.mxu0 %v3722
        %3788 = vmatprep.subr.mxu0 %v3725
        %3789 = vmatpush1.msra.mxu0 %v3724
        %3790 = vmatprep.subr.mxu0 %v3727
        %3791 = vmatpush1.msra.mxu0 %v3726
        %3792 = vmatprep.subr.mxu0 %v3729
        %3793 = vmatpush1.msra.mxu0 %v3728
        %3794 = vmatprep.subr.mxu0 %v3731
        %3795 = vmatpush1.msra.mxu0 %v3730
        %3796 = vmatprep.subr.mxu0 %v3733
        %3797 = vmatpush1.msra.mxu0 %v3732
        %3798 = vmatprep.subr.mxu0 %v3735
        %3799 = vmatpush1.msra.mxu0 %v3734
        %3800 = vmatprep.subr.mxu0 %v3737
        %3801 = vmatpush1.msra.mxu0 %v3736
        %3802 = vmatprep.subr.mxu0 %v3739
        %3803 = vmatpush1.msra.mxu0 %v3738
        %3804 = vmatprep.subr.mxu0 %v3741
        %3805 = vmatpush1.msra.mxu0 %v3740
        %3806 = vmatprep.subr.mxu0 %v3743
        %3807 = vmatpush1.msra.mxu0 %v3742
        %3808 = vmatprep.subr.mxu0 %v3745
        %3809 = vmatpush1.msra.mxu0 %v3744
        %3810 = vmatprep.subr.mxu0 %v3747
        %3811 = vmatpush1.msra.mxu0 %v3746
        %3812 = vmatprep.subr.mxu0 %v3749
        %3813 = vmatpush1.msra.mxu0 %v3748
        %3814 = vmatprep.subr.mxu0 %v3751
        %3815 = vmatpush1.msra.mxu0 %v3750
        %3816 = vmatprep.subr.mxu0 %v3753
        %3817 = vmatpush1.msra.mxu0 %v3752
        %3818 = vmatprep.mubr.f32.mxu0 %v3674
        %3819 = vmatmul.mubr.f32.gmra.mrb[0].mxu0 %v3658
        %v3820 = vpop.f32.mrb[0].mxu0
        %v3821 = vadd.f32 0.0, %v3820
        %v3822 = vpop.f32.mrb[0].mxu0
        %v3823 = vadd.f32 0.0, %v3822
        %3824 = vmatprep.mubr.f32.mxu0 %v3675
        %3825 = vmatmul.mubr.f32.gmra.mrb[0].mxu0 %v3659
        %v3826 = vpop.f32.mrb[0].mxu0
        %v3827 = vadd.f32 0.0, %v3826
        %v3828 = vpop.f32.mrb[0].mxu0
        %v3829 = vadd.f32 0.0, %v3828
        %3830 = vmatprep.mubr.f32.mxu0 %v3676
        %3831 = vmatmul.mubr.f32.gmra.mrb[0].mxu0 %v3660
        %v3832 = vpop.f32.mrb[0].mxu0
        %v3833 = vadd.f32 0.0, %v3832
        %v3834 = vpop.f32.mrb[0].mxu0
        %v3835 = vadd.f32 0.0, %v3834
        %3836 = vmatprep.mubr.f32.mxu0 %v3677
        %3837 = vmatmul.mubr.f32.gmra.mrb[0].mxu0 %v3661
        %v3838 = vpop.f32.mrb[0].mxu0
        %v3839 = vadd.f32 0.0, %v3838
        %v3840 = vpop.f32.mrb[0].mxu0
        %v3841 = vadd.f32 0.0, %v3840
        %3842 = vmatprep.mubr.f32.mxu0 %v3678
        %3843 = vmatmul.mubr.f32.gmra.mrb[0].mxu0 %v3662
        %v3844 = vpop.f32.mrb[0].mxu0
        %v3845 = vadd.f32 0.0, %v3844
        %v3846 = vpop.f32.mrb[0].mxu0
        %v3847 = vadd.f32 0.0, %v3846
        %3848 = vmatprep.mubr.f32.mxu0 %v3679
        %3849 = vmatmul.mubr.f32.gmra.mrb[0].mxu0 %v3663
        %v3850 = vpop.f32.mrb[0].mxu0
        %v3851 = vadd.f32 0.0, %v3850
        %v3852 = vpop.f32.mrb[0].mxu0
        %v3853 = vadd.f32 0.0, %v3852
        %3854 = vmatprep.mubr.f32.mxu0 %v3680
        %3855 = vmatmul.mubr.f32.gmra.mrb[0].mxu0 %v3664
        %v3856 = vpop.f32.mrb[0].mxu0
        %v3857 = vadd.f32 0.0, %v3856
        %v3858 = vpop.f32.mrb[0].mxu0
        %v3859 = vadd.f32 0.0, %v3858
        %3860 = vmatprep.mubr.f32.mxu0 %v3681
        %3861 = vmatmul.mubr.f32.gmra.mrb[0].mxu0 %v3665
        %v3862 = vpop.f32.mrb[0].mxu0
        %v3863 = vadd.f32 0.0, %v3862
        %v3864 = vpop.f32.mrb[0].mxu0
        %v3865 = vadd.f32 0.0, %v3864
        %3866 = vmatprep.mubr.f32.mxu0 %v3682
        %3867 = vmatmul.mubr.f32.gmra.mrb[0].mxu0 %v3666
        %v3868 = vpop.f32.mrb[0].mxu0
        %v3869 = vadd.f32 0.0, %v3868
        %v3870 = vpop.f32.mrb[0].mxu0
        %v3871 = vadd.f32 0.0, %v3870
        %3872 = vmatprep.mubr.f32.mxu0 %v3683
        %3873 = vmatmul.mubr.f32.gmra.mrb[0].mxu0 %v3667
        %v3874 = vpop.f32.mrb[0].mxu0
        %v3875 = vadd.f32 0.0, %v3874
        %v3876 = vpop.f32.mrb[0].mxu0
        %v3877 = vadd.f32 0.0, %v3876
        %3878 = vmatprep.mubr.f32.mxu0 %v3684
        %3879 = vmatmul.mubr.f32.gmra.mrb[0].mxu0 %v3668
        %v3880 = vpop.f32.mrb[0].mxu0
        %v3881 = vadd.f32 0.0, %v3880
        %v3882 = vpop.f32.mrb[0].mxu0
        %v3883 = vadd.f32 0.0, %v3882
        %3884 = vmatprep.mubr.f32.mxu0 %v3685
        %3885 = vmatmul.mubr.f32.gmra.mrb[0].mxu0 %v3669
        %v3886 = vpop.f32.mrb[0].mxu0
        %v3887 = vadd.f32 0.0, %v3886
        %v3888 = vpop.f32.mrb[0].mxu0
        %v3889 = vadd.f32 0.0, %v3888
        %3890 = vmatprep.mubr.f32.mxu0 %v3686
        %3891 = vmatmul.mubr.f32.gmra.mrb[0].mxu0 %v3670
        %v3892 = vpop.f32.mrb[0].mxu0
        %v3893 = vadd.f32 0.0, %v3892
        %v3894 = vpop.f32.mrb[0].mxu0
        %v3895 = vadd.f32 0.0, %v3894
        %3896 = vmatprep.mubr.f32.mxu0 %v3687
        %3897 = vmatmul.mubr.f32.gmra.mrb[0].mxu0 %v3671
        %v3898 = vpop.f32.mrb[0].mxu0
        %v3899 = vadd.f32 0.0, %v3898
        %v3900 = vpop.f32.mrb[0].mxu0
        %v3901 = vadd.f32 0.0, %v3900
        %3902 = vmatprep.mubr.f32.mxu0 %v3688
        %3903 = vmatmul.mubr.f32.gmra.mrb[0].mxu0 %v3672
        %v3904 = vpop.f32.mrb[0].mxu0
        %v3905 = vadd.f32 0.0, %v3904
        %v3906 = vpop.f32.mrb[0].mxu0
        %v3907 = vadd.f32 0.0, %v3906
        %3908 = vmatprep.mubr.f32.mxu0 %v3689
        %3909 = vmatmul.mubr.f32.gmra.mrb[0].mxu0 %v3673
        %v3910 = vpop.f32.mrb[0].mxu0
        %v3911 = vadd.f32 0.0, %v3910
        %v3912 = vpop.f32.mrb[0].mxu0
        %v3913 = vadd.f32 0.0, %v3912
        %3914 = vdwg.mxu0
        %v3915 = vmul.f32 %v3821, 0.28867513
        %v3916 = vmul.f32 %v3823, 0.28867513
        %v3917 = vmul.f32 %v3827, 0.28867513
        %v3918 = vmul.f32 %v3829, 0.28867513
        %v3919 = vmul.f32 %v3833, 0.28867513
        %v3920 = vmul.f32 %v3835, 0.28867513
        %v3921 = vmul.f32 %v3839, 0.28867513
        %v3922 = vmul.f32 %v3841, 0.28867513
        %v3923 = vmul.f32 %v3845, 0.28867513
        %v3924 = vmul.f32 %v3847, 0.28867513
        %v3925 = vmul.f32 %v3851, 0.28867513
        %v3926 = vmul.f32 %v3853, 0.28867513
        %v3927 = vmul.f32 %v3857, 0.28867513
        %v3928 = vmul.f32 %v3859, 0.28867513
        %v3929 = vmul.f32 %v3863, 0.28867513
        %v3930 = vmul.f32 %v3865, 0.28867513
        %v3931 = vmul.f32 %v3869, 0.28867513
        %v3932 = vmul.f32 %v3871, 0.28867513
        %v3933 = vmul.f32 %v3875, 0.28867513
        %v3934 = vmul.f32 %v3877, 0.28867513
        %v3935 = vmul.f32 %v3881, 0.28867513
        %v3936 = vmul.f32 %v3883, 0.28867513
        %v3937 = vmul.f32 %v3887, 0.28867513
        %v3938 = vmul.f32 %v3889, 0.28867513
        %v3939 = vmul.f32 %v3893, 0.28867513
        %v3940 = vmul.f32 %v3895, 0.28867513
        %v3941 = vmul.f32 %v3899, 0.28867513
        %v3942 = vmul.f32 %v3901, 0.28867513
        %v3943 = vmul.f32 %v3905, 0.28867513
        %v3944 = vmul.f32 %v3907, 0.28867513
        %v3945 = vmul.f32 %v3911, 0.28867513
        %v3946 = vmul.f32 %v3913, 0.28867513
        %v3947 = vadd.f32 %v218, %v3915
        %v3948 = vadd.f32 %v219, %v3916
        %v3949 = vadd.f32 %v220, %v3917
        %v3950 = vadd.f32 %v221, %v3918
        %v3951 = vadd.f32 %v222, %v3919
        %v3952 = vadd.f32 %v223, %v3920
        %v3953 = vadd.f32 %v224, %v3921
        %v3954 = vadd.f32 %v225, %v3922
        %v3955 = vadd.f32 %v226, %v3923
        %v3956 = vadd.f32 %v227, %v3924
        %v3957 = vadd.f32 %v228, %v3925
        %v3958 = vadd.f32 %v229, %v3926
        %v3959 = vadd.f32 %v230, %v3927
        %v3960 = vadd.f32 %v231, %v3928
        %v3961 = vadd.f32 %v232, %v3929
        %v3962 = vadd.f32 %v233, %v3930
        %v3963 = vadd.f32 %v234, %v3931
        %v3964 = vadd.f32 %v235, %v3932
        %v3965 = vadd.f32 %v236, %v3933
        %v3966 = vadd.f32 %v237, %v3934
        %v3967 = vadd.f32 %v238, %v3935
        %v3968 = vadd.f32 %v239, %v3936
        %v3969 = vadd.f32 %v240, %v3937
        %v3970 = vadd.f32 %v241, %v3938
        %v3971 = vadd.f32 %v242, %v3939
        %v3972 = vadd.f32 %v243, %v3940
        %v3973 = vadd.f32 %v244, %v3941
        %v3974 = vadd.f32 %v245, %v3942
        %v3975 = vadd.f32 %v246, %v3943
        %v3976 = vadd.f32 %v247, %v3944
        %v3977 = vadd.f32 %v248, %v3945
        %v3978 = vadd.f32 %v249, %v3946
        %3979 = vst [vmem:[%s217] sm:$0xff] %v3947
        %3980 = vst [vmem:[%s217 + $0x8] sm:$0xff] %v3948
        %3981 = vst [vmem:[%s217 + $0x10] sm:$0xff] %v3949
        %3982 = vst [vmem:[%s217 + $0x18] sm:$0xff] %v3950
        %3983 = vst [vmem:[%s217 + $0x20] sm:$0xff] %v3951
        %3984 = vst [vmem:[%s217 + $0x28] sm:$0xff] %v3952
        %3985 = vst [vmem:[%s217 + $0x30] sm:$0xff] %v3953
        %3986 = vst [vmem:[%s217 + $0x38] sm:$0xff] %v3954
        %3987 = vst [vmem:[%s217 + $0x40] sm:$0xff] %v3955
        %3988 = vst [vmem:[%s217 + $0x48] sm:$0xff] %v3956
        %3989 = vst [vmem:[%s217 + $0x50] sm:$0xff] %v3957
        %3990 = vst [vmem:[%s217 + $0x58] sm:$0xff] %v3958
        %3991 = vst [vmem:[%s217 + $0x60] sm:$0xff] %v3959
        %3992 = vst [vmem:[%s217 + $0x68] sm:$0xff] %v3960
        %3993 = vst [vmem:[%s217 + $0x70] sm:$0xff] %v3961
        %3994 = vst [vmem:[%s217 + $0x78] sm:$0xff] %v3962
        %3995 = vst [vmem:[%s217 + $0x80] sm:$0xff] %v3963
        %3996 = vst [vmem:[%s217 + $0x88] sm:$0xff] %v3964
        %3997 = vst [vmem:[%s217 + $0x90] sm:$0xff] %v3965
        %3998 = vst [vmem:[%s217 + $0x98] sm:$0xff] %v3966
        %3999 = vst [vmem:[%s217 + $0xa0] sm:$0xff] %v3967
        %4000 = vst [vmem:[%s217 + $0xa8] sm:$0xff] %v3968
        %4001 = vst [vmem:[%s217 + $0xb0] sm:$0xff] %v3969
        %4002 = vst [vmem:[%s217 + $0xb8] sm:$0xff] %v3970
        %4003 = vst [vmem:[%s217 + $0xc0] sm:$0xff] %v3971
        %4004 = vst [vmem:[%s217 + $0xc8] sm:$0xff] %v3972
        %4005 = vst [vmem:[%s217 + $0xd0] sm:$0xff] %v3973
        %4006 = vst [vmem:[%s217 + $0xd8] sm:$0xff] %v3974
        %4007 = vst [vmem:[%s217 + $0xe0] sm:$0xff] %v3975
        %4008 = vst [vmem:[%s217 + $0xe8] sm:$0xff] %v3976
        %4009 = vst [vmem:[%s217 + $0xf0] sm:$0xff] %v3977
        %4010 = vst [vmem:[%s217 + $0xf8] sm:$0xff] %v3978
        %s4011 = sand.u32 %s97, 1
        %s4012 = scalar_lea.sflag [#allocation4], %s4011
        %s4013 = sand.u32 %s97, 1
        %s4014 = smul.addr %s4013, 256
        %s4015 = scalar_lea.vmem [#allocation8], %s4014
        // Predicated region
        $region45: #{tpu_custom_call.1} parent=31 // pred_check
          %p4016 = pneg %p107
        $region46: #{tpu_custom_call.1} parent=31 // pred_check_branch
          %4018 = sbr.rel (%p4016) target = $region48
        $region47: #{tpu_custom_call.1} parent=31 // pred_region
          %s4020 = ssub.s32 4096, 4096
          %4021 = vsyncadd %s4012, %s4020
          %s4022 = smul.addr %s21, 32
          %s4023 = smul.addr %s4022, 128
          %s4024 = scalar_lea.hbm %s3, %s4023
          %s4025 = sshll.u32 %s4015, 4
          %s4026 = int_to_ptr.vmem [resolvable:$true] %s4025
          %4031 = dma.vmem_to_hbm [thread:$0]  %s4026, 4096, %s4024, %s4012, 256, 256, 16
        $region48: #{tpu_custom_call.1} parent=31 // pred_fallthru
          _
      $region32: #{tpu_custom_call.1} parent=5 // pred_fallthru
        _
      %p4032 = scmp.le.s32.totalorder 2, %s16
      // Predicated region
      $region49: #{tpu_custom_call.1} parent=5 // pred_check
        %p4033 = pneg %p4032
      $region50: #{tpu_custom_call.1} parent=5 // pred_check_branch
        %4035 = sbr.rel (%p4033) target = $region52
      $region51: #{tpu_custom_call.1} parent=5 // pred_region
        %s4036 = ssub.s32 %s16, 2
        // Predicated region
        $region53: #{tpu_custom_call.1} parent=51 // pred_check
          %p4037 = pneg %p113
        $region54: #{tpu_custom_call.1} parent=51 // pred_check_branch
          %4039 = sbr.rel (%p4037) target = $region56
        $region55: #{tpu_custom_call.1} parent=51 // pred_region
          %s4040 = sand.u32 %s98, 1
          %s4041 = scalar_lea.sflag [#allocation4], %s4040
          %s4042 = sand.u32 %s98, 1
          %s4043 = smul.addr %s4042, 256
          %s4044 = scalar_lea.vmem [#allocation8], %s4043
          %4045 = dma.done %s4041, 4096
        $region56: #{tpu_custom_call.1} parent=51 // pred_fallthru
          _
      $region52: #{tpu_custom_call.1} parent=5 // pred_fallthru
        _
    $region6: #{tpu_custom_call.1} parent=1 // loop_footer
      %s20 = sadd.s32 1, %s16
    $region7: #{tpu_custom_call.1} parent=1 // loop_footer_branch
      %15 = sbr.rel target = $region3
    $region8: #{tpu_custom_call.1} parent=1 // loop_exit
      _
    %4046 = vsyncpa [#allocation3], 1
    %s4047 = scalar_lea.sflag [#allocation3], 1
    %4048 = vsyncpa %s4047, 1
    %4049 = vsyncpa [#allocation6], 1
    %4050 = vsyncpa [#allocation4], 1
    %s4051 = scalar_lea.sflag [#allocation4], 1
    %4052 = vsyncpa %s4051, 1

</llo_original>
